<compile_context>
chip_gen: v6e
topology: v6e:2x2x1
jax: 0.10.0
libtpu: 0.0.40
codegen_flags: <defaults>
</compile_context>

<pallas_src>
import functools
import math

import jax
import jax.numpy as jnp
from jax.experimental import pallas as pl
from jax.experimental.pallas import tpu as pltpu

MATMUL_DTYPE = jnp.bfloat16   # MXU operand dtype; accumulation / state stay f32.


def _lstm_cell(gates, c):
    """PyTorch LSTM cell from pre-activation gates (B, 4H); gate order i,f,g,o."""
    H = c.shape[-1]
    i = jax.nn.sigmoid(gates[:, 0 * H:1 * H])
    f = jax.nn.sigmoid(gates[:, 1 * H:2 * H])
    g = jnp.tanh(gates[:, 2 * H:3 * H])
    o = jax.nn.sigmoid(gates[:, 3 * H:4 * H])
    c_new = f * c + i * g
    h_new = o * jnp.tanh(c_new)
    return h_new, c_new


def _make_fused_kernel(num_layers, T, B, H):
    """Builds the fully fused BiRNN forward kernel (projection + both layers + head)."""

    def kernel(*refs):
        it = iter(refs)
        x2_ref = next(it)                                   # (T*B, D) time-major rows
        layers = [tuple(next(it) for _ in range(6)) for _ in range(num_layers)]
        fc_w_ref = next(it)                                 # (2H, C) bf16
        fc_b_ref = next(it)                                 # (1, C)  f32
        out_ref = next(it)                                  # (B, C)  f32
        hf_out = next(it)                                   # (T*B, H) f32, fwd hidden, output-time order
        hb_out = next(it)                                   # (T*B, H) f32, bwd hidden, output-time order
        xg_f = next(it)                                     # (T*B, 4H) f32, fwd gate pre-activations
        xg_b = next(it)                                     # (T*B, 4H) f32, bwd gate pre-activations

        hf_last = None
        hb_last = None

        for l in range(num_layers):
            wih_f, wih_b, whh_f, whh_b, b_f, b_b = layers[l]
            last = (l == num_layers - 1)

            # ---- input projection: one lane-dense MXU matmul per direction over all T*B rows ----
            if l == 0:
                xin = x2_ref[...].astype(MATMUL_DTYPE)                              # (T*B, D)
                xg_f[...] = (jnp.dot(xin, wih_f[...],
                                     preferred_element_type=jnp.float32) + b_f[...])
                xg_b[...] = (jnp.dot(xin, wih_b[...],
                                     preferred_element_type=jnp.float32) + b_b[...])
            else:
                hf = hf_out[...].astype(MATMUL_DTYPE)                               # (T*B, H)
                hb = hb_out[...].astype(MATMUL_DTYPE)
                # Previous layer output is [h_fwd | h_bwd]; split the (2H,4H)
                # input weight into its two (H,4H) halves -> two dots, no concat.
                xg_f[...] = (jnp.dot(hf, wih_f[0:H, :], preferred_element_type=jnp.float32)
                             + jnp.dot(hb, wih_f[H:2 * H, :], preferred_element_type=jnp.float32)
                             + b_f[...])
                xg_b[...] = (jnp.dot(hf, wih_b[0:H, :], preferred_element_type=jnp.float32)
                             + jnp.dot(hb, wih_b[H:2 * H, :], preferred_element_type=jnp.float32)
                             + b_b[...])

            # ---- serial recurrence: fwd and bwd directions advance in the same step ----
            whh_f_v = whh_f[...]                                                    # (H, 4H) bf16, hoisted
            whh_b_v = whh_b[...]
            h_f = jnp.zeros((B, H), jnp.float32)
            c_f = jnp.zeros((B, H), jnp.float32)
            h_b = jnp.zeros((B, H), jnp.float32)
            c_b = jnp.zeros((B, H), jnp.float32)

            # TODO(synk): for long sequences switch to lax.fori_loop(..., unroll=k)
            # with h/c carried in small VMEM scratches to bound live ranges.
            for s in range(T):
                gf = xg_f[pl.ds(s * B, B), :] + jnp.dot(
                    h_f.astype(MATMUL_DTYPE), whh_f_v, preferred_element_type=jnp.float32)
                gb = xg_b[pl.ds((T - 1 - s) * B, B), :] + jnp.dot(
                    h_b.astype(MATMUL_DTYPE), whh_b_v, preferred_element_type=jnp.float32)
                h_f, c_f = _lstm_cell(gf, c_f)
                h_b, c_b = _lstm_cell(gb, c_b)

                if not last:
                    hf_out[pl.ds(s * B, B), :] = h_f                 # output time s
                    hb_out[pl.ds((T - 1 - s) * B, B), :] = h_b       # output time T-1-s
                if last and s == T - 1:
                    hf_last = h_f                                    # fwd hidden at t = T-1
                if last and s == 0:
                    hb_last = h_b                                    # bwd hidden at t = T-1 (1st bwd step)

        # ---- FC head on out[:, -1, :] = [h_fwd_{T-1} | h_bwd_{T-1}] ----
        out_ref[...] = (jnp.dot(hf_last.astype(MATMUL_DTYPE), fc_w_ref[0:H, :],
                                preferred_element_type=jnp.float32)
                        + jnp.dot(hb_last.astype(MATMUL_DTYPE), fc_w_ref[H:2 * H, :],
                                  preferred_element_type=jnp.float32)
                        + fc_b_ref[...])

    return kernel


# ------------------------------- Full forward ---------------------------------
@functools.partial(jax.jit, static_argnames=("num_layers",))
def birnn_forward(x_btd, params, *, num_layers):
    B, T, D = x_btd.shape
    H = params["lstm"][0]["whh_f"].shape[0]
    C = params["fc_w_t"].shape[1]

    # Time-major rows: row index t*B + b (free layout plumbing in the wrapper).
    x2 = jnp.transpose(x_btd, (1, 0, 2)).reshape(T * B, D)

    args = [x2]
    for l in range(num_layers):
        p = params["lstm"][l]
        args += [p["wih_f"], p["wih_b"], p["whh_f"], p["whh_b"], p["b_f"], p["b_b"]]
    args += [params["fc_w_t"], params["fc_b"]]

    def full_spec(a):
        nd = a.ndim
        return pl.BlockSpec(a.shape, lambda i, _nd=nd: (0,) * _nd)

    kernel = _make_fused_kernel(num_layers, T, B, H)
    return pl.pallas_call(
        kernel,
        out_shape=jax.ShapeDtypeStruct((B, C), jnp.float32),
        grid=(1,),
        in_specs=[full_spec(a) for a in args],
        out_specs=pl.BlockSpec((B, C), lambda i: (0, 0)),
        scratch_shapes=[
            pltpu.VMEM((T * B, H), jnp.float32),        # hf_out (fwd hidden stream)
            pltpu.VMEM((T * B, H), jnp.float32),        # hb_out (bwd hidden stream)
            pltpu.VMEM((T * B, 4 * H), jnp.float32),    # xg_f   (fwd gate pre-acts)
            pltpu.VMEM((T * B, 4 * H), jnp.float32),    # xg_b   (bwd gate pre-acts)
        ],
        compiler_params=pltpu.CompilerParams(
            dimension_semantics=("arbitrary",)),
    )(*args)


# ------------------------------ Parameter init --------------------------------
def init_params(key, input_size, hidden_size, num_layers, num_classes):
    H = hidden_size
    params = {"lstm": []}
    scale = 1.0 / math.sqrt(H)

    def U(k, shape):
        return jax.random.uniform(k, shape, jnp.float32, -scale, scale)

    for l in range(num_layers):
        d_in = input_size if l == 0 else 2 * H
        key, *ks = jax.random.split(key, 9)
        (k_wih_f, k_whh_f, k_bih_f, k_bhh_f,
         k_wih_b, k_whh_b, k_bih_b, k_bhh_b) = ks

        # PyTorch layout: weight_ih (4H, d_in), weight_hh (4H, H), gate order i,f,g,o.
        wih_f = U(k_wih_f, (4 * H, d_in))
        wih_b = U(k_wih_b, (4 * H, d_in))
        whh_f = U(k_whh_f, (4 * H, H))
        whh_b = U(k_whh_b, (4 * H, H))
        b_f = U(k_bih_f, (4 * H,)) + U(k_bhh_f, (4 * H,))   # b_ih + b_hh fused
        b_b = U(k_bih_b, (4 * H,)) + U(k_bhh_b, (4 * H,))

        params["lstm"].append({
            "wih_f": wih_f.T.astype(MATMUL_DTYPE),   # (d_in, 4H) bf16
            "wih_b": wih_b.T.astype(MATMUL_DTYPE),
            "whh_f": whh_f.T.astype(MATMUL_DTYPE),   # (H, 4H) bf16, per-direction (no zero padding)
            "whh_b": whh_b.T.astype(MATMUL_DTYPE),
            "b_f": b_f[None, :],                     # (1, 4H) f32, added post-accumulation
            "b_b": b_b[None, :],
        })

    key, k1, k2 = jax.random.split(key, 3)
    fc_scale = 1.0 / math.sqrt(2 * H)
    params["fc_w_t"] = jax.random.uniform(
        k1, (2 * H, num_classes), jnp.float32, -fc_scale, fc_scale).astype(MATMUL_DTYPE)
    params["fc_b"] = jax.random.uniform(
        k2, (1, num_classes), jnp.float32, -fc_scale, fc_scale)
    return params


# ----------------------------------- Main --------------------------------------
if __name__ == "__main__":
    # Small shapes consistent with the module's forward (B, T, input_size).
    B, T = 2, 8
    input_size, hidden_size, num_layers, num_classes = 16, 32, 2, 3

    key = jax.random.PRNGKey(0)
    kx, kp = jax.random.split(key)
    x = jax.random.normal(kx, (B, T, input_size), jnp.float32)
    params = init_params(kp, input_size, hidden_size, num_layers, num_classes)

    out = birnn_forward(x, params, num_layers=num_layers)
    out = jax.block_until_ready(out)
    assert out.shape == (B, num_classes), out.shape
    print("KERNEL_OK")
</pallas_src>

<mosaic_0001>
module attributes {stable_mosaic.version = 11 : i64} {
  func.func @kernel(%arg0: i32, %arg1: memref<16x16xf32, #tpu.memory_space<vmem>>, %arg2: memref<16x128xbf16, #tpu.memory_space<vmem>>, %arg3: memref<16x128xbf16, #tpu.memory_space<vmem>>, %arg4: memref<32x128xbf16, #tpu.memory_space<vmem>>, %arg5: memref<32x128xbf16, #tpu.memory_space<vmem>>, %arg6: memref<1x128xf32, #tpu.memory_space<vmem>>, %arg7: memref<1x128xf32, #tpu.memory_space<vmem>>, %arg8: memref<64x128xbf16, #tpu.memory_space<vmem>>, %arg9: memref<64x128xbf16, #tpu.memory_space<vmem>>, %arg10: memref<32x128xbf16, #tpu.memory_space<vmem>>, %arg11: memref<32x128xbf16, #tpu.memory_space<vmem>>, %arg12: memref<1x128xf32, #tpu.memory_space<vmem>>, %arg13: memref<1x128xf32, #tpu.memory_space<vmem>>, %arg14: memref<64x3xbf16, #tpu.memory_space<vmem>>, %arg15: memref<1x3xf32, #tpu.memory_space<vmem>>, %arg16: memref<2x3xf32, #tpu.memory_space<vmem>>, %arg17: memref<16x32xf32, #tpu.memory_space<vmem>>, %arg18: memref<16x32xf32, #tpu.memory_space<vmem>>, %arg19: memref<16x128xf32, #tpu.memory_space<vmem>>, %arg20: memref<16x128xf32, #tpu.memory_space<vmem>>) attributes {dimension_semantics = [#tpu.dimension_semantics<arbitrary>], iteration_bounds = array<i64: 1>, scalar_prefetch = 0 : i64, scratch_operands = 4 : i64, tpu.core_type = #tpu.core_type<tc>, window_params = [{pipeline_mode = #tpu.pipeline_mode<synchronous>, transform_indices = @transform_0, window_bounds = array<i64: 16, 16>}, {pipeline_mode = #tpu.pipeline_mode<synchronous>, transform_indices = @transform_1, window_bounds = array<i64: 16, 128>}, {pipeline_mode = #tpu.pipeline_mode<synchronous>, transform_indices = @transform_2, window_bounds = array<i64: 16, 128>}, {pipeline_mode = #tpu.pipeline_mode<synchronous>, transform_indices = @transform_3, window_bounds = array<i64: 32, 128>}, {pipeline_mode = #tpu.pipeline_mode<synchronous>, transform_indices = @transform_4, window_bounds = array<i64: 32, 128>}, {pipeline_mode = #tpu.pipeline_mode<synchronous>, transform_indices = @transform_5, window_bounds = array<i64: 1, 128>}, {pipeline_mode = #tpu.pipeline_mode<synchronous>, transform_indices = @transform_6, window_bounds = array<i64: 1, 128>}, {pipeline_mode = #tpu.pipeline_mode<synchronous>, transform_indices = @transform_7, window_bounds = array<i64: 64, 128>}, {pipeline_mode = #tpu.pipeline_mode<synchronous>, transform_indices = @transform_8, window_bounds = array<i64: 64, 128>}, {pipeline_mode = #tpu.pipeline_mode<synchronous>, transform_indices = @transform_9, window_bounds = array<i64: 32, 128>}, {pipeline_mode = #tpu.pipeline_mode<synchronous>, transform_indices = @transform_10, window_bounds = array<i64: 32, 128>}, {pipeline_mode = #tpu.pipeline_mode<synchronous>, transform_indices = @transform_11, window_bounds = array<i64: 1, 128>}, {pipeline_mode = #tpu.pipeline_mode<synchronous>, transform_indices = @transform_12, window_bounds = array<i64: 1, 128>}, {pipeline_mode = #tpu.pipeline_mode<synchronous>, transform_indices = @transform_13, window_bounds = array<i64: 64, 3>}, {pipeline_mode = #tpu.pipeline_mode<synchronous>, transform_indices = @transform_14, window_bounds = array<i64: 1, 3>}, {pipeline_mode = #tpu.pipeline_mode<synchronous>, transform_indices = @transform_15, window_bounds = array<i64: 2, 3>}]} {
    %c0 = arith.constant 0 : index
    %c0_0 = arith.constant 0 : index
    %0 = vector.load %arg1[%c0, %c0_0] : memref<16x16xf32, #tpu.memory_space<vmem>>, vector<16x16xf32>
    %1 = arith.truncf %0 : vector<16x16xf32> to vector<16x16xbf16>
    %c0_1 = arith.constant 0 : index
    %c0_2 = arith.constant 0 : index
    %2 = vector.load %arg2[%c0_1, %c0_2] : memref<16x128xbf16, #tpu.memory_space<vmem>>, vector<16x128xbf16>
    %cst = arith.constant dense<0.000000e+00> : vector<16x128xf32>
    %3 = tpu.matmul %1, %2, %cst {dimension_numbers = #tpu.dot_dimension_numbers<[1], [0], [0], [1], [0, 0, 1, 1], [], []>} : vector<16x16xbf16>, vector<16x128xbf16>, vector<16x128xf32> -> vector<16x128xf32>
    %c0_3 = arith.constant 0 : index
    %c0_4 = arith.constant 0 : index
    %4 = vector.load %arg6[%c0_3, %c0_4] : memref<1x128xf32, #tpu.memory_space<vmem>>, vector<1x128xf32>
    %5 = vector.broadcast %4 : vector<1x128xf32> to vector<16x128xf32>
    %6 = arith.addf %3, %5 : vector<16x128xf32>
    %c0_5 = arith.constant 0 : index
    %c0_6 = arith.constant 0 : index
    %7 = vector.load %arg19[%c0_5, %c0_6] : memref<16x128xf32, #tpu.memory_space<vmem>>, vector<16x128xf32>
    tpu.vector_store %arg19[%c0_5, %c0_6], %6 {strides = array<i32>} : memref<16x128xf32, #tpu.memory_space<vmem>>, vector<16x128xf32>,
    %c0_7 = arith.constant 0 : index
    %c0_8 = arith.constant 0 : index
    %8 = vector.load %arg3[%c0_7, %c0_8] : memref<16x128xbf16, #tpu.memory_space<vmem>>, vector<16x128xbf16>
    %cst_9 = arith.constant dense<0.000000e+00> : vector<16x128xf32>
    %9 = tpu.matmul %1, %8, %cst_9 {dimension_numbers = #tpu.dot_dimension_numbers<[1], [0], [0], [1], [0, 0, 1, 1], [], []>} : vector<16x16xbf16>, vector<16x128xbf16>, vector<16x128xf32> -> vector<16x128xf32>
    %c0_10 = arith.constant 0 : index
    %c0_11 = arith.constant 0 : index
    %10 = vector.load %arg7[%c0_10, %c0_11] : memref<1x128xf32, #tpu.memory_space<vmem>>, vector<1x128xf32>
    %11 = vector.broadcast %10 : vector<1x128xf32> to vector<16x128xf32>
    %12 = arith.addf %9, %11 : vector<16x128xf32>
    %c0_12 = arith.constant 0 : index
    %c0_13 = arith.constant 0 : index
    %13 = vector.load %arg20[%c0_12, %c0_13] : memref<16x128xf32, #tpu.memory_space<vmem>>, vector<16x128xf32>
    tpu.vector_store %arg20[%c0_12, %c0_13], %12 {strides = array<i32>} : memref<16x128xf32, #tpu.memory_space<vmem>>, vector<16x128xf32>,
    %c0_14 = arith.constant 0 : index
    %c0_15 = arith.constant 0 : index
    %14 = vector.load %arg4[%c0_14, %c0_15] : memref<32x128xbf16, #tpu.memory_space<vmem>>, vector<32x128xbf16>
    %c0_16 = arith.constant 0 : index
    %c0_17 = arith.constant 0 : index
    %15 = vector.load %arg5[%c0_16, %c0_17] : memref<32x128xbf16, #tpu.memory_space<vmem>>, vector<32x128xbf16>
    %cst_18 = arith.constant 0.000000e+00 : f32
    %16 = vector.broadcast %cst_18 : f32 to vector<2x32xf32>
    %cst_19 = arith.constant 0.000000e+00 : f32
    %17 = vector.broadcast %cst_19 : f32 to vector<2x32xf32>
    %cst_20 = arith.constant 0.000000e+00 : f32
    %18 = vector.broadcast %cst_20 : f32 to vector<2x32xf32>
    %cst_21 = arith.constant 0.000000e+00 : f32
    %19 = vector.broadcast %cst_21 : f32 to vector<2x32xf32>
    %c0_22 = arith.constant 0 : index
    %c0_23 = arith.constant 0 : index
    %20 = vector.load %arg19[%c0_22, %c0_23] : memref<16x128xf32, #tpu.memory_space<vmem>>, vector<2x128xf32>
    %21 = arith.truncf %16 : vector<2x32xf32> to vector<2x32xbf16>
    %cst_24 = arith.constant dense<0.000000e+00> : vector<2x128xf32>
    %22 = tpu.matmul %21, %14, %cst_24 {dimension_numbers = #tpu.dot_dimension_numbers<[1], [0], [0], [1], [0, 0, 1, 1], [], []>} : vector<2x32xbf16>, vector<32x128xbf16>, vector<2x128xf32> -> vector<2x128xf32>
    %23 = arith.addf %20, %22 : vector<2x128xf32>
    %c14 = arith.constant 14 : index
    %c0_25 = arith.constant 0 : index
    %24 = vector.load %arg20[%c14, %c0_25] : memref<16x128xf32, #tpu.memory_space<vmem>>, vector<2x128xf32>
    %25 = arith.truncf %18 : vector<2x32xf32> to vector<2x32xbf16>
    %cst_26 = arith.constant dense<0.000000e+00> : vector<2x128xf32>
    %26 = tpu.matmul %25, %15, %cst_26 {dimension_numbers = #tpu.dot_dimension_numbers<[1], [0], [0], [1], [0, 0, 1, 1], [], []>} : vector<2x32xbf16>, vector<32x128xbf16>, vector<2x128xf32> -> vector<2x128xf32>
    %27 = arith.addf %24, %26 : vector<2x128xf32>
    %28 = vector.extract_strided_slice %23 {offsets = [0, 0], sizes = [2, 32], strides = [1, 1]} : vector<2x128xf32> to vector<2x32xf32>
    %29 = arith.negf %28 : vector<2x32xf32>
    %30 = math.exp %29 : vector<2x32xf32>
    %cst_27 = arith.constant 1.000000e+00 : f32
    %31 = vector.broadcast %cst_27 : f32 to vector<2x32xf32>
    %32 = arith.addf %31, %30 : vector<2x32xf32>
    %33 = arith.divf %31, %32 : vector<2x32xf32>
    %34 = vector.extract_strided_slice %23 {offsets = [0, 32], sizes = [2, 32], strides = [1, 1]} : vector<2x128xf32> to vector<2x32xf32>
    %35 = arith.negf %34 : vector<2x32xf32>
    %36 = math.exp %35 : vector<2x32xf32>
    %cst_28 = arith.constant 1.000000e+00 : f32
    %37 = vector.broadcast %cst_28 : f32 to vector<2x32xf32>
    %38 = arith.addf %37, %36 : vector<2x32xf32>
    %39 = arith.divf %37, %38 : vector<2x32xf32>
    %40 = vector.extract_strided_slice %23 {offsets = [0, 64], sizes = [2, 32], strides = [1, 1]} : vector<2x128xf32> to vector<2x32xf32>
    %41 = math.tanh %40 : vector<2x32xf32>
    %42 = vector.extract_strided_slice %23 {offsets = [0, 96], sizes = [2, 32], strides = [1, 1]} : vector<2x128xf32> to vector<2x32xf32>
    %43 = arith.negf %42 : vector<2x32xf32>
    %44 = math.exp %43 : vector<2x32xf32>
    %cst_29 = arith.constant 1.000000e+00 : f32
    %45 = vector.broadcast %cst_29 : f32 to vector<2x32xf32>
    %46 = arith.addf %45, %44 : vector<2x32xf32>
    %47 = arith.divf %45, %46 : vector<2x32xf32>
    %48 = arith.mulf %39, %17 : vector<2x32xf32>
    %49 = arith.mulf %33, %41 : vector<2x32xf32>
    %50 = arith.addf %48, %49 : vector<2x32xf32>
    %51 = math.tanh %50 : vector<2x32xf32>
    %52 = arith.mulf %47, %51 : vector<2x32xf32>
    %53 = vector.extract_strided_slice %27 {offsets = [0, 0], sizes = [2, 32], strides = [1, 1]} : vector<2x128xf32> to vector<2x32xf32>
    %54 = arith.negf %53 : vector<2x32xf32>
    %55 = math.exp %54 : vector<2x32xf32>
    %cst_30 = arith.constant 1.000000e+00 : f32
    %56 = vector.broadcast %cst_30 : f32 to vector<2x32xf32>
    %57 = arith.addf %56, %55 : vector<2x32xf32>
    %58 = arith.divf %56, %57 : vector<2x32xf32>
    %59 = vector.extract_strided_slice %27 {offsets = [0, 32], sizes = [2, 32], strides = [1, 1]} : vector<2x128xf32> to vector<2x32xf32>
    %60 = arith.negf %59 : vector<2x32xf32>
    %61 = math.exp %60 : vector<2x32xf32>
    %cst_31 = arith.constant 1.000000e+00 : f32
    %62 = vector.broadcast %cst_31 : f32 to vector<2x32xf32>
    %63 = arith.addf %62, %61 : vector<2x32xf32>
    %64 = arith.divf %62, %63 : vector<2x32xf32>
    %65 = vector.extract_strided_slice %27 {offsets = [0, 64], sizes = [2, 32], strides = [1, 1]} : vector<2x128xf32> to vector<2x32xf32>
    %66 = math.tanh %65 : vector<2x32xf32>
    %67 = vector.extract_strided_slice %27 {offsets = [0, 96], sizes = [2, 32], strides = [1, 1]} : vector<2x128xf32> to vector<2x32xf32>
    %68 = arith.negf %67 : vector<2x32xf32>
    %69 = math.exp %68 : vector<2x32xf32>
    %cst_32 = arith.constant 1.000000e+00 : f32
    %70 = vector.broadcast %cst_32 : f32 to vector<2x32xf32>
    %71 = arith.addf %70, %69 : vector<2x32xf32>
    %72 = arith.divf %70, %71 : vector<2x32xf32>
    %73 = arith.mulf %64, %19 : vector<2x32xf32>
    %74 = arith.mulf %58, %66 : vector<2x32xf32>
    %75 = arith.addf %73, %74 : vector<2x32xf32>
    %76 = math.tanh %75 : vector<2x32xf32>
    %77 = arith.mulf %72, %76 : vector<2x32xf32>
    %c0_33 = arith.constant 0 : index
    %c0_34 = arith.constant 0 : index
    %78 = vector.load %arg17[%c0_33, %c0_34] : memref<16x32xf32, #tpu.memory_space<vmem>>, vector<2x32xf32>
    tpu.vector_store %arg17[%c0_33, %c0_34], %52 {strides = array<i32>} : memref<16x32xf32, #tpu.memory_space<vmem>>, vector<2x32xf32>,
    %c14_35 = arith.constant 14 : index
    %c0_36 = arith.constant 0 : index
    %79 = vector.load %arg18[%c14_35, %c0_36] : memref<16x32xf32, #tpu.memory_space<vmem>>, vector<2x32xf32>
    tpu.vector_store %arg18[%c14_35, %c0_36], %77 {strides = array<i32>} : memref<16x32xf32, #tpu.memory_space<vmem>>, vector<2x32xf32>,
    %c2 = arith.constant 2 : index
    %c0_37 = arith.constant 0 : index
    %80 = vector.load %arg19[%c2, %c0_37] : memref<16x128xf32, #tpu.memory_space<vmem>>, vector<2x128xf32>
    %81 = arith.truncf %52 : vector<2x32xf32> to vector<2x32xbf16>
    %cst_38 = arith.constant dense<0.000000e+00> : vector<2x128xf32>
    %82 = tpu.matmul %81, %14, %cst_38 {dimension_numbers = #tpu.dot_dimension_numbers<[1], [0], [0], [1], [0, 0, 1, 1], [], []>} : vector<2x32xbf16>, vector<32x128xbf16>, vector<2x128xf32> -> vector<2x128xf32>
    %83 = arith.addf %80, %82 : vector<2x128xf32>
    %c12 = arith.constant 12 : index
    %c0_39 = arith.constant 0 : index
    %84 = vector.load %arg20[%c12, %c0_39] : memref<16x128xf32, #tpu.memory_space<vmem>>, vector<2x128xf32>
    %85 = arith.truncf %77 : vector<2x32xf32> to vector<2x32xbf16>
    %cst_40 = arith.constant dense<0.000000e+00> : vector<2x128xf32>
    %86 = tpu.matmul %85, %15, %cst_40 {dimension_numbers = #tpu.dot_dimension_numbers<[1], [0], [0], [1], [0, 0, 1, 1], [], []>} : vector<2x32xbf16>, vector<32x128xbf16>, vector<2x128xf32> -> vector<2x128xf32>
    %87 = arith.addf %84, %86 : vector<2x128xf32>
    %88 = vector.extract_strided_slice %83 {offsets = [0, 0], sizes = [2, 32], strides = [1, 1]} : vector<2x128xf32> to vector<2x32xf32>
    %89 = arith.negf %88 : vector<2x32xf32>
    %90 = math.exp %89 : vector<2x32xf32>
    %cst_41 = arith.constant 1.000000e+00 : f32
    %91 = vector.broadcast %cst_41 : f32 to vector<2x32xf32>
    %92 = arith.addf %91, %90 : vector<2x32xf32>
    %93 = arith.divf %91, %92 : vector<2x32xf32>
    %94 = vector.extract_strided_slice %83 {offsets = [0, 32], sizes = [2, 32], strides = [1, 1]} : vector<2x128xf32> to vector<2x32xf32>
    %95 = arith.negf %94 : vector<2x32xf32>
    %96 = math.exp %95 : vector<2x32xf32>
    %cst_42 = arith.constant 1.000000e+00 : f32
    %97 = vector.broadcast %cst_42 : f32 to vector<2x32xf32>
    %98 = arith.addf %97, %96 : vector<2x32xf32>
    %99 = arith.divf %97, %98 : vector<2x32xf32>
    %100 = vector.extract_strided_slice %83 {offsets = [0, 64], sizes = [2, 32], strides = [1, 1]} : vector<2x128xf32> to vector<2x32xf32>
    %101 = math.tanh %100 : vector<2x32xf32>
    %102 = vector.extract_strided_slice %83 {offsets = [0, 96], sizes = [2, 32], strides = [1, 1]} : vector<2x128xf32> to vector<2x32xf32>
    %103 = arith.negf %102 : vector<2x32xf32>
    %104 = math.exp %103 : vector<2x32xf32>
    %cst_43 = arith.constant 1.000000e+00 : f32
    %105 = vector.broadcast %cst_43 : f32 to vector<2x32xf32>
    %106 = arith.addf %105, %104 : vector<2x32xf32>
    %107 = arith.divf %105, %106 : vector<2x32xf32>
    %108 = arith.mulf %99, %50 : vector<2x32xf32>
    %109 = arith.mulf %93, %101 : vector<2x32xf32>
    %110 = arith.addf %108, %109 : vector<2x32xf32>
    %111 = math.tanh %110 : vector<2x32xf32>
    %112 = arith.mulf %107, %111 : vector<2x32xf32>
    %113 = vector.extract_strided_slice %87 {offsets = [0, 0], sizes = [2, 32], strides = [1, 1]} : vector<2x128xf32> to vector<2x32xf32>
    %114 = arith.negf %113 : vector<2x32xf32>
    %115 = math.exp %114 : vector<2x32xf32>
    %cst_44 = arith.constant 1.000000e+00 : f32
    %116 = vector.broadcast %cst_44 : f32 to vector<2x32xf32>
    %117 = arith.addf %116, %115 : vector<2x32xf32>
    %118 = arith.divf %116, %117 : vector<2x32xf32>
    %119 = vector.extract_strided_slice %87 {offsets = [0, 32], sizes = [2, 32], strides = [1, 1]} : vector<2x128xf32> to vector<2x32xf32>
    %120 = arith.negf %119 : vector<2x32xf32>
    %121 = math.exp %120 : vector<2x32xf32>
    %cst_45 = arith.constant 1.000000e+00 : f32
    %122 = vector.broadcast %cst_45 : f32 to vector<2x32xf32>
    %123 = arith.addf %122, %121 : vector<2x32xf32>
    %124 = arith.divf %122, %123 : vector<2x32xf32>
    %125 = vector.extract_strided_slice %87 {offsets = [0, 64], sizes = [2, 32], strides = [1, 1]} : vector<2x128xf32> to vector<2x32xf32>
    %126 = math.tanh %125 : vector<2x32xf32>
    %127 = vector.extract_strided_slice %87 {offsets = [0, 96], sizes = [2, 32], strides = [1, 1]} : vector<2x128xf32> to vector<2x32xf32>
    %128 = arith.negf %127 : vector<2x32xf32>
    %129 = math.exp %128 : vector<2x32xf32>
    %cst_46 = arith.constant 1.000000e+00 : f32
    %130 = vector.broadcast %cst_46 : f32 to vector<2x32xf32>
    %131 = arith.addf %130, %129 : vector<2x32xf32>
    %132 = arith.divf %130, %131 : vector<2x32xf32>
    %133 = arith.mulf %124, %75 : vector<2x32xf32>
    %134 = arith.mulf %118, %126 : vector<2x32xf32>
    %135 = arith.addf %133, %134 : vector<2x32xf32>
    %136 = math.tanh %135 : vector<2x32xf32>
    %137 = arith.mulf %132, %136 : vector<2x32xf32>
    %c2_47 = arith.constant 2 : index
    %c0_48 = arith.constant 0 : index
    %138 = vector.load %arg17[%c2_47, %c0_48] : memref<16x32xf32, #tpu.memory_space<vmem>>, vector<2x32xf32>
    tpu.vector_store %arg17[%c2_47, %c0_48], %112 {strides = array<i32>} : memref<16x32xf32, #tpu.memory_space<vmem>>, vector<2x32xf32>,
    %c12_49 = arith.constant 12 : index
    %c0_50 = arith.constant 0 : index
    %139 = vector.load %arg18[%c12_49, %c0_50] : memref<16x32xf32, #tpu.memory_space<vmem>>, vector<2x32xf32>
    tpu.vector_store %arg18[%c12_49, %c0_50], %137 {strides = array<i32>} : memref<16x32xf32, #tpu.memory_space<vmem>>, vector<2x32xf32>,
    %c4 = arith.constant 4 : index
    %c0_51 = arith.constant 0 : index
    %140 = vector.load %arg19[%c4, %c0_51] : memref<16x128xf32, #tpu.memory_space<vmem>>, vector<2x128xf32>
    %141 = arith.truncf %112 : vector<2x32xf32> to vector<2x32xbf16>
    %cst_52 = arith.constant dense<0.000000e+00> : vector<2x128xf32>
    %142 = tpu.matmul %141, %14, %cst_52 {dimension_numbers = #tpu.dot_dimension_numbers<[1], [0], [0], [1], [0, 0, 1, 1], [], []>} : vector<2x32xbf16>, vector<32x128xbf16>, vector<2x128xf32> -> vector<2x128xf32>
    %143 = arith.addf %140, %142 : vector<2x128xf32>
    %c10 = arith.constant 10 : index
    %c0_53 = arith.constant 0 : index
    %144 = vector.load %arg20[%c10, %c0_53] : memref<16x128xf32, #tpu.memory_space<vmem>>, vector<2x128xf32>
    %145 = arith.truncf %137 : vector<2x32xf32> to vector<2x32xbf16>
    %cst_54 = arith.constant dense<0.000000e+00> : vector<2x128xf32>
    %146 = tpu.matmul %145, %15, %cst_54 {dimension_numbers = #tpu.dot_dimension_numbers<[1], [0], [0], [1], [0, 0, 1, 1], [], []>} : vector<2x32xbf16>, vector<32x128xbf16>, vector<2x128xf32> -> vector<2x128xf32>
    %147 = arith.addf %144, %146 : vector<2x128xf32>
    %148 = vector.extract_strided_slice %143 {offsets = [0, 0], sizes = [2, 32], strides = [1, 1]} : vector<2x128xf32> to vector<2x32xf32>
    %149 = arith.negf %148 : vector<2x32xf32>
    %150 = math.exp %149 : vector<2x32xf32>
    %cst_55 = arith.constant 1.000000e+00 : f32
    %151 = vector.broadcast %cst_55 : f32 to vector<2x32xf32>
    %152 = arith.addf %151, %150 : vector<2x32xf32>
    %153 = arith.divf %151, %152 : vector<2x32xf32>
    %154 = vector.extract_strided_slice %143 {offsets = [0, 32], sizes = [2, 32], strides = [1, 1]} : vector<2x128xf32> to vector<2x32xf32>
    %155 = arith.negf %154 : vector<2x32xf32>
    %156 = math.exp %155 : vector<2x32xf32>
    %cst_56 = arith.constant 1.000000e+00 : f32
    %157 = vector.broadcast %cst_56 : f32 to vector<2x32xf32>
    %158 = arith.addf %157, %156 : vector<2x32xf32>
    %159 = arith.divf %157, %158 : vector<2x32xf32>
    %160 = vector.extract_strided_slice %143 {offsets = [0, 64], sizes = [2, 32], strides = [1, 1]} : vector<2x128xf32> to vector<2x32xf32>
    %161 = math.tanh %160 : vector<2x32xf32>
    %162 = vector.extract_strided_slice %143 {offsets = [0, 96], sizes = [2, 32], strides = [1, 1]} : vector<2x128xf32> to vector<2x32xf32>
    %163 = arith.negf %162 : vector<2x32xf32>
    %164 = math.exp %163 : vector<2x32xf32>
    %cst_57 = arith.constant 1.000000e+00 : f32
    %165 = vector.broadcast %cst_57 : f32 to vector<2x32xf32>
    %166 = arith.addf %165, %164 : vector<2x32xf32>
    %167 = arith.divf %165, %166 : vector<2x32xf32>
    %168 = arith.mulf %159, %110 : vector<2x32xf32>
    %169 = arith.mulf %153, %161 : vector<2x32xf32>
    %170 = arith.addf %168, %169 : vector<2x32xf32>
    %171 = math.tanh %170 : vector<2x32xf32>
    %172 = arith.mulf %167, %171 : vector<2x32xf32>
    %173 = vector.extract_strided_slice %147 {offsets = [0, 0], sizes = [2, 32], strides = [1, 1]} : vector<2x128xf32> to vector<2x32xf32>
    %174 = arith.negf %173 : vector<2x32xf32>
    %175 = math.exp %174 : vector<2x32xf32>
    %cst_58 = arith.constant 1.000000e+00 : f32
    %176 = vector.broadcast %cst_58 : f32 to vector<2x32xf32>
    %177 = arith.addf %176, %175 : vector<2x32xf32>
    %178 = arith.divf %176, %177 : vector<2x32xf32>
    %179 = vector.extract_strided_slice %147 {offsets = [0, 32], sizes = [2, 32], strides = [1, 1]} : vector<2x128xf32> to vector<2x32xf32>
    %180 = arith.negf %179 : vector<2x32xf32>
    %181 = math.exp %180 : vector<2x32xf32>
    %cst_59 = arith.constant 1.000000e+00 : f32
    %182 = vector.broadcast %cst_59 : f32 to vector<2x32xf32>
    %183 = arith.addf %182, %181 : vector<2x32xf32>
    %184 = arith.divf %182, %183 : vector<2x32xf32>
    %185 = vector.extract_strided_slice %147 {offsets = [0, 64], sizes = [2, 32], strides = [1, 1]} : vector<2x128xf32> to vector<2x32xf32>
    %186 = math.tanh %185 : vector<2x32xf32>
    %187 = vector.extract_strided_slice %147 {offsets = [0, 96], sizes = [2, 32], strides = [1, 1]} : vector<2x128xf32> to vector<2x32xf32>
    %188 = arith.negf %187 : vector<2x32xf32>
    %189 = math.exp %188 : vector<2x32xf32>
    %cst_60 = arith.constant 1.000000e+00 : f32
    %190 = vector.broadcast %cst_60 : f32 to vector<2x32xf32>
    %191 = arith.addf %190, %189 : vector<2x32xf32>
    %192 = arith.divf %190, %191 : vector<2x32xf32>
    %193 = arith.mulf %184, %135 : vector<2x32xf32>
    %194 = arith.mulf %178, %186 : vector<2x32xf32>
    %195 = arith.addf %193, %194 : vector<2x32xf32>
    %196 = math.tanh %195 : vector<2x32xf32>
    %197 = arith.mulf %192, %196 : vector<2x32xf32>
    %c4_61 = arith.constant 4 : index
    %c0_62 = arith.constant 0 : index
    %198 = vector.load %arg17[%c4_61, %c0_62] : memref<16x32xf32, #tpu.memory_space<vmem>>, vector<2x32xf32>
    tpu.vector_store %arg17[%c4_61, %c0_62], %172 {strides = array<i32>} : memref<16x32xf32, #tpu.memory_space<vmem>>, vector<2x32xf32>,
    %c10_63 = arith.constant 10 : index
    %c0_64 = arith.constant 0 : index
    %199 = vector.load %arg18[%c10_63, %c0_64] : memref<16x32xf32, #tpu.memory_space<vmem>>, vector<2x32xf32>
    tpu.vector_store %arg18[%c10_63, %c0_64], %197 {strides = array<i32>} : memref<16x32xf32, #tpu.memory_space<vmem>>, vector<2x32xf32>,
    %c6 = arith.constant 6 : index
    %c0_65 = arith.constant 0 : index
    %200 = vector.load %arg19[%c6, %c0_65] : memref<16x128xf32, #tpu.memory_space<vmem>>, vector<2x128xf32>
    %201 = arith.truncf %172 : vector<2x32xf32> to vector<2x32xbf16>
    %cst_66 = arith.constant dense<0.000000e+00> : vector<2x128xf32>
    %202 = tpu.matmul %201, %14, %cst_66 {dimension_numbers = #tpu.dot_dimension_numbers<[1], [0], [0], [1], [0, 0, 1, 1], [], []>} : vector<2x32xbf16>, vector<32x128xbf16>, vector<2x128xf32> -> vector<2x128xf32>
    %203 = arith.addf %200, %202 : vector<2x128xf32>
    %c8 = arith.constant 8 : index
    %c0_67 = arith.constant 0 : index
    %204 = vector.load %arg20[%c8, %c0_67] : memref<16x128xf32, #tpu.memory_space<vmem>>, vector<2x128xf32>
    %205 = arith.truncf %197 : vector<2x32xf32> to vector<2x32xbf16>
    %cst_68 = arith.constant dense<0.000000e+00> : vector<2x128xf32>
    %206 = tpu.matmul %205, %15, %cst_68 {dimension_numbers = #tpu.dot_dimension_numbers<[1], [0], [0], [1], [0, 0, 1, 1], [], []>} : vector<2x32xbf16>, vector<32x128xbf16>, vector<2x128xf32> -> vector<2x128xf32>
    %207 = arith.addf %204, %206 : vector<2x128xf32>
    %208 = vector.extract_strided_slice %203 {offsets = [0, 0], sizes = [2, 32], strides = [1, 1]} : vector<2x128xf32> to vector<2x32xf32>
    %209 = arith.negf %208 : vector<2x32xf32>
    %210 = math.exp %209 : vector<2x32xf32>
    %cst_69 = arith.constant 1.000000e+00 : f32
    %211 = vector.broadcast %cst_69 : f32 to vector<2x32xf32>
    %212 = arith.addf %211, %210 : vector<2x32xf32>
    %213 = arith.divf %211, %212 : vector<2x32xf32>
    %214 = vector.extract_strided_slice %203 {offsets = [0, 32], sizes = [2, 32], strides = [1, 1]} : vector<2x128xf32> to vector<2x32xf32>
    %215 = arith.negf %214 : vector<2x32xf32>
    %216 = math.exp %215 : vector<2x32xf32>
    %cst_70 = arith.constant 1.000000e+00 : f32
    %217 = vector.broadcast %cst_70 : f32 to vector<2x32xf32>
    %218 = arith.addf %217, %216 : vector<2x32xf32>
    %219 = arith.divf %217, %218 : vector<2x32xf32>
    %220 = vector.extract_strided_slice %203 {offsets = [0, 64], sizes = [2, 32], strides = [1, 1]} : vector<2x128xf32> to vector<2x32xf32>
    %221 = math.tanh %220 : vector<2x32xf32>
    %222 = vector.extract_strided_slice %203 {offsets = [0, 96], sizes = [2, 32], strides = [1, 1]} : vector<2x128xf32> to vector<2x32xf32>
    %223 = arith.negf %222 : vector<2x32xf32>
    %224 = math.exp %223 : vector<2x32xf32>
    %cst_71 = arith.constant 1.000000e+00 : f32
    %225 = vector.broadcast %cst_71 : f32 to vector<2x32xf32>
    %226 = arith.addf %225, %224 : vector<2x32xf32>
    %227 = arith.divf %225, %226 : vector<2x32xf32>
    %228 = arith.mulf %219, %170 : vector<2x32xf32>
    %229 = arith.mulf %213, %221 : vector<2x32xf32>
    %230 = arith.addf %228, %229 : vector<2x32xf32>
    %231 = math.tanh %230 : vector<2x32xf32>
    %232 = arith.mulf %227, %231 : vector<2x32xf32>
    %233 = vector.extract_strided_slice %207 {offsets = [0, 0], sizes = [2, 32], strides = [1, 1]} : vector<2x128xf32> to vector<2x32xf32>
    %234 = arith.negf %233 : vector<2x32xf32>
    %235 = math.exp %234 : vector<2x32xf32>
    %cst_72 = arith.constant 1.000000e+00 : f32
    %236 = vector.broadcast %cst_72 : f32 to vector<2x32xf32>
    %237 = arith.addf %236, %235 : vector<2x32xf32>
    %238 = arith.divf %236, %237 : vector<2x32xf32>
    %239 = vector.extract_strided_slice %207 {offsets = [0, 32], sizes = [2, 32], strides = [1, 1]} : vector<2x128xf32> to vector<2x32xf32>
    %240 = arith.negf %239 : vector<2x32xf32>
    %241 = math.exp %240 : vector<2x32xf32>
    %cst_73 = arith.constant 1.000000e+00 : f32
    %242 = vector.broadcast %cst_73 : f32 to vector<2x32xf32>
    %243 = arith.addf %242, %241 : vector<2x32xf32>
    %244 = arith.divf %242, %243 : vector<2x32xf32>
    %245 = vector.extract_strided_slice %207 {offsets = [0, 64], sizes = [2, 32], strides = [1, 1]} : vector<2x128xf32> to vector<2x32xf32>
    %246 = math.tanh %245 : vector<2x32xf32>
    %247 = vector.extract_strided_slice %207 {offsets = [0, 96], sizes = [2, 32], strides = [1, 1]} : vector<2x128xf32> to vector<2x32xf32>
    %248 = arith.negf %247 : vector<2x32xf32>
    %249 = math.exp %248 : vector<2x32xf32>
    %cst_74 = arith.constant 1.000000e+00 : f32
    %250 = vector.broadcast %cst_74 : f32 to vector<2x32xf32>
    %251 = arith.addf %250, %249 : vector<2x32xf32>
    %252 = arith.divf %250, %251 : vector<2x32xf32>
    %253 = arith.mulf %244, %195 : vector<2x32xf32>
    %254 = arith.mulf %238, %246 : vector<2x32xf32>
    %255 = arith.addf %253, %254 : vector<2x32xf32>
    %256 = math.tanh %255 : vector<2x32xf32>
    %257 = arith.mulf %252, %256 : vector<2x32xf32>
    %c6_75 = arith.constant 6 : index
    %c0_76 = arith.constant 0 : index
    %258 = vector.load %arg17[%c6_75, %c0_76] : memref<16x32xf32, #tpu.memory_space<vmem>>, vector<2x32xf32>
    tpu.vector_store %arg17[%c6_75, %c0_76], %232 {strides = array<i32>} : memref<16x32xf32, #tpu.memory_space<vmem>>, vector<2x32xf32>,
    %c8_77 = arith.constant 8 : index
    %c0_78 = arith.constant 0 : index
    %259 = vector.load %arg18[%c8_77, %c0_78] : memref<16x32xf32, #tpu.memory_space<vmem>>, vector<2x32xf32>
    tpu.vector_store %arg18[%c8_77, %c0_78], %257 {strides = array<i32>} : memref<16x32xf32, #tpu.memory_space<vmem>>, vector<2x32xf32>,
    %c8_79 = arith.constant 8 : index
    %c0_80 = arith.constant 0 : index
    %260 = vector.load %arg19[%c8_79, %c0_80] : memref<16x128xf32, #tpu.memory_space<vmem>>, vector<2x128xf32>
    %261 = arith.truncf %232 : vector<2x32xf32> to vector<2x32xbf16>
    %cst_81 = arith.constant dense<0.000000e+00> : vector<2x128xf32>
    %262 = tpu.matmul %261, %14, %cst_81 {dimension_numbers = #tpu.dot_dimension_numbers<[1], [0], [0], [1], [0, 0, 1, 1], [], []>} : vector<2x32xbf16>, vector<32x128xbf16>, vector<2x128xf32> -> vector<2x128xf32>
    %263 = arith.addf %260, %262 : vector<2x128xf32>
    %c6_82 = arith.constant 6 : index
    %c0_83 = arith.constant 0 : index
    %264 = vector.load %arg20[%c6_82, %c0_83] : memref<16x128xf32, #tpu.memory_space<vmem>>, vector<2x128xf32>
    %265 = arith.truncf %257 : vector<2x32xf32> to vector<2x32xbf16>
    %cst_84 = arith.constant dense<0.000000e+00> : vector<2x128xf32>
    %266 = tpu.matmul %265, %15, %cst_84 {dimension_numbers = #tpu.dot_dimension_numbers<[1], [0], [0], [1], [0, 0, 1, 1], [], []>} : vector<2x32xbf16>, vector<32x128xbf16>, vector<2x128xf32> -> vector<2x128xf32>
    %267 = arith.addf %264, %266 : vector<2x128xf32>
    %268 = vector.extract_strided_slice %263 {offsets = [0, 0], sizes = [2, 32], strides = [1, 1]} : vector<2x128xf32> to vector<2x32xf32>
    %269 = arith.negf %268 : vector<2x32xf32>
    %270 = math.exp %269 : vector<2x32xf32>
    %cst_85 = arith.constant 1.000000e+00 : f32
    %271 = vector.broadcast %cst_85 : f32 to vector<2x32xf32>
    %272 = arith.addf %271, %270 : vector<2x32xf32>
    %273 = arith.divf %271, %272 : vector<2x32xf32>
    %274 = vector.extract_strided_slice %263 {offsets = [0, 32], sizes = [2, 32], strides = [1, 1]} : vector<2x128xf32> to vector<2x32xf32>
    %275 = arith.negf %274 : vector<2x32xf32>
    %276 = math.exp %275 : vector<2x32xf32>
    %cst_86 = arith.constant 1.000000e+00 : f32
    %277 = vector.broadcast %cst_86 : f32 to vector<2x32xf32>
    %278 = arith.addf %277, %276 : vector<2x32xf32>
    %279 = arith.divf %277, %278 : vector<2x32xf32>
    %280 = vector.extract_strided_slice %263 {offsets = [0, 64], sizes = [2, 32], strides = [1, 1]} : vector<2x128xf32> to vector<2x32xf32>
    %281 = math.tanh %280 : vector<2x32xf32>
    %282 = vector.extract_strided_slice %263 {offsets = [0, 96], sizes = [2, 32], strides = [1, 1]} : vector<2x128xf32> to vector<2x32xf32>
    %283 = arith.negf %282 : vector<2x32xf32>
    %284 = math.exp %283 : vector<2x32xf32>
    %cst_87 = arith.constant 1.000000e+00 : f32
    %285 = vector.broadcast %cst_87 : f32 to vector<2x32xf32>
    %286 = arith.addf %285, %284 : vector<2x32xf32>
    %287 = arith.divf %285, %286 : vector<2x32xf32>
    %288 = arith.mulf %279, %230 : vector<2x32xf32>
    %289 = arith.mulf %273, %281 : vector<2x32xf32>
    %290 = arith.addf %288, %289 : vector<2x32xf32>
    %291 = math.tanh %290 : vector<2x32xf32>
    %292 = arith.mulf %287, %291 : vector<2x32xf32>
    %293 = vector.extract_strided_slice %267 {offsets = [0, 0], sizes = [2, 32], strides = [1, 1]} : vector<2x128xf32> to vector<2x32xf32>
    %294 = arith.negf %293 : vector<2x32xf32>
    %295 = math.exp %294 : vector<2x32xf32>
    %cst_88 = arith.constant 1.000000e+00 : f32
    %296 = vector.broadcast %cst_88 : f32 to vector<2x32xf32>
    %297 = arith.addf %296, %295 : vector<2x32xf32>
    %298 = arith.divf %296, %297 : vector<2x32xf32>
    %299 = vector.extract_strided_slice %267 {offsets = [0, 32], sizes = [2, 32], strides = [1, 1]} : vector<2x128xf32> to vector<2x32xf32>
    %300 = arith.negf %299 : vector<2x32xf32>
    %301 = math.exp %300 : vector<2x32xf32>
    %cst_89 = arith.constant 1.000000e+00 : f32
    %302 = vector.broadcast %cst_89 : f32 to vector<2x32xf32>
    %303 = arith.addf %302, %301 : vector<2x32xf32>
    %304 = arith.divf %302, %303 : vector<2x32xf32>
    %305 = vector.extract_strided_slice %267 {offsets = [0, 64], sizes = [2, 32], strides = [1, 1]} : vector<2x128xf32> to vector<2x32xf32>
    %306 = math.tanh %305 : vector<2x32xf32>
    %307 = vector.extract_strided_slice %267 {offsets = [0, 96], sizes = [2, 32], strides = [1, 1]} : vector<2x128xf32> to vector<2x32xf32>
    %308 = arith.negf %307 : vector<2x32xf32>
    %309 = math.exp %308 : vector<2x32xf32>
    %cst_90 = arith.constant 1.000000e+00 : f32
    %310 = vector.broadcast %cst_90 : f32 to vector<2x32xf32>
    %311 = arith.addf %310, %309 : vector<2x32xf32>
    %312 = arith.divf %310, %311 : vector<2x32xf32>
    %313 = arith.mulf %304, %255 : vector<2x32xf32>
    %314 = arith.mulf %298, %306 : vector<2x32xf32>
    %315 = arith.addf %313, %314 : vector<2x32xf32>
    %316 = math.tanh %315 : vector<2x32xf32>
    %317 = arith.mulf %312, %316 : vector<2x32xf32>
    %c8_91 = arith.constant 8 : index
    %c0_92 = arith.constant 0 : index
    %318 = vector.load %arg17[%c8_91, %c0_92] : memref<16x32xf32, #tpu.memory_space<vmem>>, vector<2x32xf32>
    tpu.vector_store %arg17[%c8_91, %c0_92], %292 {strides = array<i32>} : memref<16x32xf32, #tpu.memory_space<vmem>>, vector<2x32xf32>,
    %c6_93 = arith.constant 6 : index
    %c0_94 = arith.constant 0 : index
    %319 = vector.load %arg18[%c6_93, %c0_94] : memref<16x32xf32, #tpu.memory_space<vmem>>, vector<2x32xf32>
    tpu.vector_store %arg18[%c6_93, %c0_94], %317 {strides = array<i32>} : memref<16x32xf32, #tpu.memory_space<vmem>>, vector<2x32xf32>,
    %c10_95 = arith.constant 10 : index
    %c0_96 = arith.constant 0 : index
    %320 = vector.load %arg19[%c10_95, %c0_96] : memref<16x128xf32, #tpu.memory_space<vmem>>, vector<2x128xf32>
    %321 = arith.truncf %292 : vector<2x32xf32> to vector<2x32xbf16>
    %cst_97 = arith.constant dense<0.000000e+00> : vector<2x128xf32>
    %322 = tpu.matmul %321, %14, %cst_97 {dimension_numbers = #tpu.dot_dimension_numbers<[1], [0], [0], [1], [0, 0, 1, 1], [], []>} : vector<2x32xbf16>, vector<32x128xbf16>, vector<2x128xf32> -> vector<2x128xf32>
    %323 = arith.addf %320, %322 : vector<2x128xf32>
    %c4_98 = arith.constant 4 : index
    %c0_99 = arith.constant 0 : index
    %324 = vector.load %arg20[%c4_98, %c0_99] : memref<16x128xf32, #tpu.memory_space<vmem>>, vector<2x128xf32>
    %325 = arith.truncf %317 : vector<2x32xf32> to vector<2x32xbf16>
    %cst_100 = arith.constant dense<0.000000e+00> : vector<2x128xf32>
    %326 = tpu.matmul %325, %15, %cst_100 {dimension_numbers = #tpu.dot_dimension_numbers<[1], [0], [0], [1], [0, 0, 1, 1], [], []>} : vector<2x32xbf16>, vector<32x128xbf16>, vector<2x128xf32> -> vector<2x128xf32>
    %327 = arith.addf %324, %326 : vector<2x128xf32>
    %328 = vector.extract_strided_slice %323 {offsets = [0, 0], sizes = [2, 32], strides = [1, 1]} : vector<2x128xf32> to vector<2x32xf32>
    %329 = arith.negf %328 : vector<2x32xf32>
    %330 = math.exp %329 : vector<2x32xf32>
    %cst_101 = arith.constant 1.000000e+00 : f32
    %331 = vector.broadcast %cst_101 : f32 to vector<2x32xf32>
    %332 = arith.addf %331, %330 : vector<2x32xf32>
    %333 = arith.divf %331, %332 : vector<2x32xf32>
    %334 = vector.extract_strided_slice %323 {offsets = [0, 32], sizes = [2, 32], strides = [1, 1]} : vector<2x128xf32> to vector<2x32xf32>
    %335 = arith.negf %334 : vector<2x32xf32>
    %336 = math.exp %335 : vector<2x32xf32>
    %cst_102 = arith.constant 1.000000e+00 : f32
    %337 = vector.broadcast %cst_102 : f32 to vector<2x32xf32>
    %338 = arith.addf %337, %336 : vector<2x32xf32>
    %339 = arith.divf %337, %338 : vector<2x32xf32>
    %340 = vector.extract_strided_slice %323 {offsets = [0, 64], sizes = [2, 32], strides = [1, 1]} : vector<2x128xf32> to vector<2x32xf32>
    %341 = math.tanh %340 : vector<2x32xf32>
    %342 = vector.extract_strided_slice %323 {offsets = [0, 96], sizes = [2, 32], strides = [1, 1]} : vector<2x128xf32> to vector<2x32xf32>
    %343 = arith.negf %342 : vector<2x32xf32>
    %344 = math.exp %343 : vector<2x32xf32>
    %cst_103 = arith.constant 1.000000e+00 : f32
    %345 = vector.broadcast %cst_103 : f32 to vector<2x32xf32>
    %346 = arith.addf %345, %344 : vector<2x32xf32>
    %347 = arith.divf %345, %346 : vector<2x32xf32>
    %348 = arith.mulf %339, %290 : vector<2x32xf32>
    %349 = arith.mulf %333, %341 : vector<2x32xf32>
    %350 = arith.addf %348, %349 : vector<2x32xf32>
    %351 = math.tanh %350 : vector<2x32xf32>
    %352 = arith.mulf %347, %351 : vector<2x32xf32>
    %353 = vector.extract_strided_slice %327 {offsets = [0, 0], sizes = [2, 32], strides = [1, 1]} : vector<2x128xf32> to vector<2x32xf32>
    %354 = arith.negf %353 : vector<2x32xf32>
    %355 = math.exp %354 : vector<2x32xf32>
    %cst_104 = arith.constant 1.000000e+00 : f32
    %356 = vector.broadcast %cst_104 : f32 to vector<2x32xf32>
    %357 = arith.addf %356, %355 : vector<2x32xf32>
    %358 = arith.divf %356, %357 : vector<2x32xf32>
    %359 = vector.extract_strided_slice %327 {offsets = [0, 32], sizes = [2, 32], strides = [1, 1]} : vector<2x128xf32> to vector<2x32xf32>
    %360 = arith.negf %359 : vector<2x32xf32>
    %361 = math.exp %360 : vector<2x32xf32>
    %cst_105 = arith.constant 1.000000e+00 : f32
    %362 = vector.broadcast %cst_105 : f32 to vector<2x32xf32>
    %363 = arith.addf %362, %361 : vector<2x32xf32>
    %364 = arith.divf %362, %363 : vector<2x32xf32>
    %365 = vector.extract_strided_slice %327 {offsets = [0, 64], sizes = [2, 32], strides = [1, 1]} : vector<2x128xf32> to vector<2x32xf32>
    %366 = math.tanh %365 : vector<2x32xf32>
    %367 = vector.extract_strided_slice %327 {offsets = [0, 96], sizes = [2, 32], strides = [1, 1]} : vector<2x128xf32> to vector<2x32xf32>
    %368 = arith.negf %367 : vector<2x32xf32>
    %369 = math.exp %368 : vector<2x32xf32>
    %cst_106 = arith.constant 1.000000e+00 : f32
    %370 = vector.broadcast %cst_106 : f32 to vector<2x32xf32>
    %371 = arith.addf %370, %369 : vector<2x32xf32>
    %372 = arith.divf %370, %371 : vector<2x32xf32>
    %373 = arith.mulf %364, %315 : vector<2x32xf32>
    %374 = arith.mulf %358, %366 : vector<2x32xf32>
    %375 = arith.addf %373, %374 : vector<2x32xf32>
    %376 = math.tanh %375 : vector<2x32xf32>
    %377 = arith.mulf %372, %376 : vector<2x32xf32>
    %c10_107 = arith.constant 10 : index
    %c0_108 = arith.constant 0 : index
    %378 = vector.load %arg17[%c10_107, %c0_108] : memref<16x32xf32, #tpu.memory_space<vmem>>, vector<2x32xf32>
    tpu.vector_store %arg17[%c10_107, %c0_108], %352 {strides = array<i32>} : memref<16x32xf32, #tpu.memory_space<vmem>>, vector<2x32xf32>,
    %c4_109 = arith.constant 4 : index
    %c0_110 = arith.constant 0 : index
    %379 = vector.load %arg18[%c4_109, %c0_110] : memref<16x32xf32, #tpu.memory_space<vmem>>, vector<2x32xf32>
    tpu.vector_store %arg18[%c4_109, %c0_110], %377 {strides = array<i32>} : memref<16x32xf32, #tpu.memory_space<vmem>>, vector<2x32xf32>,
    %c12_111 = arith.constant 12 : index
    %c0_112 = arith.constant 0 : index
    %380 = vector.load %arg19[%c12_111, %c0_112] : memref<16x128xf32, #tpu.memory_space<vmem>>, vector<2x128xf32>
    %381 = arith.truncf %352 : vector<2x32xf32> to vector<2x32xbf16>
    %cst_113 = arith.constant dense<0.000000e+00> : vector<2x128xf32>
    %382 = tpu.matmul %381, %14, %cst_113 {dimension_numbers = #tpu.dot_dimension_numbers<[1], [0], [0], [1], [0, 0, 1, 1], [], []>} : vector<2x32xbf16>, vector<32x128xbf16>, vector<2x128xf32> -> vector<2x128xf32>
    %383 = arith.addf %380, %382 : vector<2x128xf32>
    %c2_114 = arith.constant 2 : index
    %c0_115 = arith.constant 0 : index
    %384 = vector.load %arg20[%c2_114, %c0_115] : memref<16x128xf32, #tpu.memory_space<vmem>>, vector<2x128xf32>
    %385 = arith.truncf %377 : vector<2x32xf32> to vector<2x32xbf16>
    %cst_116 = arith.constant dense<0.000000e+00> : vector<2x128xf32>
    %386 = tpu.matmul %385, %15, %cst_116 {dimension_numbers = #tpu.dot_dimension_numbers<[1], [0], [0], [1], [0, 0, 1, 1], [], []>} : vector<2x32xbf16>, vector<32x128xbf16>, vector<2x128xf32> -> vector<2x128xf32>
    %387 = arith.addf %384, %386 : vector<2x128xf32>
    %388 = vector.extract_strided_slice %383 {offsets = [0, 0], sizes = [2, 32], strides = [1, 1]} : vector<2x128xf32> to vector<2x32xf32>
    %389 = arith.negf %388 : vector<2x32xf32>
    %390 = math.exp %389 : vector<2x32xf32>
    %cst_117 = arith.constant 1.000000e+00 : f32
    %391 = vector.broadcast %cst_117 : f32 to vector<2x32xf32>
    %392 = arith.addf %391, %390 : vector<2x32xf32>
    %393 = arith.divf %391, %392 : vector<2x32xf32>
    %394 = vector.extract_strided_slice %383 {offsets = [0, 32], sizes = [2, 32], strides = [1, 1]} : vector<2x128xf32> to vector<2x32xf32>
    %395 = arith.negf %394 : vector<2x32xf32>
    %396 = math.exp %395 : vector<2x32xf32>
    %cst_118 = arith.constant 1.000000e+00 : f32
    %397 = vector.broadcast %cst_118 : f32 to vector<2x32xf32>
    %398 = arith.addf %397, %396 : vector<2x32xf32>
    %399 = arith.divf %397, %398 : vector<2x32xf32>
    %400 = vector.extract_strided_slice %383 {offsets = [0, 64], sizes = [2, 32], strides = [1, 1]} : vector<2x128xf32> to vector<2x32xf32>
    %401 = math.tanh %400 : vector<2x32xf32>
    %402 = vector.extract_strided_slice %383 {offsets = [0, 96], sizes = [2, 32], strides = [1, 1]} : vector<2x128xf32> to vector<2x32xf32>
    %403 = arith.negf %402 : vector<2x32xf32>
    %404 = math.exp %403 : vector<2x32xf32>
    %cst_119 = arith.constant 1.000000e+00 : f32
    %405 = vector.broadcast %cst_119 : f32 to vector<2x32xf32>
    %406 = arith.addf %405, %404 : vector<2x32xf32>
    %407 = arith.divf %405, %406 : vector<2x32xf32>
    %408 = arith.mulf %399, %350 : vector<2x32xf32>
    %409 = arith.mulf %393, %401 : vector<2x32xf32>
    %410 = arith.addf %408, %409 : vector<2x32xf32>
    %411 = math.tanh %410 : vector<2x32xf32>
    %412 = arith.mulf %407, %411 : vector<2x32xf32>
    %413 = vector.extract_strided_slice %387 {offsets = [0, 0], sizes = [2, 32], strides = [1, 1]} : vector<2x128xf32> to vector<2x32xf32>
    %414 = arith.negf %413 : vector<2x32xf32>
    %415 = math.exp %414 : vector<2x32xf32>
    %cst_120 = arith.constant 1.000000e+00 : f32
    %416 = vector.broadcast %cst_120 : f32 to vector<2x32xf32>
    %417 = arith.addf %416, %415 : vector<2x32xf32>
    %418 = arith.divf %416, %417 : vector<2x32xf32>
    %419 = vector.extract_strided_slice %387 {offsets = [0, 32], sizes = [2, 32], strides = [1, 1]} : vector<2x128xf32> to vector<2x32xf32>
    %420 = arith.negf %419 : vector<2x32xf32>
    %421 = math.exp %420 : vector<2x32xf32>
    %cst_121 = arith.constant 1.000000e+00 : f32
    %422 = vector.broadcast %cst_121 : f32 to vector<2x32xf32>
    %423 = arith.addf %422, %421 : vector<2x32xf32>
    %424 = arith.divf %422, %423 : vector<2x32xf32>
    %425 = vector.extract_strided_slice %387 {offsets = [0, 64], sizes = [2, 32], strides = [1, 1]} : vector<2x128xf32> to vector<2x32xf32>
    %426 = math.tanh %425 : vector<2x32xf32>
    %427 = vector.extract_strided_slice %387 {offsets = [0, 96], sizes = [2, 32], strides = [1, 1]} : vector<2x128xf32> to vector<2x32xf32>
    %428 = arith.negf %427 : vector<2x32xf32>
    %429 = math.exp %428 : vector<2x32xf32>
    %cst_122 = arith.constant 1.000000e+00 : f32
    %430 = vector.broadcast %cst_122 : f32 to vector<2x32xf32>
    %431 = arith.addf %430, %429 : vector<2x32xf32>
    %432 = arith.divf %430, %431 : vector<2x32xf32>
    %433 = arith.mulf %424, %375 : vector<2x32xf32>
    %434 = arith.mulf %418, %426 : vector<2x32xf32>
    %435 = arith.addf %433, %434 : vector<2x32xf32>
    %436 = math.tanh %435 : vector<2x32xf32>
    %437 = arith.mulf %432, %436 : vector<2x32xf32>
    %c12_123 = arith.constant 12 : index
    %c0_124 = arith.constant 0 : index
    %438 = vector.load %arg17[%c12_123, %c0_124] : memref<16x32xf32, #tpu.memory_space<vmem>>, vector<2x32xf32>
    tpu.vector_store %arg17[%c12_123, %c0_124], %412 {strides = array<i32>} : memref<16x32xf32, #tpu.memory_space<vmem>>, vector<2x32xf32>,
    %c2_125 = arith.constant 2 : index
    %c0_126 = arith.constant 0 : index
    %439 = vector.load %arg18[%c2_125, %c0_126] : memref<16x32xf32, #tpu.memory_space<vmem>>, vector<2x32xf32>
    tpu.vector_store %arg18[%c2_125, %c0_126], %437 {strides = array<i32>} : memref<16x32xf32, #tpu.memory_space<vmem>>, vector<2x32xf32>,
    %c14_127 = arith.constant 14 : index
    %c0_128 = arith.constant 0 : index
    %440 = vector.load %arg19[%c14_127, %c0_128] : memref<16x128xf32, #tpu.memory_space<vmem>>, vector<2x128xf32>
    %441 = arith.truncf %412 : vector<2x32xf32> to vector<2x32xbf16>
    %cst_129 = arith.constant dense<0.000000e+00> : vector<2x128xf32>
    %442 = tpu.matmul %441, %14, %cst_129 {dimension_numbers = #tpu.dot_dimension_numbers<[1], [0], [0], [1], [0, 0, 1, 1], [], []>} : vector<2x32xbf16>, vector<32x128xbf16>, vector<2x128xf32> -> vector<2x128xf32>
    %443 = arith.addf %440, %442 : vector<2x128xf32>
    %c0_130 = arith.constant 0 : index
    %c0_131 = arith.constant 0 : index
    %444 = vector.load %arg20[%c0_130, %c0_131] : memref<16x128xf32, #tpu.memory_space<vmem>>, vector<2x128xf32>
    %445 = arith.truncf %437 : vector<2x32xf32> to vector<2x32xbf16>
    %cst_132 = arith.constant dense<0.000000e+00> : vector<2x128xf32>
    %446 = tpu.matmul %445, %15, %cst_132 {dimension_numbers = #tpu.dot_dimension_numbers<[1], [0], [0], [1], [0, 0, 1, 1], [], []>} : vector<2x32xbf16>, vector<32x128xbf16>, vector<2x128xf32> -> vector<2x128xf32>
    %447 = arith.addf %444, %446 : vector<2x128xf32>
    %448 = vector.extract_strided_slice %443 {offsets = [0, 0], sizes = [2, 32], strides = [1, 1]} : vector<2x128xf32> to vector<2x32xf32>
    %449 = arith.negf %448 : vector<2x32xf32>
    %450 = math.exp %449 : vector<2x32xf32>
    %cst_133 = arith.constant 1.000000e+00 : f32
    %451 = vector.broadcast %cst_133 : f32 to vector<2x32xf32>
    %452 = arith.addf %451, %450 : vector<2x32xf32>
    %453 = arith.divf %451, %452 : vector<2x32xf32>
    %454 = vector.extract_strided_slice %443 {offsets = [0, 32], sizes = [2, 32], strides = [1, 1]} : vector<2x128xf32> to vector<2x32xf32>
    %455 = arith.negf %454 : vector<2x32xf32>
    %456 = math.exp %455 : vector<2x32xf32>
    %cst_134 = arith.constant 1.000000e+00 : f32
    %457 = vector.broadcast %cst_134 : f32 to vector<2x32xf32>
    %458 = arith.addf %457, %456 : vector<2x32xf32>
    %459 = arith.divf %457, %458 : vector<2x32xf32>
    %460 = vector.extract_strided_slice %443 {offsets = [0, 64], sizes = [2, 32], strides = [1, 1]} : vector<2x128xf32> to vector<2x32xf32>
    %461 = math.tanh %460 : vector<2x32xf32>
    %462 = vector.extract_strided_slice %443 {offsets = [0, 96], sizes = [2, 32], strides = [1, 1]} : vector<2x128xf32> to vector<2x32xf32>
    %463 = arith.negf %462 : vector<2x32xf32>
    %464 = math.exp %463 : vector<2x32xf32>
    %cst_135 = arith.constant 1.000000e+00 : f32
    %465 = vector.broadcast %cst_135 : f32 to vector<2x32xf32>
    %466 = arith.addf %465, %464 : vector<2x32xf32>
    %467 = arith.divf %465, %466 : vector<2x32xf32>
    %468 = arith.mulf %459, %410 : vector<2x32xf32>
    %469 = arith.mulf %453, %461 : vector<2x32xf32>
    %470 = arith.addf %468, %469 : vector<2x32xf32>
    %471 = math.tanh %470 : vector<2x32xf32>
    %472 = arith.mulf %467, %471 : vector<2x32xf32>
    %473 = vector.extract_strided_slice %447 {offsets = [0, 0], sizes = [2, 32], strides = [1, 1]} : vector<2x128xf32> to vector<2x32xf32>
    %474 = arith.negf %473 : vector<2x32xf32>
    %475 = math.exp %474 : vector<2x32xf32>
    %cst_136 = arith.constant 1.000000e+00 : f32
    %476 = vector.broadcast %cst_136 : f32 to vector<2x32xf32>
    %477 = arith.addf %476, %475 : vector<2x32xf32>
    %478 = arith.divf %476, %477 : vector<2x32xf32>
    %479 = vector.extract_strided_slice %447 {offsets = [0, 32], sizes = [2, 32], strides = [1, 1]} : vector<2x128xf32> to vector<2x32xf32>
    %480 = arith.negf %479 : vector<2x32xf32>
    %481 = math.exp %480 : vector<2x32xf32>
    %cst_137 = arith.constant 1.000000e+00 : f32
    %482 = vector.broadcast %cst_137 : f32 to vector<2x32xf32>
    %483 = arith.addf %482, %481 : vector<2x32xf32>
    %484 = arith.divf %482, %483 : vector<2x32xf32>
    %485 = vector.extract_strided_slice %447 {offsets = [0, 64], sizes = [2, 32], strides = [1, 1]} : vector<2x128xf32> to vector<2x32xf32>
    %486 = math.tanh %485 : vector<2x32xf32>
    %487 = vector.extract_strided_slice %447 {offsets = [0, 96], sizes = [2, 32], strides = [1, 1]} : vector<2x128xf32> to vector<2x32xf32>
    %488 = arith.negf %487 : vector<2x32xf32>
    %489 = math.exp %488 : vector<2x32xf32>
    %cst_138 = arith.constant 1.000000e+00 : f32
    %490 = vector.broadcast %cst_138 : f32 to vector<2x32xf32>
    %491 = arith.addf %490, %489 : vector<2x32xf32>
    %492 = arith.divf %490, %491 : vector<2x32xf32>
    %493 = arith.mulf %484, %435 : vector<2x32xf32>
    %494 = arith.mulf %478, %486 : vector<2x32xf32>
    %495 = arith.addf %493, %494 : vector<2x32xf32>
    %496 = math.tanh %495 : vector<2x32xf32>
    %497 = arith.mulf %492, %496 : vector<2x32xf32>
    %c14_139 = arith.constant 14 : index
    %c0_140 = arith.constant 0 : index
    %498 = vector.load %arg17[%c14_139, %c0_140] : memref<16x32xf32, #tpu.memory_space<vmem>>, vector<2x32xf32>
    tpu.vector_store %arg17[%c14_139, %c0_140], %472 {strides = array<i32>} : memref<16x32xf32, #tpu.memory_space<vmem>>, vector<2x32xf32>,
    %c0_141 = arith.constant 0 : index
    %c0_142 = arith.constant 0 : index
    %499 = vector.load %arg18[%c0_141, %c0_142] : memref<16x32xf32, #tpu.memory_space<vmem>>, vector<2x32xf32>
    tpu.vector_store %arg18[%c0_141, %c0_142], %497 {strides = array<i32>} : memref<16x32xf32, #tpu.memory_space<vmem>>, vector<2x32xf32>,
    %c0_143 = arith.constant 0 : index
    %c0_144 = arith.constant 0 : index
    %500 = vector.load %arg17[%c0_143, %c0_144] : memref<16x32xf32, #tpu.memory_space<vmem>>, vector<16x32xf32>
    %501 = arith.truncf %500 : vector<16x32xf32> to vector<16x32xbf16>
    %c0_145 = arith.constant 0 : index
    %c0_146 = arith.constant 0 : index
    %502 = vector.load %arg18[%c0_145, %c0_146] : memref<16x32xf32, #tpu.memory_space<vmem>>, vector<16x32xf32>
    %503 = arith.truncf %502 : vector<16x32xf32> to vector<16x32xbf16>
    %c0_147 = arith.constant 0 : index
    %c0_148 = arith.constant 0 : index
    %504 = vector.load %arg8[%c0_147, %c0_148] : memref<64x128xbf16, #tpu.memory_space<vmem>>, vector<32x128xbf16>
    %cst_149 = arith.constant dense<0.000000e+00> : vector<16x128xf32>
    %505 = tpu.matmul %501, %504, %cst_149 {dimension_numbers = #tpu.dot_dimension_numbers<[1], [0], [0], [1], [0, 0, 1, 1], [], []>} : vector<16x32xbf16>, vector<32x128xbf16>, vector<16x128xf32> -> vector<16x128xf32>
    %c32 = arith.constant 32 : index
    %c0_150 = arith.constant 0 : index
    %506 = vector.load %arg8[%c32, %c0_150] : memref<64x128xbf16, #tpu.memory_space<vmem>>, vector<32x128xbf16>
    %cst_151 = arith.constant dense<0.000000e+00> : vector<16x128xf32>
    %507 = tpu.matmul %503, %506, %cst_151 {dimension_numbers = #tpu.dot_dimension_numbers<[1], [0], [0], [1], [0, 0, 1, 1], [], []>} : vector<16x32xbf16>, vector<32x128xbf16>, vector<16x128xf32> -> vector<16x128xf32>
    %508 = arith.addf %505, %507 : vector<16x128xf32>
    %c0_152 = arith.constant 0 : index
    %c0_153 = arith.constant 0 : index
    %509 = vector.load %arg12[%c0_152, %c0_153] : memref<1x128xf32, #tpu.memory_space<vmem>>, vector<1x128xf32>
    %510 = vector.broadcast %509 : vector<1x128xf32> to vector<16x128xf32>
    %511 = arith.addf %508, %510 : vector<16x128xf32>
    %c0_154 = arith.constant 0 : index
    %c0_155 = arith.constant 0 : index
    %512 = vector.load %arg19[%c0_154, %c0_155] : memref<16x128xf32, #tpu.memory_space<vmem>>, vector<16x128xf32>
    tpu.vector_store %arg19[%c0_154, %c0_155], %511 {strides = array<i32>} : memref<16x128xf32, #tpu.memory_space<vmem>>, vector<16x128xf32>,
    %c0_156 = arith.constant 0 : index
    %c0_157 = arith.constant 0 : index
    %513 = vector.load %arg9[%c0_156, %c0_157] : memref<64x128xbf16, #tpu.memory_space<vmem>>, vector<32x128xbf16>
    %cst_158 = arith.constant dense<0.000000e+00> : vector<16x128xf32>
    %514 = tpu.matmul %501, %513, %cst_158 {dimension_numbers = #tpu.dot_dimension_numbers<[1], [0], [0], [1], [0, 0, 1, 1], [], []>} : vector<16x32xbf16>, vector<32x128xbf16>, vector<16x128xf32> -> vector<16x128xf32>
    %c32_159 = arith.constant 32 : index
    %c0_160 = arith.constant 0 : index
    %515 = vector.load %arg9[%c32_159, %c0_160] : memref<64x128xbf16, #tpu.memory_space<vmem>>, vector<32x128xbf16>
    %cst_161 = arith.constant dense<0.000000e+00> : vector<16x128xf32>
    %516 = tpu.matmul %503, %515, %cst_161 {dimension_numbers = #tpu.dot_dimension_numbers<[1], [0], [0], [1], [0, 0, 1, 1], [], []>} : vector<16x32xbf16>, vector<32x128xbf16>, vector<16x128xf32> -> vector<16x128xf32>
    %517 = arith.addf %514, %516 : vector<16x128xf32>
    %c0_162 = arith.constant 0 : index
    %c0_163 = arith.constant 0 : index
    %518 = vector.load %arg13[%c0_162, %c0_163] : memref<1x128xf32, #tpu.memory_space<vmem>>, vector<1x128xf32>
    %519 = vector.broadcast %518 : vector<1x128xf32> to vector<16x128xf32>
    %520 = arith.addf %517, %519 : vector<16x128xf32>
    %c0_164 = arith.constant 0 : index
    %c0_165 = arith.constant 0 : index
    %521 = vector.load %arg20[%c0_164, %c0_165] : memref<16x128xf32, #tpu.memory_space<vmem>>, vector<16x128xf32>
    tpu.vector_store %arg20[%c0_164, %c0_165], %520 {strides = array<i32>} : memref<16x128xf32, #tpu.memory_space<vmem>>, vector<16x128xf32>,
    %c0_166 = arith.constant 0 : index
    %c0_167 = arith.constant 0 : index
    %522 = vector.load %arg10[%c0_166, %c0_167] : memref<32x128xbf16, #tpu.memory_space<vmem>>, vector<32x128xbf16>
    %c0_168 = arith.constant 0 : index
    %c0_169 = arith.constant 0 : index
    %523 = vector.load %arg11[%c0_168, %c0_169] : memref<32x128xbf16, #tpu.memory_space<vmem>>, vector<32x128xbf16>
    %cst_170 = arith.constant 0.000000e+00 : f32
    %524 = vector.broadcast %cst_170 : f32 to vector<2x32xf32>
    %cst_171 = arith.constant 0.000000e+00 : f32
    %525 = vector.broadcast %cst_171 : f32 to vector<2x32xf32>
    %cst_172 = arith.constant 0.000000e+00 : f32
    %526 = vector.broadcast %cst_172 : f32 to vector<2x32xf32>
    %cst_173 = arith.constant 0.000000e+00 : f32
    %527 = vector.broadcast %cst_173 : f32 to vector<2x32xf32>
    %c0_174 = arith.constant 0 : index
    %c0_175 = arith.constant 0 : index
    %528 = vector.load %arg19[%c0_174, %c0_175] : memref<16x128xf32, #tpu.memory_space<vmem>>, vector<2x128xf32>
    %529 = arith.truncf %524 : vector<2x32xf32> to vector<2x32xbf16>
    %cst_176 = arith.constant dense<0.000000e+00> : vector<2x128xf32>
    %530 = tpu.matmul %529, %522, %cst_176 {dimension_numbers = #tpu.dot_dimension_numbers<[1], [0], [0], [1], [0, 0, 1, 1], [], []>} : vector<2x32xbf16>, vector<32x128xbf16>, vector<2x128xf32> -> vector<2x128xf32>
    %531 = arith.addf %528, %530 : vector<2x128xf32>
    %c14_177 = arith.constant 14 : index
    %c0_178 = arith.constant 0 : index
    %532 = vector.load %arg20[%c14_177, %c0_178] : memref<16x128xf32, #tpu.memory_space<vmem>>, vector<2x128xf32>
    %533 = arith.truncf %526 : vector<2x32xf32> to vector<2x32xbf16>
    %cst_179 = arith.constant dense<0.000000e+00> : vector<2x128xf32>
    %534 = tpu.matmul %533, %523, %cst_179 {dimension_numbers = #tpu.dot_dimension_numbers<[1], [0], [0], [1], [0, 0, 1, 1], [], []>} : vector<2x32xbf16>, vector<32x128xbf16>, vector<2x128xf32> -> vector<2x128xf32>
    %535 = arith.addf %532, %534 : vector<2x128xf32>
    %536 = vector.extract_strided_slice %531 {offsets = [0, 0], sizes = [2, 32], strides = [1, 1]} : vector<2x128xf32> to vector<2x32xf32>
    %537 = arith.negf %536 : vector<2x32xf32>
    %538 = math.exp %537 : vector<2x32xf32>
    %cst_180 = arith.constant 1.000000e+00 : f32
    %539 = vector.broadcast %cst_180 : f32 to vector<2x32xf32>
    %540 = arith.addf %539, %538 : vector<2x32xf32>
    %541 = arith.divf %539, %540 : vector<2x32xf32>
    %542 = vector.extract_strided_slice %531 {offsets = [0, 32], sizes = [2, 32], strides = [1, 1]} : vector<2x128xf32> to vector<2x32xf32>
    %543 = arith.negf %542 : vector<2x32xf32>
    %544 = math.exp %543 : vector<2x32xf32>
    %cst_181 = arith.constant 1.000000e+00 : f32
    %545 = vector.broadcast %cst_181 : f32 to vector<2x32xf32>
    %546 = arith.addf %545, %544 : vector<2x32xf32>
    %547 = arith.divf %545, %546 : vector<2x32xf32>
    %548 = vector.extract_strided_slice %531 {offsets = [0, 64], sizes = [2, 32], strides = [1, 1]} : vector<2x128xf32> to vector<2x32xf32>
    %549 = math.tanh %548 : vector<2x32xf32>
    %550 = vector.extract_strided_slice %531 {offsets = [0, 96], sizes = [2, 32], strides = [1, 1]} : vector<2x128xf32> to vector<2x32xf32>
    %551 = arith.negf %550 : vector<2x32xf32>
    %552 = math.exp %551 : vector<2x32xf32>
    %cst_182 = arith.constant 1.000000e+00 : f32
    %553 = vector.broadcast %cst_182 : f32 to vector<2x32xf32>
    %554 = arith.addf %553, %552 : vector<2x32xf32>
    %555 = arith.divf %553, %554 : vector<2x32xf32>
    %556 = arith.mulf %547, %525 : vector<2x32xf32>
    %557 = arith.mulf %541, %549 : vector<2x32xf32>
    %558 = arith.addf %556, %557 : vector<2x32xf32>
    %559 = math.tanh %558 : vector<2x32xf32>
    %560 = arith.mulf %555, %559 : vector<2x32xf32>
    %561 = vector.extract_strided_slice %535 {offsets = [0, 0], sizes = [2, 32], strides = [1, 1]} : vector<2x128xf32> to vector<2x32xf32>
    %562 = arith.negf %561 : vector<2x32xf32>
    %563 = math.exp %562 : vector<2x32xf32>
    %cst_183 = arith.constant 1.000000e+00 : f32
    %564 = vector.broadcast %cst_183 : f32 to vector<2x32xf32>
    %565 = arith.addf %564, %563 : vector<2x32xf32>
    %566 = arith.divf %564, %565 : vector<2x32xf32>
    %567 = vector.extract_strided_slice %535 {offsets = [0, 32], sizes = [2, 32], strides = [1, 1]} : vector<2x128xf32> to vector<2x32xf32>
    %568 = arith.negf %567 : vector<2x32xf32>
    %569 = math.exp %568 : vector<2x32xf32>
    %cst_184 = arith.constant 1.000000e+00 : f32
    %570 = vector.broadcast %cst_184 : f32 to vector<2x32xf32>
    %571 = arith.addf %570, %569 : vector<2x32xf32>
    %572 = arith.divf %570, %571 : vector<2x32xf32>
    %573 = vector.extract_strided_slice %535 {offsets = [0, 64], sizes = [2, 32], strides = [1, 1]} : vector<2x128xf32> to vector<2x32xf32>
    %574 = math.tanh %573 : vector<2x32xf32>
    %575 = vector.extract_strided_slice %535 {offsets = [0, 96], sizes = [2, 32], strides = [1, 1]} : vector<2x128xf32> to vector<2x32xf32>
    %576 = arith.negf %575 : vector<2x32xf32>
    %577 = math.exp %576 : vector<2x32xf32>
    %cst_185 = arith.constant 1.000000e+00 : f32
    %578 = vector.broadcast %cst_185 : f32 to vector<2x32xf32>
    %579 = arith.addf %578, %577 : vector<2x32xf32>
    %580 = arith.divf %578, %579 : vector<2x32xf32>
    %581 = arith.mulf %572, %527 : vector<2x32xf32>
    %582 = arith.mulf %566, %574 : vector<2x32xf32>
    %583 = arith.addf %581, %582 : vector<2x32xf32>
    %584 = math.tanh %583 : vector<2x32xf32>
    %585 = arith.mulf %580, %584 : vector<2x32xf32>
    %c2_186 = arith.constant 2 : index
    %c0_187 = arith.constant 0 : index
    %586 = vector.load %arg19[%c2_186, %c0_187] : memref<16x128xf32, #tpu.memory_space<vmem>>, vector<2x128xf32>
    %587 = arith.truncf %560 : vector<2x32xf32> to vector<2x32xbf16>
    %cst_188 = arith.constant dense<0.000000e+00> : vector<2x128xf32>
    %588 = tpu.matmul %587, %522, %cst_188 {dimension_numbers = #tpu.dot_dimension_numbers<[1], [0], [0], [1], [0, 0, 1, 1], [], []>} : vector<2x32xbf16>, vector<32x128xbf16>, vector<2x128xf32> -> vector<2x128xf32>
    %589 = arith.addf %586, %588 : vector<2x128xf32>
    %590 = vector.extract_strided_slice %589 {offsets = [0, 0], sizes = [2, 32], strides = [1, 1]} : vector<2x128xf32> to vector<2x32xf32>
    %591 = arith.negf %590 : vector<2x32xf32>
    %592 = math.exp %591 : vector<2x32xf32>
    %cst_189 = arith.constant 1.000000e+00 : f32
    %593 = vector.broadcast %cst_189 : f32 to vector<2x32xf32>
    %594 = arith.addf %593, %592 : vector<2x32xf32>
    %595 = arith.divf %593, %594 : vector<2x32xf32>
    %596 = vector.extract_strided_slice %589 {offsets = [0, 32], sizes = [2, 32], strides = [1, 1]} : vector<2x128xf32> to vector<2x32xf32>
    %597 = arith.negf %596 : vector<2x32xf32>
    %598 = math.exp %597 : vector<2x32xf32>
    %cst_190 = arith.constant 1.000000e+00 : f32
    %599 = vector.broadcast %cst_190 : f32 to vector<2x32xf32>
    %600 = arith.addf %599, %598 : vector<2x32xf32>
    %601 = arith.divf %599, %600 : vector<2x32xf32>
    %602 = vector.extract_strided_slice %589 {offsets = [0, 64], sizes = [2, 32], strides = [1, 1]} : vector<2x128xf32> to vector<2x32xf32>
    %603 = math.tanh %602 : vector<2x32xf32>
    %604 = vector.extract_strided_slice %589 {offsets = [0, 96], sizes = [2, 32], strides = [1, 1]} : vector<2x128xf32> to vector<2x32xf32>
    %605 = arith.negf %604 : vector<2x32xf32>
    %606 = math.exp %605 : vector<2x32xf32>
    %cst_191 = arith.constant 1.000000e+00 : f32
    %607 = vector.broadcast %cst_191 : f32 to vector<2x32xf32>
    %608 = arith.addf %607, %606 : vector<2x32xf32>
    %609 = arith.divf %607, %608 : vector<2x32xf32>
    %610 = arith.mulf %601, %558 : vector<2x32xf32>
    %611 = arith.mulf %595, %603 : vector<2x32xf32>
    %612 = arith.addf %610, %611 : vector<2x32xf32>
    %613 = math.tanh %612 : vector<2x32xf32>
    %614 = arith.mulf %609, %613 : vector<2x32xf32>
    %c4_192 = arith.constant 4 : index
    %c0_193 = arith.constant 0 : index
    %615 = vector.load %arg19[%c4_192, %c0_193] : memref<16x128xf32, #tpu.memory_space<vmem>>, vector<2x128xf32>
    %616 = arith.truncf %614 : vector<2x32xf32> to vector<2x32xbf16>
    %cst_194 = arith.constant dense<0.000000e+00> : vector<2x128xf32>
    %617 = tpu.matmul %616, %522, %cst_194 {dimension_numbers = #tpu.dot_dimension_numbers<[1], [0], [0], [1], [0, 0, 1, 1], [], []>} : vector<2x32xbf16>, vector<32x128xbf16>, vector<2x128xf32> -> vector<2x128xf32>
    %618 = arith.addf %615, %617 : vector<2x128xf32>
    %619 = vector.extract_strided_slice %618 {offsets = [0, 0], sizes = [2, 32], strides = [1, 1]} : vector<2x128xf32> to vector<2x32xf32>
    %620 = arith.negf %619 : vector<2x32xf32>
    %621 = math.exp %620 : vector<2x32xf32>
    %cst_195 = arith.constant 1.000000e+00 : f32
    %622 = vector.broadcast %cst_195 : f32 to vector<2x32xf32>
    %623 = arith.addf %622, %621 : vector<2x32xf32>
    %624 = arith.divf %622, %623 : vector<2x32xf32>
    %625 = vector.extract_strided_slice %618 {offsets = [0, 32], sizes = [2, 32], strides = [1, 1]} : vector<2x128xf32> to vector<2x32xf32>
    %626 = arith.negf %625 : vector<2x32xf32>
    %627 = math.exp %626 : vector<2x32xf32>
    %cst_196 = arith.constant 1.000000e+00 : f32
    %628 = vector.broadcast %cst_196 : f32 to vector<2x32xf32>
    %629 = arith.addf %628, %627 : vector<2x32xf32>
    %630 = arith.divf %628, %629 : vector<2x32xf32>
    %631 = vector.extract_strided_slice %618 {offsets = [0, 64], sizes = [2, 32], strides = [1, 1]} : vector<2x128xf32> to vector<2x32xf32>
    %632 = math.tanh %631 : vector<2x32xf32>
    %633 = vector.extract_strided_slice %618 {offsets = [0, 96], sizes = [2, 32], strides = [1, 1]} : vector<2x128xf32> to vector<2x32xf32>
    %634 = arith.negf %633 : vector<2x32xf32>
    %635 = math.exp %634 : vector<2x32xf32>
    %cst_197 = arith.constant 1.000000e+00 : f32
    %636 = vector.broadcast %cst_197 : f32 to vector<2x32xf32>
    %637 = arith.addf %636, %635 : vector<2x32xf32>
    %638 = arith.divf %636, %637 : vector<2x32xf32>
    %639 = arith.mulf %630, %612 : vector<2x32xf32>
    %640 = arith.mulf %624, %632 : vector<2x32xf32>
    %641 = arith.addf %639, %640 : vector<2x32xf32>
    %642 = math.tanh %641 : vector<2x32xf32>
    %643 = arith.mulf %638, %642 : vector<2x32xf32>
    %c6_198 = arith.constant 6 : index
    %c0_199 = arith.constant 0 : index
    %644 = vector.load %arg19[%c6_198, %c0_199] : memref<16x128xf32, #tpu.memory_space<vmem>>, vector<2x128xf32>
    %645 = arith.truncf %643 : vector<2x32xf32> to vector<2x32xbf16>
    %cst_200 = arith.constant dense<0.000000e+00> : vector<2x128xf32>
    %646 = tpu.matmul %645, %522, %cst_200 {dimension_numbers = #tpu.dot_dimension_numbers<[1], [0], [0], [1], [0, 0, 1, 1], [], []>} : vector<2x32xbf16>, vector<32x128xbf16>, vector<2x128xf32> -> vector<2x128xf32>
    %647 = arith.addf %644, %646 : vector<2x128xf32>
    %648 = vector.extract_strided_slice %647 {offsets = [0, 0], sizes = [2, 32], strides = [1, 1]} : vector<2x128xf32> to vector<2x32xf32>
    %649 = arith.negf %648 : vector<2x32xf32>
    %650 = math.exp %649 : vector<2x32xf32>
    %cst_201 = arith.constant 1.000000e+00 : f32
    %651 = vector.broadcast %cst_201 : f32 to vector<2x32xf32>
    %652 = arith.addf %651, %650 : vector<2x32xf32>
    %653 = arith.divf %651, %652 : vector<2x32xf32>
    %654 = vector.extract_strided_slice %647 {offsets = [0, 32], sizes = [2, 32], strides = [1, 1]} : vector<2x128xf32> to vector<2x32xf32>
    %655 = arith.negf %654 : vector<2x32xf32>
    %656 = math.exp %655 : vector<2x32xf32>
    %cst_202 = arith.constant 1.000000e+00 : f32
    %657 = vector.broadcast %cst_202 : f32 to vector<2x32xf32>
    %658 = arith.addf %657, %656 : vector<2x32xf32>
    %659 = arith.divf %657, %658 : vector<2x32xf32>
    %660 = vector.extract_strided_slice %647 {offsets = [0, 64], sizes = [2, 32], strides = [1, 1]} : vector<2x128xf32> to vector<2x32xf32>
    %661 = math.tanh %660 : vector<2x32xf32>
    %662 = vector.extract_strided_slice %647 {offsets = [0, 96], sizes = [2, 32], strides = [1, 1]} : vector<2x128xf32> to vector<2x32xf32>
    %663 = arith.negf %662 : vector<2x32xf32>
    %664 = math.exp %663 : vector<2x32xf32>
    %cst_203 = arith.constant 1.000000e+00 : f32
    %665 = vector.broadcast %cst_203 : f32 to vector<2x32xf32>
    %666 = arith.addf %665, %664 : vector<2x32xf32>
    %667 = arith.divf %665, %666 : vector<2x32xf32>
    %668 = arith.mulf %659, %641 : vector<2x32xf32>
    %669 = arith.mulf %653, %661 : vector<2x32xf32>
    %670 = arith.addf %668, %669 : vector<2x32xf32>
    %671 = math.tanh %670 : vector<2x32xf32>
    %672 = arith.mulf %667, %671 : vector<2x32xf32>
    %c8_204 = arith.constant 8 : index
    %c0_205 = arith.constant 0 : index
    %673 = vector.load %arg19[%c8_204, %c0_205] : memref<16x128xf32, #tpu.memory_space<vmem>>, vector<2x128xf32>
    %674 = arith.truncf %672 : vector<2x32xf32> to vector<2x32xbf16>
    %cst_206 = arith.constant dense<0.000000e+00> : vector<2x128xf32>
    %675 = tpu.matmul %674, %522, %cst_206 {dimension_numbers = #tpu.dot_dimension_numbers<[1], [0], [0], [1], [0, 0, 1, 1], [], []>} : vector<2x32xbf16>, vector<32x128xbf16>, vector<2x128xf32> -> vector<2x128xf32>
    %676 = arith.addf %673, %675 : vector<2x128xf32>
    %677 = vector.extract_strided_slice %676 {offsets = [0, 0], sizes = [2, 32], strides = [1, 1]} : vector<2x128xf32> to vector<2x32xf32>
    %678 = arith.negf %677 : vector<2x32xf32>
    %679 = math.exp %678 : vector<2x32xf32>
    %cst_207 = arith.constant 1.000000e+00 : f32
    %680 = vector.broadcast %cst_207 : f32 to vector<2x32xf32>
    %681 = arith.addf %680, %679 : vector<2x32xf32>
    %682 = arith.divf %680, %681 : vector<2x32xf32>
    %683 = vector.extract_strided_slice %676 {offsets = [0, 32], sizes = [2, 32], strides = [1, 1]} : vector<2x128xf32> to vector<2x32xf32>
    %684 = arith.negf %683 : vector<2x32xf32>
    %685 = math.exp %684 : vector<2x32xf32>
    %cst_208 = arith.constant 1.000000e+00 : f32
    %686 = vector.broadcast %cst_208 : f32 to vector<2x32xf32>
    %687 = arith.addf %686, %685 : vector<2x32xf32>
    %688 = arith.divf %686, %687 : vector<2x32xf32>
    %689 = vector.extract_strided_slice %676 {offsets = [0, 64], sizes = [2, 32], strides = [1, 1]} : vector<2x128xf32> to vector<2x32xf32>
    %690 = math.tanh %689 : vector<2x32xf32>
    %691 = vector.extract_strided_slice %676 {offsets = [0, 96], sizes = [2, 32], strides = [1, 1]} : vector<2x128xf32> to vector<2x32xf32>
    %692 = arith.negf %691 : vector<2x32xf32>
    %693 = math.exp %692 : vector<2x32xf32>
    %cst_209 = arith.constant 1.000000e+00 : f32
    %694 = vector.broadcast %cst_209 : f32 to vector<2x32xf32>
    %695 = arith.addf %694, %693 : vector<2x32xf32>
    %696 = arith.divf %694, %695 : vector<2x32xf32>
    %697 = arith.mulf %688, %670 : vector<2x32xf32>
    %698 = arith.mulf %682, %690 : vector<2x32xf32>
    %699 = arith.addf %697, %698 : vector<2x32xf32>
    %700 = math.tanh %699 : vector<2x32xf32>
    %701 = arith.mulf %696, %700 : vector<2x32xf32>
    %c10_210 = arith.constant 10 : index
    %c0_211 = arith.constant 0 : index
    %702 = vector.load %arg19[%c10_210, %c0_211] : memref<16x128xf32, #tpu.memory_space<vmem>>, vector<2x128xf32>
    %703 = arith.truncf %701 : vector<2x32xf32> to vector<2x32xbf16>
    %cst_212 = arith.constant dense<0.000000e+00> : vector<2x128xf32>
    %704 = tpu.matmul %703, %522, %cst_212 {dimension_numbers = #tpu.dot_dimension_numbers<[1], [0], [0], [1], [0, 0, 1, 1], [], []>} : vector<2x32xbf16>, vector<32x128xbf16>, vector<2x128xf32> -> vector<2x128xf32>
    %705 = arith.addf %702, %704 : vector<2x128xf32>
    %706 = vector.extract_strided_slice %705 {offsets = [0, 0], sizes = [2, 32], strides = [1, 1]} : vector<2x128xf32> to vector<2x32xf32>
    %707 = arith.negf %706 : vector<2x32xf32>
    %708 = math.exp %707 : vector<2x32xf32>
    %cst_213 = arith.constant 1.000000e+00 : f32
    %709 = vector.broadcast %cst_213 : f32 to vector<2x32xf32>
    %710 = arith.addf %709, %708 : vector<2x32xf32>
    %711 = arith.divf %709, %710 : vector<2x32xf32>
    %712 = vector.extract_strided_slice %705 {offsets = [0, 32], sizes = [2, 32], strides = [1, 1]} : vector<2x128xf32> to vector<2x32xf32>
    %713 = arith.negf %712 : vector<2x32xf32>
    %714 = math.exp %713 : vector<2x32xf32>
    %cst_214 = arith.constant 1.000000e+00 : f32
    %715 = vector.broadcast %cst_214 : f32 to vector<2x32xf32>
    %716 = arith.addf %715, %714 : vector<2x32xf32>
    %717 = arith.divf %715, %716 : vector<2x32xf32>
    %718 = vector.extract_strided_slice %705 {offsets = [0, 64], sizes = [2, 32], strides = [1, 1]} : vector<2x128xf32> to vector<2x32xf32>
    %719 = math.tanh %718 : vector<2x32xf32>
    %720 = vector.extract_strided_slice %705 {offsets = [0, 96], sizes = [2, 32], strides = [1, 1]} : vector<2x128xf32> to vector<2x32xf32>
    %721 = arith.negf %720 : vector<2x32xf32>
    %722 = math.exp %721 : vector<2x32xf32>
    %cst_215 = arith.constant 1.000000e+00 : f32
    %723 = vector.broadcast %cst_215 : f32 to vector<2x32xf32>
    %724 = arith.addf %723, %722 : vector<2x32xf32>
    %725 = arith.divf %723, %724 : vector<2x32xf32>
    %726 = arith.mulf %717, %699 : vector<2x32xf32>
    %727 = arith.mulf %711, %719 : vector<2x32xf32>
    %728 = arith.addf %726, %727 : vector<2x32xf32>
    %729 = math.tanh %728 : vector<2x32xf32>
    %730 = arith.mulf %725, %729 : vector<2x32xf32>
    %c12_216 = arith.constant 12 : index
    %c0_217 = arith.constant 0 : index
    %731 = vector.load %arg19[%c12_216, %c0_217] : memref<16x128xf32, #tpu.memory_space<vmem>>, vector<2x128xf32>
    %732 = arith.truncf %730 : vector<2x32xf32> to vector<2x32xbf16>
    %cst_218 = arith.constant dense<0.000000e+00> : vector<2x128xf32>
    %733 = tpu.matmul %732, %522, %cst_218 {dimension_numbers = #tpu.dot_dimension_numbers<[1], [0], [0], [1], [0, 0, 1, 1], [], []>} : vector<2x32xbf16>, vector<32x128xbf16>, vector<2x128xf32> -> vector<2x128xf32>
    %734 = arith.addf %731, %733 : vector<2x128xf32>
    %735 = vector.extract_strided_slice %734 {offsets = [0, 0], sizes = [2, 32], strides = [1, 1]} : vector<2x128xf32> to vector<2x32xf32>
    %736 = arith.negf %735 : vector<2x32xf32>
    %737 = math.exp %736 : vector<2x32xf32>
    %cst_219 = arith.constant 1.000000e+00 : f32
    %738 = vector.broadcast %cst_219 : f32 to vector<2x32xf32>
    %739 = arith.addf %738, %737 : vector<2x32xf32>
    %740 = arith.divf %738, %739 : vector<2x32xf32>
    %741 = vector.extract_strided_slice %734 {offsets = [0, 32], sizes = [2, 32], strides = [1, 1]} : vector<2x128xf32> to vector<2x32xf32>
    %742 = arith.negf %741 : vector<2x32xf32>
    %743 = math.exp %742 : vector<2x32xf32>
    %cst_220 = arith.constant 1.000000e+00 : f32
    %744 = vector.broadcast %cst_220 : f32 to vector<2x32xf32>
    %745 = arith.addf %744, %743 : vector<2x32xf32>
    %746 = arith.divf %744, %745 : vector<2x32xf32>
    %747 = vector.extract_strided_slice %734 {offsets = [0, 64], sizes = [2, 32], strides = [1, 1]} : vector<2x128xf32> to vector<2x32xf32>
    %748 = math.tanh %747 : vector<2x32xf32>
    %749 = vector.extract_strided_slice %734 {offsets = [0, 96], sizes = [2, 32], strides = [1, 1]} : vector<2x128xf32> to vector<2x32xf32>
    %750 = arith.negf %749 : vector<2x32xf32>
    %751 = math.exp %750 : vector<2x32xf32>
    %cst_221 = arith.constant 1.000000e+00 : f32
    %752 = vector.broadcast %cst_221 : f32 to vector<2x32xf32>
    %753 = arith.addf %752, %751 : vector<2x32xf32>
    %754 = arith.divf %752, %753 : vector<2x32xf32>
    %755 = arith.mulf %746, %728 : vector<2x32xf32>
    %756 = arith.mulf %740, %748 : vector<2x32xf32>
    %757 = arith.addf %755, %756 : vector<2x32xf32>
    %758 = math.tanh %757 : vector<2x32xf32>
    %759 = arith.mulf %754, %758 : vector<2x32xf32>
    %c14_222 = arith.constant 14 : index
    %c0_223 = arith.constant 0 : index
    %760 = vector.load %arg19[%c14_222, %c0_223] : memref<16x128xf32, #tpu.memory_space<vmem>>, vector<2x128xf32>
    %761 = arith.truncf %759 : vector<2x32xf32> to vector<2x32xbf16>
    %cst_224 = arith.constant dense<0.000000e+00> : vector<2x128xf32>
    %762 = tpu.matmul %761, %522, %cst_224 {dimension_numbers = #tpu.dot_dimension_numbers<[1], [0], [0], [1], [0, 0, 1, 1], [], []>} : vector<2x32xbf16>, vector<32x128xbf16>, vector<2x128xf32> -> vector<2x128xf32>
    %763 = arith.addf %760, %762 : vector<2x128xf32>
    %764 = vector.extract_strided_slice %763 {offsets = [0, 0], sizes = [2, 32], strides = [1, 1]} : vector<2x128xf32> to vector<2x32xf32>
    %765 = arith.negf %764 : vector<2x32xf32>
    %766 = math.exp %765 : vector<2x32xf32>
    %cst_225 = arith.constant 1.000000e+00 : f32
    %767 = vector.broadcast %cst_225 : f32 to vector<2x32xf32>
    %768 = arith.addf %767, %766 : vector<2x32xf32>
    %769 = arith.divf %767, %768 : vector<2x32xf32>
    %770 = vector.extract_strided_slice %763 {offsets = [0, 32], sizes = [2, 32], strides = [1, 1]} : vector<2x128xf32> to vector<2x32xf32>
    %771 = arith.negf %770 : vector<2x32xf32>
    %772 = math.exp %771 : vector<2x32xf32>
    %cst_226 = arith.constant 1.000000e+00 : f32
    %773 = vector.broadcast %cst_226 : f32 to vector<2x32xf32>
    %774 = arith.addf %773, %772 : vector<2x32xf32>
    %775 = arith.divf %773, %774 : vector<2x32xf32>
    %776 = vector.extract_strided_slice %763 {offsets = [0, 64], sizes = [2, 32], strides = [1, 1]} : vector<2x128xf32> to vector<2x32xf32>
    %777 = math.tanh %776 : vector<2x32xf32>
    %778 = vector.extract_strided_slice %763 {offsets = [0, 96], sizes = [2, 32], strides = [1, 1]} : vector<2x128xf32> to vector<2x32xf32>
    %779 = arith.negf %778 : vector<2x32xf32>
    %780 = math.exp %779 : vector<2x32xf32>
    %cst_227 = arith.constant 1.000000e+00 : f32
    %781 = vector.broadcast %cst_227 : f32 to vector<2x32xf32>
    %782 = arith.addf %781, %780 : vector<2x32xf32>
    %783 = arith.divf %781, %782 : vector<2x32xf32>
    %784 = arith.mulf %775, %757 : vector<2x32xf32>
    %785 = arith.mulf %769, %777 : vector<2x32xf32>
    %786 = arith.addf %784, %785 : vector<2x32xf32>
    %787 = math.tanh %786 : vector<2x32xf32>
    %788 = arith.mulf %783, %787 : vector<2x32xf32>
    %789 = arith.truncf %788 : vector<2x32xf32> to vector<2x32xbf16>
    %c0_228 = arith.constant 0 : index
    %c0_229 = arith.constant 0 : index
    %790 = vector.load %arg14[%c0_228, %c0_229] : memref<64x3xbf16, #tpu.memory_space<vmem>>, vector<32x3xbf16>
    %cst_230 = arith.constant dense<0.000000e+00> : vector<2x3xf32>
    %791 = tpu.matmul %789, %790, %cst_230 {dimension_numbers = #tpu.dot_dimension_numbers<[1], [0], [0], [1], [0, 0, 1, 1], [], []>} : vector<2x32xbf16>, vector<32x3xbf16>, vector<2x3xf32> -> vector<2x3xf32>
    %792 = arith.truncf %585 : vector<2x32xf32> to vector<2x32xbf16>
    %c32_231 = arith.constant 32 : index
    %c0_232 = arith.constant 0 : index
    %793 = vector.load %arg14[%c32_231, %c0_232] : memref<64x3xbf16, #tpu.memory_space<vmem>>, vector<32x3xbf16>
    %cst_233 = arith.constant dense<0.000000e+00> : vector<2x3xf32>
    %794 = tpu.matmul %792, %793, %cst_233 {dimension_numbers = #tpu.dot_dimension_numbers<[1], [0], [0], [1], [0, 0, 1, 1], [], []>} : vector<2x32xbf16>, vector<32x3xbf16>, vector<2x3xf32> -> vector<2x3xf32>
    %795 = arith.addf %791, %794 : vector<2x3xf32>
    %c0_234 = arith.constant 0 : index
    %c0_235 = arith.constant 0 : index
    %796 = vector.load %arg15[%c0_234, %c0_235] : memref<1x3xf32, #tpu.memory_space<vmem>>, vector<1x3xf32>
    %797 = vector.broadcast %796 : vector<1x3xf32> to vector<2x3xf32>
    %798 = arith.addf %795, %797 : vector<2x3xf32>
    %c0_236 = arith.constant 0 : index
    %c0_237 = arith.constant 0 : index
    %799 = vector.load %arg16[%c0_236, %c0_237] : memref<2x3xf32, #tpu.memory_space<vmem>>, vector<2x3xf32>
    tpu.vector_store %arg16[%c0_236, %c0_237], %798 {strides = array<i32>} : memref<2x3xf32, #tpu.memory_space<vmem>>, vector<2x3xf32>,
    return
  }
  func.func @transform_0(%arg0: i32) -> (i32, i32) {
    %c0_i32 = arith.constant 0 : i32
    %c0_i32_0 = arith.constant 0 : i32
    %c0_i32_1 = arith.constant 0 : i32
    return %c0_i32, %c0_i32_0 : i32, i32
  }
  func.func @transform_1(%arg0: i32) -> (i32, i32) {
    %c0_i32 = arith.constant 0 : i32
    %c0_i32_0 = arith.constant 0 : i32
    %c0_i32_1 = arith.constant 0 : i32
    return %c0_i32, %c0_i32_0 : i32, i32
  }
  func.func @transform_2(%arg0: i32) -> (i32, i32) {
    %c0_i32 = arith.constant 0 : i32
    %c0_i32_0 = arith.constant 0 : i32
    %c0_i32_1 = arith.constant 0 : i32
    return %c0_i32, %c0_i32_0 : i32, i32
  }
  func.func @transform_3(%arg0: i32) -> (i32, i32) {
    %c0_i32 = arith.constant 0 : i32
    %c0_i32_0 = arith.constant 0 : i32
    %c0_i32_1 = arith.constant 0 : i32
    return %c0_i32, %c0_i32_0 : i32, i32
  }
  func.func @transform_4(%arg0: i32) -> (i32, i32) {
    %c0_i32 = arith.constant 0 : i32
    %c0_i32_0 = arith.constant 0 : i32
    %c0_i32_1 = arith.constant 0 : i32
    return %c0_i32, %c0_i32_0 : i32, i32
  }
  func.func @transform_5(%arg0: i32) -> (i32, i32) {
    %c0_i32 = arith.constant 0 : i32
    %c0_i32_0 = arith.constant 0 : i32
    %c0_i32_1 = arith.constant 0 : i32
    return %c0_i32, %c0_i32_0 : i32, i32
  }
  func.func @transform_6(%arg0: i32) -> (i32, i32) {
    %c0_i32 = arith.constant 0 : i32
    %c0_i32_0 = arith.constant 0 : i32
    %c0_i32_1 = arith.constant 0 : i32
    return %c0_i32, %c0_i32_0 : i32, i32
  }
  func.func @transform_7(%arg0: i32) -> (i32, i32) {
    %c0_i32 = arith.constant 0 : i32
    %c0_i32_0 = arith.constant 0 : i32
    %c0_i32_1 = arith.constant 0 : i32
    return %c0_i32, %c0_i32_0 : i32, i32
  }
  func.func @transform_8(%arg0: i32) -> (i32, i32) {
    %c0_i32 = arith.constant 0 : i32
    %c0_i32_0 = arith.constant 0 : i32
    %c0_i32_1 = arith.constant 0 : i32
    return %c0_i32, %c0_i32_0 : i32, i32
  }
  func.func @transform_9(%arg0: i32) -> (i32, i32) {
    %c0_i32 = arith.constant 0 : i32
    %c0_i32_0 = arith.constant 0 : i32
    %c0_i32_1 = arith.constant 0 : i32
    return %c0_i32, %c0_i32_0 : i32, i32
  }
  func.func @transform_10(%arg0: i32) -> (i32, i32) {
    %c0_i32 = arith.constant 0 : i32
    %c0_i32_0 = arith.constant 0 : i32
    %c0_i32_1 = arith.constant 0 : i32
    return %c0_i32, %c0_i32_0 : i32, i32
  }
  func.func @transform_11(%arg0: i32) -> (i32, i32) {
    %c0_i32 = arith.constant 0 : i32
    %c0_i32_0 = arith.constant 0 : i32
    %c0_i32_1 = arith.constant 0 : i32
    return %c0_i32, %c0_i32_0 : i32, i32
  }
  func.func @transform_12(%arg0: i32) -> (i32, i32) {
    %c0_i32 = arith.constant 0 : i32
    %c0_i32_0 = arith.constant 0 : i32
    %c0_i32_1 = arith.constant 0 : i32
    return %c0_i32, %c0_i32_0 : i32, i32
  }
  func.func @transform_13(%arg0: i32) -> (i32, i32) {
    %c0_i32 = arith.constant 0 : i32
    %c0_i32_0 = arith.constant 0 : i32
    %c0_i32_1 = arith.constant 0 : i32
    return %c0_i32, %c0_i32_0 : i32, i32
  }
  func.func @transform_14(%arg0: i32) -> (i32, i32) {
    %c0_i32 = arith.constant 0 : i32
    %c0_i32_0 = arith.constant 0 : i32
    %c0_i32_1 = arith.constant 0 : i32
    return %c0_i32, %c0_i32_0 : i32, i32
  }
  func.func @transform_15(%arg0: i32) -> (i32, i32) {
    %c0_i32 = arith.constant 0 : i32
    %c0_i32_0 = arith.constant 0 : i32
    %c0_i32_1 = arith.constant 0 : i32
    return %c0_i32, %c0_i32_0 : i32, i32
  }
}

</mosaic_0001>

<llo_original>
// kernel: birnn_forward.1
$region0: #{birnn_forward.1}
  #allocation0 [shape = 'u32[]', space=smem, size = 0x4, offset = 0x4, fixed_abs, tag = 'smem constant byte address 0x4 - core index']
  #allocation1 [shape = 'u32[144,128]{1,0:T(1,128)}', space=vmem, size = 0x12000, scoped, tag = 'internal scratch']
  #allocation2 [shape = 'f32[16,32]{1,0:T(8,128)}', space=vmem, size = 0x2000, scoped, tag = 'scratch operand']
  #allocation3 [shape = 'f32[16,32]{1,0:T(8,128)}', space=vmem, size = 0x2000, scoped, tag = 'scratch operand']
  #allocation4 [shape = 'f32[16,128]{1,0:T(8,128)}', space=vmem, size = 0x2000, scoped, tag = 'scratch operand']
  #allocation5 [shape = 'f32[16,128]{1,0:T(8,128)}', space=vmem, size = 0x2000, scoped, tag = 'scratch operand']
  %s0 = inlined_call_operand.vmem [shape: f32[16,16], index: 0, kind: input, shape index: {}]
  %s1 = inlined_call_operand.hbm [shape: bf16[16,128], index: 1, kind: input, shape index: {}]
  %s2 = inlined_call_operand.hbm [shape: bf16[16,128], index: 2, kind: input, shape index: {}]
  %s3 = inlined_call_operand.vmem [shape: bf16[32,128], index: 3, kind: input, shape index: {}]
  %s4 = inlined_call_operand.hbm [shape: bf16[32,128], index: 4, kind: input, shape index: {}]
  %s5 = inlined_call_operand.hbm [shape: f32[1,128], index: 5, kind: input, shape index: {}]
  %s6 = inlined_call_operand.hbm [shape: f32[1,128], index: 6, kind: input, shape index: {}]
  %s7 = inlined_call_operand.vmem [shape: bf16[64,128], index: 7, kind: input, shape index: {}]
  %s8 = inlined_call_operand.vmem [shape: bf16[64,128], index: 8, kind: input, shape index: {}]
  %s9 = inlined_call_operand.hbm [shape: bf16[32,128], index: 9, kind: input, shape index: {}]
  %s10 = inlined_call_operand.hbm [shape: bf16[32,128], index: 10, kind: input, shape index: {}]
  %s11 = inlined_call_operand.vmem [shape: f32[1,128], index: 11, kind: input, shape index: {}]
  %s12 = inlined_call_operand.vmem [shape: f32[1,128], index: 12, kind: input, shape index: {}]
  %s13 = inlined_call_operand.vmem [shape: bf16[64,3], index: 13, kind: input, shape index: {}]
  %s14 = inlined_call_operand.hbm [shape: f32[1,3], index: 14, kind: input, shape index: {}]
  %s15 = inlined_call_operand.hbm [shape: f32[2,3], index: 15, kind: output, shape index: {}]
  %s16 = sld [smem:[#allocation0]]
  $region102: #{birnn_forward.1} parent=0
    _
  %s18 = ssub.s32 1, %s16
  %s19 = scalar_select 0, %s18, %s16
  $region1: #{birnn_forward.1} parent=0
    #allocation6 [shape = 'u8[4096]{0}', space=vmem, size = 0x1000, scoped, tag = 'input window, operand 1, single buffered']
    #allocation7 [shape = 's32[1]{0}', space=sflag, size = 0x4, scoped, tag = 'scoped memory for birnn_forward.1']
    #allocation8 [shape = 's32[1]{0}', space=sflag, size = 0x4, scoped, tag = 'scoped memory for birnn_forward.1']
    #allocation9 [shape = 'u8[4096]{0}', space=vmem, size = 0x1000, scoped, tag = 'input window, operand 2, single buffered']
    #allocation10 [shape = 's32[1]{0}', space=sflag, size = 0x4, scoped, tag = 'scoped memory for birnn_forward.1']
    #allocation11 [shape = 'u8[8192]{0}', space=vmem, size = 0x2000, scoped, tag = 'input window, operand 4, single buffered']
    #allocation12 [shape = 'u8[512]{0}', space=vmem, size = 0x400, scoped, tag = 'input window, operand 5, single buffered']
    #allocation13 [shape = 's32[1]{0}', space=sflag, size = 0x4, scoped, tag = 'scoped memory for birnn_forward.1']
    #allocation14 [shape = 'u8[512]{0}', space=vmem, size = 0x400, scoped, tag = 'input window, operand 6, single buffered']
    #allocation15 [shape = 'u8[8192]{0}', space=vmem, size = 0x2000, scoped, tag = 'input window, operand 9, single buffered']
    #allocation16 [shape = 's32[1]{0}', space=sflag, size = 0x4, scoped, tag = 'scoped memory for birnn_forward.1']
    #allocation17 [shape = 'u8[8192]{0}', space=vmem, size = 0x2000, scoped, tag = 'input window, operand 10, single buffered']
    #allocation18 [shape = 'u8[512]{0}', space=vmem, size = 0x400, scoped, tag = 'input window, operand 14, single buffered']
    #allocation19 [shape = 's32[1]{0}', space=sflag, size = 0x4, scoped, tag = 'scoped memory for birnn_forward.1']
    #allocation20 [shape = 'u8[1024]{0}', space=vmem, size = 0x400, scoped, tag = 'output window, operand 0, single buffered']
    %20 = vsyncpa [#allocation7], 0
    %21 = vsyncpa [#allocation10], 0
    %22 = vsyncpa [#allocation13], 0
    %23 = vsyncpa [#allocation16], 0
    %24 = vsyncpa [#allocation19], 0
    %25 = vsyncpa [#allocation8], 0
    // Predicated region
    $region2: #{birnn_forward.1} parent=1 // pred_check
      _
    $region3: #{birnn_forward.1} parent=1 // pred_check_branch
      %27 = sbr.rel (0) target = $region5
    $region4: #{birnn_forward.1} parent=1 // pred_region
      _
    $region5: #{birnn_forward.1} parent=1 // pred_fallthru
      _
    // Predicated region
    $region6: #{birnn_forward.1} parent=1 // pred_check
      _
    $region7: #{birnn_forward.1} parent=1 // pred_check_branch
      %29 = sbr.rel (0) target = $region9
    $region8: #{birnn_forward.1} parent=1 // pred_region
      %s31 = ssub.s32 128, 128
      %32 = vsyncadd [#allocation7], %s31
      %s33 = sshll.u32 [#allocation6], 4
      %s34 = int_to_ptr.vmem [resolvable:$true] %s33
      %39 = dma.hbm_to_vmem [thread:$0]  %s1, 128, %s34, [#allocation7], 64, 64, 4
    $region9: #{birnn_forward.1} parent=1 // pred_fallthru
      _
    // Predicated region
    $region10: #{birnn_forward.1} parent=1 // pred_check
      _
    $region11: #{birnn_forward.1} parent=1 // pred_check_branch
      %41 = sbr.rel (0) target = $region13
    $region12: #{birnn_forward.1} parent=1 // pred_region
      %s43 = ssub.s32 128, 128
      %44 = vsyncadd [#allocation10], %s43
      %s45 = sshll.u32 [#allocation9], 4
      %s46 = int_to_ptr.vmem [resolvable:$true] %s45
      %51 = dma.hbm_to_vmem [thread:$0]  %s2, 128, %s46, [#allocation10], 64, 64, 4
    $region13: #{birnn_forward.1} parent=1 // pred_fallthru
      _
    // Predicated region
    $region14: #{birnn_forward.1} parent=1 // pred_check
      _
    $region15: #{birnn_forward.1} parent=1 // pred_check_branch
      %53 = sbr.rel (0) target = $region17
    $region16: #{birnn_forward.1} parent=1 // pred_region
      _
    $region17: #{birnn_forward.1} parent=1 // pred_fallthru
      _
    // Predicated region
    $region18: #{birnn_forward.1} parent=1 // pred_check
      _
    $region19: #{birnn_forward.1} parent=1 // pred_check_branch
      %55 = sbr.rel (0) target = $region21
    $region20: #{birnn_forward.1} parent=1 // pred_region
      %s57 = ssub.s32 256, 256
      %58 = vsyncadd [#allocation10], %s57
      %s59 = sshll.u32 [#allocation11], 4
      %s60 = int_to_ptr.vmem [resolvable:$true] %s59
      %65 = dma.hbm_to_vmem [thread:$0]  %s4, 256, %s60, [#allocation10], 64, 64, 4
    $region21: #{birnn_forward.1} parent=1 // pred_fallthru
      _
    // Predicated region
    $region22: #{birnn_forward.1} parent=1 // pred_check
      _
    $region23: #{birnn_forward.1} parent=1 // pred_check_branch
      %67 = sbr.rel (0) target = $region25
    $region24: #{birnn_forward.1} parent=1 // pred_region
      %s69 = ssub.s32 16, 16
      %70 = vsyncadd [#allocation13], %s69
      %s72 = sshll.u32 [#allocation12], 4
      %s73 = int_to_ptr.vmem [resolvable:$true] %s72
      %75 = dma.hbm_to_vmem [thread:$0]  %s5, 16, %s73, [#allocation13]
    $region25: #{birnn_forward.1} parent=1 // pred_fallthru
      _
    // Predicated region
    $region26: #{birnn_forward.1} parent=1 // pred_check
      _
    $region27: #{birnn_forward.1} parent=1 // pred_check_branch
      %77 = sbr.rel (0) target = $region29
    $region28: #{birnn_forward.1} parent=1 // pred_region
      %s79 = ssub.s32 16, 16
      %80 = vsyncadd [#allocation13], %s79
      %s82 = sshll.u32 [#allocation14], 4
      %s83 = int_to_ptr.vmem [resolvable:$true] %s82
      %85 = dma.hbm_to_vmem [thread:$0]  %s6, 16, %s83, [#allocation13]
    $region29: #{birnn_forward.1} parent=1 // pred_fallthru
      _
    // Predicated region
    $region30: #{birnn_forward.1} parent=1 // pred_check
      _
    $region31: #{birnn_forward.1} parent=1 // pred_check_branch
      %87 = sbr.rel (0) target = $region33
    $region32: #{birnn_forward.1} parent=1 // pred_region
      _
    $region33: #{birnn_forward.1} parent=1 // pred_fallthru
      _
    // Predicated region
    $region34: #{birnn_forward.1} parent=1 // pred_check
      _
    $region35: #{birnn_forward.1} parent=1 // pred_check_branch
      %89 = sbr.rel (0) target = $region37
    $region36: #{birnn_forward.1} parent=1 // pred_region
      _
    $region37: #{birnn_forward.1} parent=1 // pred_fallthru
      _
    // Predicated region
    $region38: #{birnn_forward.1} parent=1 // pred_check
      _
    $region39: #{birnn_forward.1} parent=1 // pred_check_branch
      %91 = sbr.rel (0) target = $region41
    $region40: #{birnn_forward.1} parent=1 // pred_region
      %s93 = ssub.s32 256, 256
      %94 = vsyncadd [#allocation16], %s93
      %s95 = sshll.u32 [#allocation15], 4
      %s96 = int_to_ptr.vmem [resolvable:$true] %s95
      %101 = dma.hbm_to_vmem [thread:$0]  %s9, 256, %s96, [#allocation16], 64, 64, 4
    $region41: #{birnn_forward.1} parent=1 // pred_fallthru
      _
    // Predicated region
    $region42: #{birnn_forward.1} parent=1 // pred_check
      _
    $region43: #{birnn_forward.1} parent=1 // pred_check_branch
      %103 = sbr.rel (0) target = $region45
    $region44: #{birnn_forward.1} parent=1 // pred_region
      %s105 = ssub.s32 256, 256
      %106 = vsyncadd [#allocation16], %s105
      %s107 = sshll.u32 [#allocation17], 4
      %s108 = int_to_ptr.vmem [resolvable:$true] %s107
      %113 = dma.hbm_to_vmem [thread:$0]  %s10, 256, %s108, [#allocation16], 64, 64, 4
    $region45: #{birnn_forward.1} parent=1 // pred_fallthru
      _
    // Predicated region
    $region46: #{birnn_forward.1} parent=1 // pred_check
      _
    $region47: #{birnn_forward.1} parent=1 // pred_check_branch
      %115 = sbr.rel (0) target = $region49
    $region48: #{birnn_forward.1} parent=1 // pred_region
      _
    $region49: #{birnn_forward.1} parent=1 // pred_fallthru
      _
    // Predicated region
    $region50: #{birnn_forward.1} parent=1 // pred_check
      _
    $region51: #{birnn_forward.1} parent=1 // pred_check_branch
      %117 = sbr.rel (0) target = $region53
    $region52: #{birnn_forward.1} parent=1 // pred_region
      _
    $region53: #{birnn_forward.1} parent=1 // pred_fallthru
      _
    // Predicated region
    $region54: #{birnn_forward.1} parent=1 // pred_check
      _
    $region55: #{birnn_forward.1} parent=1 // pred_check_branch
      %119 = sbr.rel (0) target = $region57
    $region56: #{birnn_forward.1} parent=1 // pred_region
      _
    $region57: #{birnn_forward.1} parent=1 // pred_fallthru
      _
    // Predicated region
    $region58: #{birnn_forward.1} parent=1 // pred_check
      _
    $region59: #{birnn_forward.1} parent=1 // pred_check_branch
      %121 = sbr.rel (0) target = $region61
    $region60: #{birnn_forward.1} parent=1 // pred_region
      %s123 = ssub.s32 16, 16
      %124 = vsyncadd [#allocation19], %s123
      %s126 = sshll.u32 [#allocation18], 4
      %s127 = int_to_ptr.vmem [resolvable:$true] %s126
      %129 = dma.hbm_to_vmem [thread:$0]  %s14, 16, %s127, [#allocation19]
    $region61: #{birnn_forward.1} parent=1 // pred_fallthru
      _
    // Predicated region
    $region62: #{birnn_forward.1} parent=1 // pred_check
      _
    $region63: #{birnn_forward.1} parent=1 // pred_check_branch
      %131 = sbr.rel (0) target = $region65
    $region64: #{birnn_forward.1} parent=1 // pred_region
      %132 = dma.done [#allocation7], 128
    $region65: #{birnn_forward.1} parent=1 // pred_fallthru
      _
    // Predicated region
    $region66: #{birnn_forward.1} parent=1 // pred_check
      _
    $region67: #{birnn_forward.1} parent=1 // pred_check_branch
      %134 = sbr.rel (0) target = $region69
    $region68: #{birnn_forward.1} parent=1 // pred_region
      %135 = dma.done [#allocation10], 128
    $region69: #{birnn_forward.1} parent=1 // pred_fallthru
      _
    // Predicated region
    $region70: #{birnn_forward.1} parent=1 // pred_check
      _
    $region71: #{birnn_forward.1} parent=1 // pred_check_branch
      %137 = sbr.rel (0) target = $region73
    $region72: #{birnn_forward.1} parent=1 // pred_region
      %138 = dma.done [#allocation10], 256
    $region73: #{birnn_forward.1} parent=1 // pred_fallthru
      _
    // Predicated region
    $region74: #{birnn_forward.1} parent=1 // pred_check
      _
    $region75: #{birnn_forward.1} parent=1 // pred_check_branch
      %140 = sbr.rel (0) target = $region77
    $region76: #{birnn_forward.1} parent=1 // pred_region
      %141 = dma.done [#allocation13], 16
    $region77: #{birnn_forward.1} parent=1 // pred_fallthru
      _
    // Predicated region
    $region78: #{birnn_forward.1} parent=1 // pred_check
      _
    $region79: #{birnn_forward.1} parent=1 // pred_check_branch
      %143 = sbr.rel (0) target = $region81
    $region80: #{birnn_forward.1} parent=1 // pred_region
      %144 = dma.done [#allocation13], 16
    $region81: #{birnn_forward.1} parent=1 // pred_fallthru
      _
    // Predicated region
    $region82: #{birnn_forward.1} parent=1 // pred_check
      _
    $region83: #{birnn_forward.1} parent=1 // pred_check_branch
      %146 = sbr.rel (0) target = $region85
    $region84: #{birnn_forward.1} parent=1 // pred_region
      %147 = dma.done [#allocation16], 256
    $region85: #{birnn_forward.1} parent=1 // pred_fallthru
      _
    // Predicated region
    $region86: #{birnn_forward.1} parent=1 // pred_check
      _
    $region87: #{birnn_forward.1} parent=1 // pred_check_branch
      %149 = sbr.rel (0) target = $region89
    $region88: #{birnn_forward.1} parent=1 // pred_region
      %150 = dma.done [#allocation16], 256
    $region89: #{birnn_forward.1} parent=1 // pred_fallthru
      _
    // Predicated region
    $region90: #{birnn_forward.1} parent=1 // pred_check
      _
    $region91: #{birnn_forward.1} parent=1 // pred_check_branch
      %152 = sbr.rel (0) target = $region93
    $region92: #{birnn_forward.1} parent=1 // pred_region
      %153 = dma.done [#allocation19], 16
    $region93: #{birnn_forward.1} parent=1 // pred_fallthru
      _
    %v155 = vld [vmem:[%s0] sm:$0xff]
    %v156 = vld [vmem:[%s0 + $0x8] sm:$0xff]
    %v157 = vpack.c.bf16 %v156, %v155
    %v158 = vld [vmem:[#allocation6] sm:$0xf]
    %v159 = vld [vmem:[#allocation6 + $0x4] sm:$0xf]
    %v160 = vld [vmem:[#allocation12] sm:$0x1]
    %v162 = vlaneseq
    %v163 = vshrl.u32 %v162, 7
    %v164 = vsub.s32 0, %v163
    %v165 = vrot.slane %v160, %v164
    %v169 = vunpack.c.l.b16 %v158
    %v170 = vunpack.c.l.b16 %v159
    %v171 = vpack.c.b16 %v170, %v169
    %vm173 = vcmask 130048
    %v175 = vsel %vm173, %v157, 0
    %177 = vmatprep.subr.bf16.mxu0 0
    %178 = vmatpush1.bf16.msra.mxu0 0
    %179 = vmatprep.subr.bf16.mxu0 0
    %180 = vmatpush1.bf16.msra.mxu0 0
    %181 = vmatprep.subr.bf16.mxu0 0
    %182 = vmatpush1.bf16.msra.mxu0 0
    %183 = vmatprep.subr.bf16.mxu0 0
    %184 = vmatpush1.bf16.msra.mxu0 0
    %185 = vmatprep.subr.bf16.mxu0 0
    %186 = vmatpush1.bf16.msra.mxu0 0
    %187 = vmatprep.subr.bf16.mxu0 0
    %188 = vmatpush1.bf16.msra.mxu0 0
    %189 = vmatprep.subr.bf16.mxu0 0
    %190 = vmatpush1.bf16.msra.mxu0 0
    %191 = vmatprep.subr.bf16.mxu0 0
    %192 = vmatpush1.bf16.msra.mxu0 %v171
    %193 = vmatprep.subr.bf16.mxu0 0
    %194 = vmatpush2.bf16.msra.mxu0 0
    %195 = vmatprep.subr.bf16.mxu0 0
    %196 = vmatpush2.bf16.msra.mxu0 0
    %197 = vmatprep.subr.bf16.mxu0 0
    %198 = vmatpush2.bf16.msra.mxu0 0
    %199 = vmatprep.subr.bf16.mxu0 0
    %200 = vmatpush2.bf16.msra.mxu0 0
    %201 = vmatprep.subr.bf16.mxu0 0
    %202 = vmatpush2.bf16.msra.mxu0 0
    %203 = vmatprep.subr.bf16.mxu0 0
    %204 = vmatpush2.bf16.msra.mxu0 0
    %205 = vmatprep.subr.bf16.mxu0 0
    %206 = vmatpush2.bf16.msra.mxu0 0
    %207 = vmatprep.subr.bf16.mxu0 0
    %208 = vmatpush2.bf16.msra.mxu0 0
    %209 = vmatprep.mubr.bf16.mxu0 0
    %210 = vmatmul.mubr.bf16.gmra.mxu0 %v175
    %v211 = vpop.f32.mrf.mxu0
    %v212 = vadd.f32 %v165, %v211
    %v213 = vpop.f32.mrf.mxu0
    %v214 = vpop.f32.mrf.mxu0
    %v215 = vadd.f32 %v165, %v214
    %v216 = vpop.f32.mrf.mxu0
    %217 = vdwg.mxu0
    %218 = vst [vmem:[#allocation4] sm:$0xff] %v212
    %219 = vst [vmem:[#allocation4 + $0x8] sm:$0xff] %v215
    %v220 = vld [vmem:[#allocation9] sm:$0xf]
    %v221 = vld [vmem:[#allocation9 + $0x4] sm:$0xf]
    %v222 = vld [vmem:[#allocation14] sm:$0x1]
    %v224 = vlaneseq
    %v225 = vshrl.u32 %v224, 7
    %v226 = vsub.s32 0, %v225
    %v227 = vrot.slane %v222, %v226
    %v231 = vunpack.c.l.b16 %v220
    %v232 = vunpack.c.l.b16 %v221
    %v233 = vpack.c.b16 %v232, %v231
    %235 = vmatprep.subr.bf16.mxu0 0
    %236 = vmatpush1.bf16.msra.mxu0 0
    %237 = vmatprep.subr.bf16.mxu0 0
    %238 = vmatpush1.bf16.msra.mxu0 0
    %239 = vmatprep.subr.bf16.mxu0 0
    %240 = vmatpush1.bf16.msra.mxu0 0
    %241 = vmatprep.subr.bf16.mxu0 0
    %242 = vmatpush1.bf16.msra.mxu0 0
    %243 = vmatprep.subr.bf16.mxu0 0
    %244 = vmatpush1.bf16.msra.mxu0 0
    %245 = vmatprep.subr.bf16.mxu0 0
    %246 = vmatpush1.bf16.msra.mxu0 0
    %247 = vmatprep.subr.bf16.mxu0 0
    %248 = vmatpush1.bf16.msra.mxu0 0
    %249 = vmatprep.subr.bf16.mxu0 0
    %250 = vmatpush1.bf16.msra.mxu0 %v233
    %251 = vmatprep.subr.bf16.mxu0 0
    %252 = vmatpush2.bf16.msra.mxu0 0
    %253 = vmatprep.subr.bf16.mxu0 0
    %254 = vmatpush2.bf16.msra.mxu0 0
    %255 = vmatprep.subr.bf16.mxu0 0
    %256 = vmatpush2.bf16.msra.mxu0 0
    %257 = vmatprep.subr.bf16.mxu0 0
    %258 = vmatpush2.bf16.msra.mxu0 0
    %259 = vmatprep.subr.bf16.mxu0 0
    %260 = vmatpush2.bf16.msra.mxu0 0
    %261 = vmatprep.subr.bf16.mxu0 0
    %262 = vmatpush2.bf16.msra.mxu0 0
    %263 = vmatprep.subr.bf16.mxu0 0
    %264 = vmatpush2.bf16.msra.mxu0 0
    %265 = vmatprep.subr.bf16.mxu0 0
    %266 = vmatpush2.bf16.msra.mxu0 0
    %267 = vmatprep.mubr.bf16.mxu0 0
    %268 = vmatmul.mubr.bf16.gmra.mxu0 %v175
    %v269 = vpop.f32.mrf.mxu0
    %v270 = vadd.f32 %v227, %v269
    %v271 = vpop.f32.mrf.mxu0
    %v272 = vpop.f32.mrf.mxu0
    %v273 = vadd.f32 %v227, %v272
    %v274 = vpop.f32.mrf.mxu0
    %275 = vdwg.mxu0
    %276 = vst [vmem:[#allocation5] sm:$0xff] %v270
    %277 = vst [vmem:[#allocation5 + $0x8] sm:$0xff] %v273
    %v278 = vld [vmem:[%s3] sm:$0xf]
    %v279 = vld [vmem:[%s3 + $0x4] sm:$0xf]
    %v280 = vld [vmem:[%s3 + $0x8] sm:$0xf]
    %v281 = vld [vmem:[%s3 + $0xc] sm:$0xf]
    %v282 = vld [vmem:[#allocation11] sm:$0xf]
    %v283 = vld [vmem:[#allocation11 + $0x4] sm:$0xf]
    %v284 = vld [vmem:[#allocation11 + $0x8] sm:$0xf]
    %v285 = vld [vmem:[#allocation11 + $0xc] sm:$0xf]
    %v286 = vld [vmem:[#allocation4] sm:$0x3]
    %v291 = vunpack.c.l.b16 %v278
    %v292 = vunpack.c.l.b16 %v279
    %v293 = vunpack.c.l.b16 %v280
    %v294 = vunpack.c.l.b16 %v281
    %v295 = vpack.c.b16 %v292, %v291
    %v296 = vpack.c.b16 %v294, %v293
    %vm299 = vcmask 261120
    %v301 = vsel %vm299, 0, 0
    %303 = vmatprep.subr.bf16.mxu0 0
    %304 = vmatpush1.bf16.msra.mxu0 0
    %305 = vmatprep.subr.bf16.mxu0 0
    %306 = vmatpush1.bf16.msra.mxu0 0
    %307 = vmatprep.subr.bf16.mxu0 0
    %308 = vmatpush1.bf16.msra.mxu0 0
    %309 = vmatprep.subr.bf16.mxu0 0
    %310 = vmatpush1.bf16.msra.mxu0 0
    %311 = vmatprep.subr.bf16.mxu0 0
    %312 = vmatpush1.bf16.msra.mxu0 0
    %313 = vmatprep.subr.bf16.mxu0 0
    %314 = vmatpush1.bf16.msra.mxu0 0
    %315 = vmatprep.subr.bf16.mxu0 0
    %316 = vmatpush1.bf16.msra.mxu0 %v296
    %317 = vmatprep.subr.bf16.mxu0 0
    %318 = vmatpush1.bf16.msra.mxu0 %v295
    %319 = vmatprep.subr.bf16.mxu0 0
    %320 = vmatpush2.bf16.msra.mxu0 0
    %321 = vmatprep.subr.bf16.mxu0 0
    %322 = vmatpush2.bf16.msra.mxu0 0
    %323 = vmatprep.subr.bf16.mxu0 0
    %324 = vmatpush2.bf16.msra.mxu0 0
    %325 = vmatprep.subr.bf16.mxu0 0
    %326 = vmatpush2.bf16.msra.mxu0 0
    %327 = vmatprep.subr.bf16.mxu0 0
    %328 = vmatpush2.bf16.msra.mxu0 0
    %329 = vmatprep.subr.bf16.mxu0 0
    %330 = vmatpush2.bf16.msra.mxu0 0
    %331 = vmatprep.subr.bf16.mxu0 0
    %332 = vmatpush2.bf16.msra.mxu0 0
    %333 = vmatprep.subr.bf16.mxu0 0
    %334 = vmatpush2.bf16.msra.mxu0 0
    %335 = vmatprep.mubr.bf16.mxu0 0
    %336 = vmatmul.mubr.bf16.gmra.mxu0 %v301
    %v337 = vpop.f32.mrf.mxu0
    %v338 = vadd.f32 0.0, %v337
    %v339 = vpop.f32.mrf.mxu0
    %v340 = vpop.f32.mrf.mxu0
    %v341 = vpop.f32.mrf.mxu0
    %342 = vdwg.mxu0
    %v343 = vadd.f32 %v286, %v338
    %v344 = vld [vmem:[#allocation5 + $0xe] sm:$0x3]
    %v349 = vunpack.c.l.b16 %v282
    %v350 = vunpack.c.l.b16 %v283
    %v351 = vunpack.c.l.b16 %v284
    %v352 = vunpack.c.l.b16 %v285
    %v353 = vpack.c.b16 %v350, %v349
    %v354 = vpack.c.b16 %v352, %v351
    %357 = vmatprep.subr.bf16.mxu0 0
    %358 = vmatpush1.bf16.msra.mxu0 0
    %359 = vmatprep.subr.bf16.mxu0 0
    %360 = vmatpush1.bf16.msra.mxu0 0
    %361 = vmatprep.subr.bf16.mxu0 0
    %362 = vmatpush1.bf16.msra.mxu0 0
    %363 = vmatprep.subr.bf16.mxu0 0
    %364 = vmatpush1.bf16.msra.mxu0 0
    %365 = vmatprep.subr.bf16.mxu0 0
    %366 = vmatpush1.bf16.msra.mxu0 0
    %367 = vmatprep.subr.bf16.mxu0 0
    %368 = vmatpush1.bf16.msra.mxu0 0
    %369 = vmatprep.subr.bf16.mxu0 0
    %370 = vmatpush1.bf16.msra.mxu0 %v354
    %371 = vmatprep.subr.bf16.mxu0 0
    %372 = vmatpush1.bf16.msra.mxu0 %v353
    %373 = vmatprep.subr.bf16.mxu0 0
    %374 = vmatpush2.bf16.msra.mxu0 0
    %375 = vmatprep.subr.bf16.mxu0 0
    %376 = vmatpush2.bf16.msra.mxu0 0
    %377 = vmatprep.subr.bf16.mxu0 0
    %378 = vmatpush2.bf16.msra.mxu0 0
    %379 = vmatprep.subr.bf16.mxu0 0
    %380 = vmatpush2.bf16.msra.mxu0 0
    %381 = vmatprep.subr.bf16.mxu0 0
    %382 = vmatpush2.bf16.msra.mxu0 0
    %383 = vmatprep.subr.bf16.mxu0 0
    %384 = vmatpush2.bf16.msra.mxu0 0
    %385 = vmatprep.subr.bf16.mxu0 0
    %386 = vmatpush2.bf16.msra.mxu0 0
    %387 = vmatprep.subr.bf16.mxu0 0
    %388 = vmatpush2.bf16.msra.mxu0 0
    %389 = vmatprep.mubr.bf16.mxu0 0
    %390 = vmatmul.mubr.bf16.gmra.mxu0 %v301
    %v391 = vpop.f32.mrf.mxu0
    %v392 = vadd.f32 0.0, %v391
    %v393 = vpop.f32.mrf.mxu0
    %v394 = vpop.f32.mrf.mxu0
    %v395 = vpop.f32.mrf.mxu0
    %396 = vdwg.mxu0
    %v397 = vadd.f32 %v344, %v392
    %v398 = vxor.u32 %v343, 2147483648
    %v399 = vmul.f32 %v398, 1.442695
    %v400 = vpow.pop %v399
    %v401 = vadd.f32 %v400, 1.0
    %v402 = vrcp.pop %v401
    %v403 = vmul.f32 1.0, %v402
    %v404 = vtanh.pop %v343
    %v405 = vmul.f32 %v403, 0.0
    %407 = vrot.lane.b32.xlu0 %v404, 64
    %v408 = vpop.permute.xlu0 %407
    %v410 = vmul.f32 %v403, %v408
    %412 = vrot.lane.b32.xlu0 %v410, 32
    %v413 = vpop.permute.xlu0 %412
    %v415 = vadd.f32 %v405, %v413
    %v416 = vtanh.pop %v415
    %418 = vrot.lane.b32.xlu0 %v416, 64
    %v419 = vpop.permute.xlu0 %418
    %v421 = vmul.f32 %v403, %v419
    %v422 = vxor.u32 %v397, 2147483648
    %v423 = vmul.f32 %v422, 1.442695
    %v424 = vpow.pop %v423
    %v425 = vadd.f32 %v424, 1.0
    %v426 = vrcp.pop %v425
    %v427 = vmul.f32 1.0, %v426
    %v428 = vtanh.pop %v397
    %v429 = vmul.f32 %v427, 0.0
    %431 = vrot.lane.b32.xlu0 %v428, 64
    %v432 = vpop.permute.xlu0 %431
    %v434 = vmul.f32 %v427, %v432
    %436 = vrot.lane.b32.xlu0 %v434, 32
    %v437 = vpop.permute.xlu0 %436
    %v439 = vadd.f32 %v429, %v437
    %v440 = vtanh.pop %v439
    %442 = vrot.lane.b32.xlu0 %v440, 64
    %v443 = vpop.permute.xlu0 %442
    %v445 = vmul.f32 %v427, %v443
    %447 = vrot.lane.b32.xlu0 %v421, 32
    %v448 = vpop.permute.xlu0 %447
    %vm450 = vcmask 254976
    %451 = vst.msk [vmem:[#allocation2] sm:$0x3] %vm450, %v448
    %453 = vrot.lane.b32.xlu0 %v445, 32
    %v454 = vpop.permute.xlu0 %453
    %456 = vst.msk [vmem:[#allocation3 + $0xe] sm:$0x3] %vm450, %v454
    %v457 = vld [vmem:[#allocation4 + $0x2] sm:$0x3]
    %v458 = vpack.c.bf16 %v421, %v421
    %460 = vrot.lane.b32.xlu0 %v458, 32
    %v461 = vpop.permute.xlu0 %460
    %v463 = vsel %vm299, %v461, 0
    %465 = vmatprep.subr.bf16.mxu0 0
    %466 = vmatpush1.bf16.msra.mxu0 0
    %467 = vmatprep.subr.bf16.mxu0 0
    %468 = vmatpush1.bf16.msra.mxu0 0
    %469 = vmatprep.subr.bf16.mxu0 0
    %470 = vmatpush1.bf16.msra.mxu0 0
    %471 = vmatprep.subr.bf16.mxu0 0
    %472 = vmatpush1.bf16.msra.mxu0 0
    %473 = vmatprep.subr.bf16.mxu0 0
    %474 = vmatpush1.bf16.msra.mxu0 0
    %475 = vmatprep.subr.bf16.mxu0 0
    %476 = vmatpush1.bf16.msra.mxu0 0
    %477 = vmatprep.subr.bf16.mxu0 0
    %478 = vmatpush1.bf16.msra.mxu0 %v296
    %479 = vmatprep.subr.bf16.mxu0 0
    %480 = vmatpush1.bf16.msra.mxu0 %v295
    %481 = vmatprep.subr.bf16.mxu0 0
    %482 = vmatpush2.bf16.msra.mxu0 0
    %483 = vmatprep.subr.bf16.mxu0 0
    %484 = vmatpush2.bf16.msra.mxu0 0
    %485 = vmatprep.subr.bf16.mxu0 0
    %486 = vmatpush2.bf16.msra.mxu0 0
    %487 = vmatprep.subr.bf16.mxu0 0
    %488 = vmatpush2.bf16.msra.mxu0 0
    %489 = vmatprep.subr.bf16.mxu0 0
    %490 = vmatpush2.bf16.msra.mxu0 0
    %491 = vmatprep.subr.bf16.mxu0 0
    %492 = vmatpush2.bf16.msra.mxu0 0
    %493 = vmatprep.subr.bf16.mxu0 0
    %494 = vmatpush2.bf16.msra.mxu0 0
    %495 = vmatprep.subr.bf16.mxu0 0
    %496 = vmatpush2.bf16.msra.mxu0 0
    %497 = vmatprep.mubr.bf16.mxu0 0
    %498 = vmatmul.mubr.bf16.gmra.mxu0 %v463
    %v499 = vpop.f32.mrf.mxu0
    %v500 = vadd.f32 0.0, %v499
    %v501 = vpop.f32.mrf.mxu0
    %v502 = vpop.f32.mrf.mxu0
    %v503 = vpop.f32.mrf.mxu0
    %504 = vdwg.mxu0
    %v505 = vadd.f32 %v457, %v500
    %v506 = vld [vmem:[#allocation5 + $0xc] sm:$0x3]
    %v507 = vpack.c.bf16 %v445, %v445
    %509 = vrot.lane.b32.xlu0 %v507, 32
    %v510 = vpop.permute.xlu0 %509
    %v512 = vsel %vm299, %v510, 0
    %514 = vmatprep.subr.bf16.mxu0 0
    %515 = vmatpush1.bf16.msra.mxu0 0
    %516 = vmatprep.subr.bf16.mxu0 0
    %517 = vmatpush1.bf16.msra.mxu0 0
    %518 = vmatprep.subr.bf16.mxu0 0
    %519 = vmatpush1.bf16.msra.mxu0 0
    %520 = vmatprep.subr.bf16.mxu0 0
    %521 = vmatpush1.bf16.msra.mxu0 0
    %522 = vmatprep.subr.bf16.mxu0 0
    %523 = vmatpush1.bf16.msra.mxu0 0
    %524 = vmatprep.subr.bf16.mxu0 0
    %525 = vmatpush1.bf16.msra.mxu0 0
    %526 = vmatprep.subr.bf16.mxu0 0
    %527 = vmatpush1.bf16.msra.mxu0 %v354
    %528 = vmatprep.subr.bf16.mxu0 0
    %529 = vmatpush1.bf16.msra.mxu0 %v353
    %530 = vmatprep.subr.bf16.mxu0 0
    %531 = vmatpush2.bf16.msra.mxu0 0
    %532 = vmatprep.subr.bf16.mxu0 0
    %533 = vmatpush2.bf16.msra.mxu0 0
    %534 = vmatprep.subr.bf16.mxu0 0
    %535 = vmatpush2.bf16.msra.mxu0 0
    %536 = vmatprep.subr.bf16.mxu0 0
    %537 = vmatpush2.bf16.msra.mxu0 0
    %538 = vmatprep.subr.bf16.mxu0 0
    %539 = vmatpush2.bf16.msra.mxu0 0
    %540 = vmatprep.subr.bf16.mxu0 0
    %541 = vmatpush2.bf16.msra.mxu0 0
    %542 = vmatprep.subr.bf16.mxu0 0
    %543 = vmatpush2.bf16.msra.mxu0 0
    %544 = vmatprep.subr.bf16.mxu0 0
    %545 = vmatpush2.bf16.msra.mxu0 0
    %546 = vmatprep.mubr.bf16.mxu0 0
    %547 = vmatmul.mubr.bf16.gmra.mxu0 %v512
    %v548 = vpop.f32.mrf.mxu0
    %v549 = vadd.f32 0.0, %v548
    %v550 = vpop.f32.mrf.mxu0
    %v551 = vpop.f32.mrf.mxu0
    %v552 = vpop.f32.mrf.mxu0
    %553 = vdwg.mxu0
    %v554 = vadd.f32 %v506, %v549
    %v555 = vxor.u32 %v505, 2147483648
    %v556 = vmul.f32 %v555, 1.442695
    %v557 = vpow.pop %v556
    %v558 = vadd.f32 %v557, 1.0
    %v559 = vrcp.pop %v558
    %v560 = vmul.f32 1.0, %v559
    %v561 = vtanh.pop %v505
    %v562 = vmul.f32 %v560, %v415
    %564 = vrot.lane.b32.xlu0 %v561, 64
    %v565 = vpop.permute.xlu0 %564
    %v567 = vmul.f32 %v560, %v565
    %569 = vrot.lane.b32.xlu0 %v567, 32
    %v570 = vpop.permute.xlu0 %569
    %v572 = vadd.f32 %v562, %v570
    %v573 = vtanh.pop %v572
    %575 = vrot.lane.b32.xlu0 %v573, 64
    %v576 = vpop.permute.xlu0 %575
    %v578 = vmul.f32 %v560, %v576
    %v579 = vxor.u32 %v554, 2147483648
    %v580 = vmul.f32 %v579, 1.442695
    %v581 = vpow.pop %v580
    %v582 = vadd.f32 %v581, 1.0
    %v583 = vrcp.pop %v582
    %v584 = vmul.f32 1.0, %v583
    %v585 = vtanh.pop %v554
    %v586 = vmul.f32 %v584, %v439
    %588 = vrot.lane.b32.xlu0 %v585, 64
    %v589 = vpop.permute.xlu0 %588
    %v591 = vmul.f32 %v584, %v589
    %593 = vrot.lane.b32.xlu0 %v591, 32
    %v594 = vpop.permute.xlu0 %593
    %v596 = vadd.f32 %v586, %v594
    %v597 = vtanh.pop %v596
    %599 = vrot.lane.b32.xlu0 %v597, 64
    %v600 = vpop.permute.xlu0 %599
    %v602 = vmul.f32 %v584, %v600
    %604 = vrot.lane.b32.xlu0 %v578, 32
    %v605 = vpop.permute.xlu0 %604
    %607 = vst.msk [vmem:[#allocation2 + $0x2] sm:$0x3] %vm450, %v605
    %609 = vrot.lane.b32.xlu0 %v602, 32
    %v610 = vpop.permute.xlu0 %609
    %612 = vst.msk [vmem:[#allocation3 + $0xc] sm:$0x3] %vm450, %v610
    %v613 = vld [vmem:[#allocation4 + $0x4] sm:$0x3]
    %v614 = vpack.c.bf16 %v578, %v578
    %616 = vrot.lane.b32.xlu0 %v614, 32
    %v617 = vpop.permute.xlu0 %616
    %v619 = vsel %vm299, %v617, 0
    %621 = vmatprep.subr.bf16.mxu0 0
    %622 = vmatpush1.bf16.msra.mxu0 0
    %623 = vmatprep.subr.bf16.mxu0 0
    %624 = vmatpush1.bf16.msra.mxu0 0
    %625 = vmatprep.subr.bf16.mxu0 0
    %626 = vmatpush1.bf16.msra.mxu0 0
    %627 = vmatprep.subr.bf16.mxu0 0
    %628 = vmatpush1.bf16.msra.mxu0 0
    %629 = vmatprep.subr.bf16.mxu0 0
    %630 = vmatpush1.bf16.msra.mxu0 0
    %631 = vmatprep.subr.bf16.mxu0 0
    %632 = vmatpush1.bf16.msra.mxu0 0
    %633 = vmatprep.subr.bf16.mxu0 0
    %634 = vmatpush1.bf16.msra.mxu0 %v296
    %635 = vmatprep.subr.bf16.mxu0 0
    %636 = vmatpush1.bf16.msra.mxu0 %v295
    %637 = vmatprep.subr.bf16.mxu0 0
    %638 = vmatpush2.bf16.msra.mxu0 0
    %639 = vmatprep.subr.bf16.mxu0 0
    %640 = vmatpush2.bf16.msra.mxu0 0
    %641 = vmatprep.subr.bf16.mxu0 0
    %642 = vmatpush2.bf16.msra.mxu0 0
    %643 = vmatprep.subr.bf16.mxu0 0
    %644 = vmatpush2.bf16.msra.mxu0 0
    %645 = vmatprep.subr.bf16.mxu0 0
    %646 = vmatpush2.bf16.msra.mxu0 0
    %647 = vmatprep.subr.bf16.mxu0 0
    %648 = vmatpush2.bf16.msra.mxu0 0
    %649 = vmatprep.subr.bf16.mxu0 0
    %650 = vmatpush2.bf16.msra.mxu0 0
    %651 = vmatprep.subr.bf16.mxu0 0
    %652 = vmatpush2.bf16.msra.mxu0 0
    %653 = vmatprep.mubr.bf16.mxu0 0
    %654 = vmatmul.mubr.bf16.gmra.mxu0 %v619
    %v655 = vpop.f32.mrf.mxu0
    %v656 = vadd.f32 0.0, %v655
    %v657 = vpop.f32.mrf.mxu0
    %v658 = vpop.f32.mrf.mxu0
    %v659 = vpop.f32.mrf.mxu0
    %660 = vdwg.mxu0
    %v661 = vadd.f32 %v613, %v656
    %v662 = vld [vmem:[#allocation5 + $0xa] sm:$0x3]
    %v663 = vpack.c.bf16 %v602, %v602
    %665 = vrot.lane.b32.xlu0 %v663, 32
    %v666 = vpop.permute.xlu0 %665
    %v668 = vsel %vm299, %v666, 0
    %670 = vmatprep.subr.bf16.mxu0 0
    %671 = vmatpush1.bf16.msra.mxu0 0
    %672 = vmatprep.subr.bf16.mxu0 0
    %673 = vmatpush1.bf16.msra.mxu0 0
    %674 = vmatprep.subr.bf16.mxu0 0
    %675 = vmatpush1.bf16.msra.mxu0 0
    %676 = vmatprep.subr.bf16.mxu0 0
    %677 = vmatpush1.bf16.msra.mxu0 0
    %678 = vmatprep.subr.bf16.mxu0 0
    %679 = vmatpush1.bf16.msra.mxu0 0
    %680 = vmatprep.subr.bf16.mxu0 0
    %681 = vmatpush1.bf16.msra.mxu0 0
    %682 = vmatprep.subr.bf16.mxu0 0
    %683 = vmatpush1.bf16.msra.mxu0 %v354
    %684 = vmatprep.subr.bf16.mxu0 0
    %685 = vmatpush1.bf16.msra.mxu0 %v353
    %686 = vmatprep.subr.bf16.mxu0 0
    %687 = vmatpush2.bf16.msra.mxu0 0
    %688 = vmatprep.subr.bf16.mxu0 0
    %689 = vmatpush2.bf16.msra.mxu0 0
    %690 = vmatprep.subr.bf16.mxu0 0
    %691 = vmatpush2.bf16.msra.mxu0 0
    %692 = vmatprep.subr.bf16.mxu0 0
    %693 = vmatpush2.bf16.msra.mxu0 0
    %694 = vmatprep.subr.bf16.mxu0 0
    %695 = vmatpush2.bf16.msra.mxu0 0
    %696 = vmatprep.subr.bf16.mxu0 0
    %697 = vmatpush2.bf16.msra.mxu0 0
    %698 = vmatprep.subr.bf16.mxu0 0
    %699 = vmatpush2.bf16.msra.mxu0 0
    %700 = vmatprep.subr.bf16.mxu0 0
    %701 = vmatpush2.bf16.msra.mxu0 0
    %702 = vmatprep.mubr.bf16.mxu0 0
    %703 = vmatmul.mubr.bf16.gmra.mxu0 %v668
    %v704 = vpop.f32.mrf.mxu0
    %v705 = vadd.f32 0.0, %v704
    %v706 = vpop.f32.mrf.mxu0
    %v707 = vpop.f32.mrf.mxu0
    %v708 = vpop.f32.mrf.mxu0
    %709 = vdwg.mxu0
    %v710 = vadd.f32 %v662, %v705
    %v711 = vxor.u32 %v661, 2147483648
    %v712 = vmul.f32 %v711, 1.442695
    %v713 = vpow.pop %v712
    %v714 = vadd.f32 %v713, 1.0
    %v715 = vrcp.pop %v714
    %v716 = vmul.f32 1.0, %v715
    %v717 = vtanh.pop %v661
    %v718 = vmul.f32 %v716, %v572
    %720 = vrot.lane.b32.xlu0 %v717, 64
    %v721 = vpop.permute.xlu0 %720
    %v723 = vmul.f32 %v716, %v721
    %725 = vrot.lane.b32.xlu0 %v723, 32
    %v726 = vpop.permute.xlu0 %725
    %v728 = vadd.f32 %v718, %v726
    %v729 = vtanh.pop %v728
    %731 = vrot.lane.b32.xlu0 %v729, 64
    %v732 = vpop.permute.xlu0 %731
    %v734 = vmul.f32 %v716, %v732
    %v735 = vxor.u32 %v710, 2147483648
    %v736 = vmul.f32 %v735, 1.442695
    %v737 = vpow.pop %v736
    %v738 = vadd.f32 %v737, 1.0
    %v739 = vrcp.pop %v738
    %v740 = vmul.f32 1.0, %v739
    %v741 = vtanh.pop %v710
    %v742 = vmul.f32 %v740, %v596
    %744 = vrot.lane.b32.xlu0 %v741, 64
    %v745 = vpop.permute.xlu0 %744
    %v747 = vmul.f32 %v740, %v745
    %749 = vrot.lane.b32.xlu0 %v747, 32
    %v750 = vpop.permute.xlu0 %749
    %v752 = vadd.f32 %v742, %v750
    %v753 = vtanh.pop %v752
    %755 = vrot.lane.b32.xlu0 %v753, 64
    %v756 = vpop.permute.xlu0 %755
    %v758 = vmul.f32 %v740, %v756
    %760 = vrot.lane.b32.xlu0 %v734, 32
    %v761 = vpop.permute.xlu0 %760
    %763 = vst.msk [vmem:[#allocation2 + $0x4] sm:$0x3] %vm450, %v761
    %765 = vrot.lane.b32.xlu0 %v758, 32
    %v766 = vpop.permute.xlu0 %765
    %768 = vst.msk [vmem:[#allocation3 + $0xa] sm:$0x3] %vm450, %v766
    %v769 = vld [vmem:[#allocation4 + $0x6] sm:$0x3]
    %v770 = vpack.c.bf16 %v734, %v734
    %772 = vrot.lane.b32.xlu0 %v770, 32
    %v773 = vpop.permute.xlu0 %772
    %v775 = vsel %vm299, %v773, 0
    %777 = vmatprep.subr.bf16.mxu0 0
    %778 = vmatpush1.bf16.msra.mxu0 0
    %779 = vmatprep.subr.bf16.mxu0 0
    %780 = vmatpush1.bf16.msra.mxu0 0
    %781 = vmatprep.subr.bf16.mxu0 0
    %782 = vmatpush1.bf16.msra.mxu0 0
    %783 = vmatprep.subr.bf16.mxu0 0
    %784 = vmatpush1.bf16.msra.mxu0 0
    %785 = vmatprep.subr.bf16.mxu0 0
    %786 = vmatpush1.bf16.msra.mxu0 0
    %787 = vmatprep.subr.bf16.mxu0 0
    %788 = vmatpush1.bf16.msra.mxu0 0
    %789 = vmatprep.subr.bf16.mxu0 0
    %790 = vmatpush1.bf16.msra.mxu0 %v296
    %791 = vmatprep.subr.bf16.mxu0 0
    %792 = vmatpush1.bf16.msra.mxu0 %v295
    %793 = vmatprep.subr.bf16.mxu0 0
    %794 = vmatpush2.bf16.msra.mxu0 0
    %795 = vmatprep.subr.bf16.mxu0 0
    %796 = vmatpush2.bf16.msra.mxu0 0
    %797 = vmatprep.subr.bf16.mxu0 0
    %798 = vmatpush2.bf16.msra.mxu0 0
    %799 = vmatprep.subr.bf16.mxu0 0
    %800 = vmatpush2.bf16.msra.mxu0 0
    %801 = vmatprep.subr.bf16.mxu0 0
    %802 = vmatpush2.bf16.msra.mxu0 0
    %803 = vmatprep.subr.bf16.mxu0 0
    %804 = vmatpush2.bf16.msra.mxu0 0
    %805 = vmatprep.subr.bf16.mxu0 0
    %806 = vmatpush2.bf16.msra.mxu0 0
    %807 = vmatprep.subr.bf16.mxu0 0
    %808 = vmatpush2.bf16.msra.mxu0 0
    %809 = vmatprep.mubr.bf16.mxu0 0
    %810 = vmatmul.mubr.bf16.gmra.mxu0 %v775
    %v811 = vpop.f32.mrf.mxu0
    %v812 = vadd.f32 0.0, %v811
    %v813 = vpop.f32.mrf.mxu0
    %v814 = vpop.f32.mrf.mxu0
    %v815 = vpop.f32.mrf.mxu0
    %816 = vdwg.mxu0
    %v817 = vadd.f32 %v769, %v812
    %v818 = vld [vmem:[#allocation5 + $0x8] sm:$0x3]
    %v819 = vpack.c.bf16 %v758, %v758
    %821 = vrot.lane.b32.xlu0 %v819, 32
    %v822 = vpop.permute.xlu0 %821
    %v824 = vsel %vm299, %v822, 0
    %826 = vmatprep.subr.bf16.mxu0 0
    %827 = vmatpush1.bf16.msra.mxu0 0
    %828 = vmatprep.subr.bf16.mxu0 0
    %829 = vmatpush1.bf16.msra.mxu0 0
    %830 = vmatprep.subr.bf16.mxu0 0
    %831 = vmatpush1.bf16.msra.mxu0 0
    %832 = vmatprep.subr.bf16.mxu0 0
    %833 = vmatpush1.bf16.msra.mxu0 0
    %834 = vmatprep.subr.bf16.mxu0 0
    %835 = vmatpush1.bf16.msra.mxu0 0
    %836 = vmatprep.subr.bf16.mxu0 0
    %837 = vmatpush1.bf16.msra.mxu0 0
    %838 = vmatprep.subr.bf16.mxu0 0
    %839 = vmatpush1.bf16.msra.mxu0 %v354
    %840 = vmatprep.subr.bf16.mxu0 0
    %841 = vmatpush1.bf16.msra.mxu0 %v353
    %842 = vmatprep.subr.bf16.mxu0 0
    %843 = vmatpush2.bf16.msra.mxu0 0
    %844 = vmatprep.subr.bf16.mxu0 0
    %845 = vmatpush2.bf16.msra.mxu0 0
    %846 = vmatprep.subr.bf16.mxu0 0
    %847 = vmatpush2.bf16.msra.mxu0 0
    %848 = vmatprep.subr.bf16.mxu0 0
    %849 = vmatpush2.bf16.msra.mxu0 0
    %850 = vmatprep.subr.bf16.mxu0 0
    %851 = vmatpush2.bf16.msra.mxu0 0
    %852 = vmatprep.subr.bf16.mxu0 0
    %853 = vmatpush2.bf16.msra.mxu0 0
    %854 = vmatprep.subr.bf16.mxu0 0
    %855 = vmatpush2.bf16.msra.mxu0 0
    %856 = vmatprep.subr.bf16.mxu0 0
    %857 = vmatpush2.bf16.msra.mxu0 0
    %858 = vmatprep.mubr.bf16.mxu0 0
    %859 = vmatmul.mubr.bf16.gmra.mxu0 %v824
    %v860 = vpop.f32.mrf.mxu0
    %v861 = vadd.f32 0.0, %v860
    %v862 = vpop.f32.mrf.mxu0
    %v863 = vpop.f32.mrf.mxu0
    %v864 = vpop.f32.mrf.mxu0
    %865 = vdwg.mxu0
    %v866 = vadd.f32 %v818, %v861
    %v867 = vxor.u32 %v817, 2147483648
    %v868 = vmul.f32 %v867, 1.442695
    %v869 = vpow.pop %v868
    %v870 = vadd.f32 %v869, 1.0
    %v871 = vrcp.pop %v870
    %v872 = vmul.f32 1.0, %v871
    %v873 = vtanh.pop %v817
    %v874 = vmul.f32 %v872, %v728
    %876 = vrot.lane.b32.xlu0 %v873, 64
    %v877 = vpop.permute.xlu0 %876
    %v879 = vmul.f32 %v872, %v877
    %881 = vrot.lane.b32.xlu0 %v879, 32
    %v882 = vpop.permute.xlu0 %881
    %v884 = vadd.f32 %v874, %v882
    %v885 = vtanh.pop %v884
    %887 = vrot.lane.b32.xlu0 %v885, 64
    %v888 = vpop.permute.xlu0 %887
    %v890 = vmul.f32 %v872, %v888
    %v891 = vxor.u32 %v866, 2147483648
    %v892 = vmul.f32 %v891, 1.442695
    %v893 = vpow.pop %v892
    %v894 = vadd.f32 %v893, 1.0
    %v895 = vrcp.pop %v894
    %v896 = vmul.f32 1.0, %v895
    %v897 = vtanh.pop %v866
    %v898 = vmul.f32 %v896, %v752
    %900 = vrot.lane.b32.xlu0 %v897, 64
    %v901 = vpop.permute.xlu0 %900
    %v903 = vmul.f32 %v896, %v901
    %905 = vrot.lane.b32.xlu0 %v903, 32
    %v906 = vpop.permute.xlu0 %905
    %v908 = vadd.f32 %v898, %v906
    %v909 = vtanh.pop %v908
    %911 = vrot.lane.b32.xlu0 %v909, 64
    %v912 = vpop.permute.xlu0 %911
    %v914 = vmul.f32 %v896, %v912
    %916 = vrot.lane.b32.xlu0 %v890, 32
    %v917 = vpop.permute.xlu0 %916
    %919 = vst.msk [vmem:[#allocation2 + $0x6] sm:$0x3] %vm450, %v917
    %921 = vrot.lane.b32.xlu0 %v914, 32
    %v922 = vpop.permute.xlu0 %921
    %924 = vst.msk [vmem:[#allocation3 + $0x8] sm:$0x3] %vm450, %v922
    %v925 = vld [vmem:[#allocation4 + $0x8] sm:$0x3]
    %v926 = vpack.c.bf16 %v890, %v890
    %928 = vrot.lane.b32.xlu0 %v926, 32
    %v929 = vpop.permute.xlu0 %928
    %v931 = vsel %vm299, %v929, 0
    %933 = vmatprep.subr.bf16.mxu0 0
    %934 = vmatpush1.bf16.msra.mxu0 0
    %935 = vmatprep.subr.bf16.mxu0 0
    %936 = vmatpush1.bf16.msra.mxu0 0
    %937 = vmatprep.subr.bf16.mxu0 0
    %938 = vmatpush1.bf16.msra.mxu0 0
    %939 = vmatprep.subr.bf16.mxu0 0
    %940 = vmatpush1.bf16.msra.mxu0 0
    %941 = vmatprep.subr.bf16.mxu0 0
    %942 = vmatpush1.bf16.msra.mxu0 0
    %943 = vmatprep.subr.bf16.mxu0 0
    %944 = vmatpush1.bf16.msra.mxu0 0
    %945 = vmatprep.subr.bf16.mxu0 0
    %946 = vmatpush1.bf16.msra.mxu0 %v296
    %947 = vmatprep.subr.bf16.mxu0 0
    %948 = vmatpush1.bf16.msra.mxu0 %v295
    %949 = vmatprep.subr.bf16.mxu0 0
    %950 = vmatpush2.bf16.msra.mxu0 0
    %951 = vmatprep.subr.bf16.mxu0 0
    %952 = vmatpush2.bf16.msra.mxu0 0
    %953 = vmatprep.subr.bf16.mxu0 0
    %954 = vmatpush2.bf16.msra.mxu0 0
    %955 = vmatprep.subr.bf16.mxu0 0
    %956 = vmatpush2.bf16.msra.mxu0 0
    %957 = vmatprep.subr.bf16.mxu0 0
    %958 = vmatpush2.bf16.msra.mxu0 0
    %959 = vmatprep.subr.bf16.mxu0 0
    %960 = vmatpush2.bf16.msra.mxu0 0
    %961 = vmatprep.subr.bf16.mxu0 0
    %962 = vmatpush2.bf16.msra.mxu0 0
    %963 = vmatprep.subr.bf16.mxu0 0
    %964 = vmatpush2.bf16.msra.mxu0 0
    %965 = vmatprep.mubr.bf16.mxu0 0
    %966 = vmatmul.mubr.bf16.gmra.mxu0 %v931
    %v967 = vpop.f32.mrf.mxu0
    %v968 = vadd.f32 0.0, %v967
    %v969 = vpop.f32.mrf.mxu0
    %v970 = vpop.f32.mrf.mxu0
    %v971 = vpop.f32.mrf.mxu0
    %972 = vdwg.mxu0
    %v973 = vadd.f32 %v925, %v968
    %v974 = vld [vmem:[#allocation5 + $0x6] sm:$0x3]
    %v975 = vpack.c.bf16 %v914, %v914
    %977 = vrot.lane.b32.xlu0 %v975, 32
    %v978 = vpop.permute.xlu0 %977
    %v980 = vsel %vm299, %v978, 0
    %982 = vmatprep.subr.bf16.mxu0 0
    %983 = vmatpush1.bf16.msra.mxu0 0
    %984 = vmatprep.subr.bf16.mxu0 0
    %985 = vmatpush1.bf16.msra.mxu0 0
    %986 = vmatprep.subr.bf16.mxu0 0
    %987 = vmatpush1.bf16.msra.mxu0 0
    %988 = vmatprep.subr.bf16.mxu0 0
    %989 = vmatpush1.bf16.msra.mxu0 0
    %990 = vmatprep.subr.bf16.mxu0 0
    %991 = vmatpush1.bf16.msra.mxu0 0
    %992 = vmatprep.subr.bf16.mxu0 0
    %993 = vmatpush1.bf16.msra.mxu0 0
    %994 = vmatprep.subr.bf16.mxu0 0
    %995 = vmatpush1.bf16.msra.mxu0 %v354
    %996 = vmatprep.subr.bf16.mxu0 0
    %997 = vmatpush1.bf16.msra.mxu0 %v353
    %998 = vmatprep.subr.bf16.mxu0 0
    %999 = vmatpush2.bf16.msra.mxu0 0
    %1000 = vmatprep.subr.bf16.mxu0 0
    %1001 = vmatpush2.bf16.msra.mxu0 0
    %1002 = vmatprep.subr.bf16.mxu0 0
    %1003 = vmatpush2.bf16.msra.mxu0 0
    %1004 = vmatprep.subr.bf16.mxu0 0
    %1005 = vmatpush2.bf16.msra.mxu0 0
    %1006 = vmatprep.subr.bf16.mxu0 0
    %1007 = vmatpush2.bf16.msra.mxu0 0
    %1008 = vmatprep.subr.bf16.mxu0 0
    %1009 = vmatpush2.bf16.msra.mxu0 0
    %1010 = vmatprep.subr.bf16.mxu0 0
    %1011 = vmatpush2.bf16.msra.mxu0 0
    %1012 = vmatprep.subr.bf16.mxu0 0
    %1013 = vmatpush2.bf16.msra.mxu0 0
    %1014 = vmatprep.mubr.bf16.mxu0 0
    %1015 = vmatmul.mubr.bf16.gmra.mxu0 %v980
    %v1016 = vpop.f32.mrf.mxu0
    %v1017 = vadd.f32 0.0, %v1016
    %v1018 = vpop.f32.mrf.mxu0
    %v1019 = vpop.f32.mrf.mxu0
    %v1020 = vpop.f32.mrf.mxu0
    %1021 = vdwg.mxu0
    %v1022 = vadd.f32 %v974, %v1017
    %v1023 = vxor.u32 %v973, 2147483648
    %v1024 = vmul.f32 %v1023, 1.442695
    %v1025 = vpow.pop %v1024
    %v1026 = vadd.f32 %v1025, 1.0
    %v1027 = vrcp.pop %v1026
    %v1028 = vmul.f32 1.0, %v1027
    %v1029 = vtanh.pop %v973
    %v1030 = vmul.f32 %v1028, %v884
    %1032 = vrot.lane.b32.xlu0 %v1029, 64
    %v1033 = vpop.permute.xlu0 %1032
    %v1035 = vmul.f32 %v1028, %v1033
    %1037 = vrot.lane.b32.xlu0 %v1035, 32
    %v1038 = vpop.permute.xlu0 %1037
    %v1040 = vadd.f32 %v1030, %v1038
    %v1041 = vtanh.pop %v1040
    %1043 = vrot.lane.b32.xlu0 %v1041, 64
    %v1044 = vpop.permute.xlu0 %1043
    %v1046 = vmul.f32 %v1028, %v1044
    %v1047 = vxor.u32 %v1022, 2147483648
    %v1048 = vmul.f32 %v1047, 1.442695
    %v1049 = vpow.pop %v1048
    %v1050 = vadd.f32 %v1049, 1.0
    %v1051 = vrcp.pop %v1050
    %v1052 = vmul.f32 1.0, %v1051
    %v1053 = vtanh.pop %v1022
    %v1054 = vmul.f32 %v1052, %v908
    %1056 = vrot.lane.b32.xlu0 %v1053, 64
    %v1057 = vpop.permute.xlu0 %1056
    %v1059 = vmul.f32 %v1052, %v1057
    %1061 = vrot.lane.b32.xlu0 %v1059, 32
    %v1062 = vpop.permute.xlu0 %1061
    %v1064 = vadd.f32 %v1054, %v1062
    %v1065 = vtanh.pop %v1064
    %1067 = vrot.lane.b32.xlu0 %v1065, 64
    %v1068 = vpop.permute.xlu0 %1067
    %v1070 = vmul.f32 %v1052, %v1068
    %1072 = vrot.lane.b32.xlu0 %v1046, 32
    %v1073 = vpop.permute.xlu0 %1072
    %1075 = vst.msk [vmem:[#allocation2 + $0x8] sm:$0x3] %vm450, %v1073
    %1077 = vrot.lane.b32.xlu0 %v1070, 32
    %v1078 = vpop.permute.xlu0 %1077
    %1080 = vst.msk [vmem:[#allocation3 + $0x6] sm:$0x3] %vm450, %v1078
    %v1081 = vld [vmem:[#allocation4 + $0xa] sm:$0x3]
    %v1082 = vpack.c.bf16 %v1046, %v1046
    %1084 = vrot.lane.b32.xlu0 %v1082, 32
    %v1085 = vpop.permute.xlu0 %1084
    %v1087 = vsel %vm299, %v1085, 0
    %1089 = vmatprep.subr.bf16.mxu0 0
    %1090 = vmatpush1.bf16.msra.mxu0 0
    %1091 = vmatprep.subr.bf16.mxu0 0
    %1092 = vmatpush1.bf16.msra.mxu0 0
    %1093 = vmatprep.subr.bf16.mxu0 0
    %1094 = vmatpush1.bf16.msra.mxu0 0
    %1095 = vmatprep.subr.bf16.mxu0 0
    %1096 = vmatpush1.bf16.msra.mxu0 0
    %1097 = vmatprep.subr.bf16.mxu0 0
    %1098 = vmatpush1.bf16.msra.mxu0 0
    %1099 = vmatprep.subr.bf16.mxu0 0
    %1100 = vmatpush1.bf16.msra.mxu0 0
    %1101 = vmatprep.subr.bf16.mxu0 0
    %1102 = vmatpush1.bf16.msra.mxu0 %v296
    %1103 = vmatprep.subr.bf16.mxu0 0
    %1104 = vmatpush1.bf16.msra.mxu0 %v295
    %1105 = vmatprep.subr.bf16.mxu0 0
    %1106 = vmatpush2.bf16.msra.mxu0 0
    %1107 = vmatprep.subr.bf16.mxu0 0
    %1108 = vmatpush2.bf16.msra.mxu0 0
    %1109 = vmatprep.subr.bf16.mxu0 0
    %1110 = vmatpush2.bf16.msra.mxu0 0
    %1111 = vmatprep.subr.bf16.mxu0 0
    %1112 = vmatpush2.bf16.msra.mxu0 0
    %1113 = vmatprep.subr.bf16.mxu0 0
    %1114 = vmatpush2.bf16.msra.mxu0 0
    %1115 = vmatprep.subr.bf16.mxu0 0
    %1116 = vmatpush2.bf16.msra.mxu0 0
    %1117 = vmatprep.subr.bf16.mxu0 0
    %1118 = vmatpush2.bf16.msra.mxu0 0
    %1119 = vmatprep.subr.bf16.mxu0 0
    %1120 = vmatpush2.bf16.msra.mxu0 0
    %1121 = vmatprep.mubr.bf16.mxu0 0
    %1122 = vmatmul.mubr.bf16.gmra.mxu0 %v1087
    %v1123 = vpop.f32.mrf.mxu0
    %v1124 = vadd.f32 0.0, %v1123
    %v1125 = vpop.f32.mrf.mxu0
    %v1126 = vpop.f32.mrf.mxu0
    %v1127 = vpop.f32.mrf.mxu0
    %1128 = vdwg.mxu0
    %v1129 = vadd.f32 %v1081, %v1124
    %v1130 = vld [vmem:[#allocation5 + $0x4] sm:$0x3]
    %v1131 = vpack.c.bf16 %v1070, %v1070
    %1133 = vrot.lane.b32.xlu0 %v1131, 32
    %v1134 = vpop.permute.xlu0 %1133
    %v1136 = vsel %vm299, %v1134, 0
    %1138 = vmatprep.subr.bf16.mxu0 0
    %1139 = vmatpush1.bf16.msra.mxu0 0
    %1140 = vmatprep.subr.bf16.mxu0 0
    %1141 = vmatpush1.bf16.msra.mxu0 0
    %1142 = vmatprep.subr.bf16.mxu0 0
    %1143 = vmatpush1.bf16.msra.mxu0 0
    %1144 = vmatprep.subr.bf16.mxu0 0
    %1145 = vmatpush1.bf16.msra.mxu0 0
    %1146 = vmatprep.subr.bf16.mxu0 0
    %1147 = vmatpush1.bf16.msra.mxu0 0
    %1148 = vmatprep.subr.bf16.mxu0 0
    %1149 = vmatpush1.bf16.msra.mxu0 0
    %1150 = vmatprep.subr.bf16.mxu0 0
    %1151 = vmatpush1.bf16.msra.mxu0 %v354
    %1152 = vmatprep.subr.bf16.mxu0 0
    %1153 = vmatpush1.bf16.msra.mxu0 %v353
    %1154 = vmatprep.subr.bf16.mxu0 0
    %1155 = vmatpush2.bf16.msra.mxu0 0
    %1156 = vmatprep.subr.bf16.mxu0 0
    %1157 = vmatpush2.bf16.msra.mxu0 0
    %1158 = vmatprep.subr.bf16.mxu0 0
    %1159 = vmatpush2.bf16.msra.mxu0 0
    %1160 = vmatprep.subr.bf16.mxu0 0
    %1161 = vmatpush2.bf16.msra.mxu0 0
    %1162 = vmatprep.subr.bf16.mxu0 0
    %1163 = vmatpush2.bf16.msra.mxu0 0
    %1164 = vmatprep.subr.bf16.mxu0 0
    %1165 = vmatpush2.bf16.msra.mxu0 0
    %1166 = vmatprep.subr.bf16.mxu0 0
    %1167 = vmatpush2.bf16.msra.mxu0 0
    %1168 = vmatprep.subr.bf16.mxu0 0
    %1169 = vmatpush2.bf16.msra.mxu0 0
    %1170 = vmatprep.mubr.bf16.mxu0 0
    %1171 = vmatmul.mubr.bf16.gmra.mxu0 %v1136
    %v1172 = vpop.f32.mrf.mxu0
    %v1173 = vadd.f32 0.0, %v1172
    %v1174 = vpop.f32.mrf.mxu0
    %v1175 = vpop.f32.mrf.mxu0
    %v1176 = vpop.f32.mrf.mxu0
    %1177 = vdwg.mxu0
    %v1178 = vadd.f32 %v1130, %v1173
    %v1179 = vxor.u32 %v1129, 2147483648
    %v1180 = vmul.f32 %v1179, 1.442695
    %v1181 = vpow.pop %v1180
    %v1182 = vadd.f32 %v1181, 1.0
    %v1183 = vrcp.pop %v1182
    %v1184 = vmul.f32 1.0, %v1183
    %v1185 = vtanh.pop %v1129
    %v1186 = vmul.f32 %v1184, %v1040
    %1188 = vrot.lane.b32.xlu0 %v1185, 64
    %v1189 = vpop.permute.xlu0 %1188
    %v1191 = vmul.f32 %v1184, %v1189
    %1193 = vrot.lane.b32.xlu0 %v1191, 32
    %v1194 = vpop.permute.xlu0 %1193
    %v1196 = vadd.f32 %v1186, %v1194
    %v1197 = vtanh.pop %v1196
    %1199 = vrot.lane.b32.xlu0 %v1197, 64
    %v1200 = vpop.permute.xlu0 %1199
    %v1202 = vmul.f32 %v1184, %v1200
    %v1203 = vxor.u32 %v1178, 2147483648
    %v1204 = vmul.f32 %v1203, 1.442695
    %v1205 = vpow.pop %v1204
    %v1206 = vadd.f32 %v1205, 1.0
    %v1207 = vrcp.pop %v1206
    %v1208 = vmul.f32 1.0, %v1207
    %v1209 = vtanh.pop %v1178
    %v1210 = vmul.f32 %v1208, %v1064
    %1212 = vrot.lane.b32.xlu0 %v1209, 64
    %v1213 = vpop.permute.xlu0 %1212
    %v1215 = vmul.f32 %v1208, %v1213
    %1217 = vrot.lane.b32.xlu0 %v1215, 32
    %v1218 = vpop.permute.xlu0 %1217
    %v1220 = vadd.f32 %v1210, %v1218
    %v1221 = vtanh.pop %v1220
    %1223 = vrot.lane.b32.xlu0 %v1221, 64
    %v1224 = vpop.permute.xlu0 %1223
    %v1226 = vmul.f32 %v1208, %v1224
    %1228 = vrot.lane.b32.xlu0 %v1202, 32
    %v1229 = vpop.permute.xlu0 %1228
    %1231 = vst.msk [vmem:[#allocation2 + $0xa] sm:$0x3] %vm450, %v1229
    %1233 = vrot.lane.b32.xlu0 %v1226, 32
    %v1234 = vpop.permute.xlu0 %1233
    %1236 = vst.msk [vmem:[#allocation3 + $0x4] sm:$0x3] %vm450, %v1234
    %v1237 = vld [vmem:[#allocation4 + $0xc] sm:$0x3]
    %v1238 = vpack.c.bf16 %v1202, %v1202
    %1240 = vrot.lane.b32.xlu0 %v1238, 32
    %v1241 = vpop.permute.xlu0 %1240
    %v1243 = vsel %vm299, %v1241, 0
    %1245 = vmatprep.subr.bf16.mxu0 0
    %1246 = vmatpush1.bf16.msra.mxu0 0
    %1247 = vmatprep.subr.bf16.mxu0 0
    %1248 = vmatpush1.bf16.msra.mxu0 0
    %1249 = vmatprep.subr.bf16.mxu0 0
    %1250 = vmatpush1.bf16.msra.mxu0 0
    %1251 = vmatprep.subr.bf16.mxu0 0
    %1252 = vmatpush1.bf16.msra.mxu0 0
    %1253 = vmatprep.subr.bf16.mxu0 0
    %1254 = vmatpush1.bf16.msra.mxu0 0
    %1255 = vmatprep.subr.bf16.mxu0 0
    %1256 = vmatpush1.bf16.msra.mxu0 0
    %1257 = vmatprep.subr.bf16.mxu0 0
    %1258 = vmatpush1.bf16.msra.mxu0 %v296
    %1259 = vmatprep.subr.bf16.mxu0 0
    %1260 = vmatpush1.bf16.msra.mxu0 %v295
    %1261 = vmatprep.subr.bf16.mxu0 0
    %1262 = vmatpush2.bf16.msra.mxu0 0
    %1263 = vmatprep.subr.bf16.mxu0 0
    %1264 = vmatpush2.bf16.msra.mxu0 0
    %1265 = vmatprep.subr.bf16.mxu0 0
    %1266 = vmatpush2.bf16.msra.mxu0 0
    %1267 = vmatprep.subr.bf16.mxu0 0
    %1268 = vmatpush2.bf16.msra.mxu0 0
    %1269 = vmatprep.subr.bf16.mxu0 0
    %1270 = vmatpush2.bf16.msra.mxu0 0
    %1271 = vmatprep.subr.bf16.mxu0 0
    %1272 = vmatpush2.bf16.msra.mxu0 0
    %1273 = vmatprep.subr.bf16.mxu0 0
    %1274 = vmatpush2.bf16.msra.mxu0 0
    %1275 = vmatprep.subr.bf16.mxu0 0
    %1276 = vmatpush2.bf16.msra.mxu0 0
    %1277 = vmatprep.mubr.bf16.mxu0 0
    %1278 = vmatmul.mubr.bf16.gmra.mxu0 %v1243
    %v1279 = vpop.f32.mrf.mxu0
    %v1280 = vadd.f32 0.0, %v1279
    %v1281 = vpop.f32.mrf.mxu0
    %v1282 = vpop.f32.mrf.mxu0
    %v1283 = vpop.f32.mrf.mxu0
    %1284 = vdwg.mxu0
    %v1285 = vadd.f32 %v1237, %v1280
    %v1286 = vld [vmem:[#allocation5 + $0x2] sm:$0x3]
    %v1287 = vpack.c.bf16 %v1226, %v1226
    %1289 = vrot.lane.b32.xlu0 %v1287, 32
    %v1290 = vpop.permute.xlu0 %1289
    %v1292 = vsel %vm299, %v1290, 0
    %1294 = vmatprep.subr.bf16.mxu0 0
    %1295 = vmatpush1.bf16.msra.mxu0 0
    %1296 = vmatprep.subr.bf16.mxu0 0
    %1297 = vmatpush1.bf16.msra.mxu0 0
    %1298 = vmatprep.subr.bf16.mxu0 0
    %1299 = vmatpush1.bf16.msra.mxu0 0
    %1300 = vmatprep.subr.bf16.mxu0 0
    %1301 = vmatpush1.bf16.msra.mxu0 0
    %1302 = vmatprep.subr.bf16.mxu0 0
    %1303 = vmatpush1.bf16.msra.mxu0 0
    %1304 = vmatprep.subr.bf16.mxu0 0
    %1305 = vmatpush1.bf16.msra.mxu0 0
    %1306 = vmatprep.subr.bf16.mxu0 0
    %1307 = vmatpush1.bf16.msra.mxu0 %v354
    %1308 = vmatprep.subr.bf16.mxu0 0
    %1309 = vmatpush1.bf16.msra.mxu0 %v353
    %1310 = vmatprep.subr.bf16.mxu0 0
    %1311 = vmatpush2.bf16.msra.mxu0 0
    %1312 = vmatprep.subr.bf16.mxu0 0
    %1313 = vmatpush2.bf16.msra.mxu0 0
    %1314 = vmatprep.subr.bf16.mxu0 0
    %1315 = vmatpush2.bf16.msra.mxu0 0
    %1316 = vmatprep.subr.bf16.mxu0 0
    %1317 = vmatpush2.bf16.msra.mxu0 0
    %1318 = vmatprep.subr.bf16.mxu0 0
    %1319 = vmatpush2.bf16.msra.mxu0 0
    %1320 = vmatprep.subr.bf16.mxu0 0
    %1321 = vmatpush2.bf16.msra.mxu0 0
    %1322 = vmatprep.subr.bf16.mxu0 0
    %1323 = vmatpush2.bf16.msra.mxu0 0
    %1324 = vmatprep.subr.bf16.mxu0 0
    %1325 = vmatpush2.bf16.msra.mxu0 0
    %1326 = vmatprep.mubr.bf16.mxu0 0
    %1327 = vmatmul.mubr.bf16.gmra.mxu0 %v1292
    %v1328 = vpop.f32.mrf.mxu0
    %v1329 = vadd.f32 0.0, %v1328
    %v1330 = vpop.f32.mrf.mxu0
    %v1331 = vpop.f32.mrf.mxu0
    %v1332 = vpop.f32.mrf.mxu0
    %1333 = vdwg.mxu0
    %v1334 = vadd.f32 %v1286, %v1329
    %v1335 = vxor.u32 %v1285, 2147483648
    %v1336 = vmul.f32 %v1335, 1.442695
    %v1337 = vpow.pop %v1336
    %v1338 = vadd.f32 %v1337, 1.0
    %v1339 = vrcp.pop %v1338
    %v1340 = vmul.f32 1.0, %v1339
    %v1341 = vtanh.pop %v1285
    %v1342 = vmul.f32 %v1340, %v1196
    %1344 = vrot.lane.b32.xlu0 %v1341, 64
    %v1345 = vpop.permute.xlu0 %1344
    %v1347 = vmul.f32 %v1340, %v1345
    %1349 = vrot.lane.b32.xlu0 %v1347, 32
    %v1350 = vpop.permute.xlu0 %1349
    %v1352 = vadd.f32 %v1342, %v1350
    %v1353 = vtanh.pop %v1352
    %1355 = vrot.lane.b32.xlu0 %v1353, 64
    %v1356 = vpop.permute.xlu0 %1355
    %v1358 = vmul.f32 %v1340, %v1356
    %v1359 = vxor.u32 %v1334, 2147483648
    %v1360 = vmul.f32 %v1359, 1.442695
    %v1361 = vpow.pop %v1360
    %v1362 = vadd.f32 %v1361, 1.0
    %v1363 = vrcp.pop %v1362
    %v1364 = vmul.f32 1.0, %v1363
    %v1365 = vtanh.pop %v1334
    %v1366 = vmul.f32 %v1364, %v1220
    %1368 = vrot.lane.b32.xlu0 %v1365, 64
    %v1369 = vpop.permute.xlu0 %1368
    %v1371 = vmul.f32 %v1364, %v1369
    %1373 = vrot.lane.b32.xlu0 %v1371, 32
    %v1374 = vpop.permute.xlu0 %1373
    %v1376 = vadd.f32 %v1366, %v1374
    %v1377 = vtanh.pop %v1376
    %1379 = vrot.lane.b32.xlu0 %v1377, 64
    %v1380 = vpop.permute.xlu0 %1379
    %v1382 = vmul.f32 %v1364, %v1380
    %1384 = vrot.lane.b32.xlu0 %v1358, 32
    %v1385 = vpop.permute.xlu0 %1384
    %1387 = vst.msk [vmem:[#allocation2 + $0xc] sm:$0x3] %vm450, %v1385
    %1389 = vrot.lane.b32.xlu0 %v1382, 32
    %v1390 = vpop.permute.xlu0 %1389
    %1392 = vst.msk [vmem:[#allocation3 + $0x2] sm:$0x3] %vm450, %v1390
    %v1393 = vld [vmem:[#allocation4 + $0xe] sm:$0x3]
    %v1394 = vpack.c.bf16 %v1358, %v1358
    %1396 = vrot.lane.b32.xlu0 %v1394, 32
    %v1397 = vpop.permute.xlu0 %1396
    %v1399 = vsel %vm299, %v1397, 0
    %1401 = vmatprep.subr.bf16.mxu0 0
    %1402 = vmatpush1.bf16.msra.mxu0 0
    %1403 = vmatprep.subr.bf16.mxu0 0
    %1404 = vmatpush1.bf16.msra.mxu0 0
    %1405 = vmatprep.subr.bf16.mxu0 0
    %1406 = vmatpush1.bf16.msra.mxu0 0
    %1407 = vmatprep.subr.bf16.mxu0 0
    %1408 = vmatpush1.bf16.msra.mxu0 0
    %1409 = vmatprep.subr.bf16.mxu0 0
    %1410 = vmatpush1.bf16.msra.mxu0 0
    %1411 = vmatprep.subr.bf16.mxu0 0
    %1412 = vmatpush1.bf16.msra.mxu0 0
    %1413 = vmatprep.subr.bf16.mxu0 0
    %1414 = vmatpush1.bf16.msra.mxu0 %v296
    %1415 = vmatprep.subr.bf16.mxu0 0
    %1416 = vmatpush1.bf16.msra.mxu0 %v295
    %1417 = vmatprep.subr.bf16.mxu0 0
    %1418 = vmatpush2.bf16.msra.mxu0 0
    %1419 = vmatprep.subr.bf16.mxu0 0
    %1420 = vmatpush2.bf16.msra.mxu0 0
    %1421 = vmatprep.subr.bf16.mxu0 0
    %1422 = vmatpush2.bf16.msra.mxu0 0
    %1423 = vmatprep.subr.bf16.mxu0 0
    %1424 = vmatpush2.bf16.msra.mxu0 0
    %1425 = vmatprep.subr.bf16.mxu0 0
    %1426 = vmatpush2.bf16.msra.mxu0 0
    %1427 = vmatprep.subr.bf16.mxu0 0
    %1428 = vmatpush2.bf16.msra.mxu0 0
    %1429 = vmatprep.subr.bf16.mxu0 0
    %1430 = vmatpush2.bf16.msra.mxu0 0
    %1431 = vmatprep.subr.bf16.mxu0 0
    %1432 = vmatpush2.bf16.msra.mxu0 0
    %1433 = vmatprep.mubr.bf16.mxu0 0
    %1434 = vmatmul.mubr.bf16.gmra.mxu0 %v1399
    %v1435 = vpop.f32.mrf.mxu0
    %v1436 = vadd.f32 0.0, %v1435
    %v1437 = vpop.f32.mrf.mxu0
    %v1438 = vpop.f32.mrf.mxu0
    %v1439 = vpop.f32.mrf.mxu0
    %1440 = vdwg.mxu0
    %v1441 = vadd.f32 %v1393, %v1436
    %v1442 = vld [vmem:[#allocation5] sm:$0x3]
    %v1443 = vpack.c.bf16 %v1382, %v1382
    %1445 = vrot.lane.b32.xlu0 %v1443, 32
    %v1446 = vpop.permute.xlu0 %1445
    %v1448 = vsel %vm299, %v1446, 0
    %1450 = vmatprep.subr.bf16.mxu0 0
    %1451 = vmatpush1.bf16.msra.mxu0 0
    %1452 = vmatprep.subr.bf16.mxu0 0
    %1453 = vmatpush1.bf16.msra.mxu0 0
    %1454 = vmatprep.subr.bf16.mxu0 0
    %1455 = vmatpush1.bf16.msra.mxu0 0
    %1456 = vmatprep.subr.bf16.mxu0 0
    %1457 = vmatpush1.bf16.msra.mxu0 0
    %1458 = vmatprep.subr.bf16.mxu0 0
    %1459 = vmatpush1.bf16.msra.mxu0 0
    %1460 = vmatprep.subr.bf16.mxu0 0
    %1461 = vmatpush1.bf16.msra.mxu0 0
    %1462 = vmatprep.subr.bf16.mxu0 0
    %1463 = vmatpush1.bf16.msra.mxu0 %v354
    %1464 = vmatprep.subr.bf16.mxu0 0
    %1465 = vmatpush1.bf16.msra.mxu0 %v353
    %1466 = vmatprep.subr.bf16.mxu0 0
    %1467 = vmatpush2.bf16.msra.mxu0 0
    %1468 = vmatprep.subr.bf16.mxu0 0
    %1469 = vmatpush2.bf16.msra.mxu0 0
    %1470 = vmatprep.subr.bf16.mxu0 0
    %1471 = vmatpush2.bf16.msra.mxu0 0
    %1472 = vmatprep.subr.bf16.mxu0 0
    %1473 = vmatpush2.bf16.msra.mxu0 0
    %1474 = vmatprep.subr.bf16.mxu0 0
    %1475 = vmatpush2.bf16.msra.mxu0 0
    %1476 = vmatprep.subr.bf16.mxu0 0
    %1477 = vmatpush2.bf16.msra.mxu0 0
    %1478 = vmatprep.subr.bf16.mxu0 0
    %1479 = vmatpush2.bf16.msra.mxu0 0
    %1480 = vmatprep.subr.bf16.mxu0 0
    %1481 = vmatpush2.bf16.msra.mxu0 0
    %1482 = vmatprep.mubr.bf16.mxu0 0
    %1483 = vmatmul.mubr.bf16.gmra.mxu0 %v1448
    %v1484 = vpop.f32.mrf.mxu0
    %v1485 = vadd.f32 0.0, %v1484
    %v1486 = vpop.f32.mrf.mxu0
    %v1487 = vpop.f32.mrf.mxu0
    %v1488 = vpop.f32.mrf.mxu0
    %1489 = vdwg.mxu0
    %v1490 = vadd.f32 %v1442, %v1485
    %v1491 = vxor.u32 %v1441, 2147483648
    %v1492 = vmul.f32 %v1491, 1.442695
    %v1493 = vpow.pop %v1492
    %v1494 = vadd.f32 %v1493, 1.0
    %v1495 = vrcp.pop %v1494
    %v1496 = vmul.f32 1.0, %v1495
    %v1497 = vtanh.pop %v1441
    %v1498 = vmul.f32 %v1496, %v1352
    %1500 = vrot.lane.b32.xlu0 %v1497, 64
    %v1501 = vpop.permute.xlu0 %1500
    %v1503 = vmul.f32 %v1496, %v1501
    %1505 = vrot.lane.b32.xlu0 %v1503, 32
    %v1506 = vpop.permute.xlu0 %1505
    %v1508 = vadd.f32 %v1498, %v1506
    %v1509 = vtanh.pop %v1508
    %1511 = vrot.lane.b32.xlu0 %v1509, 64
    %v1512 = vpop.permute.xlu0 %1511
    %v1514 = vmul.f32 %v1496, %v1512
    %v1515 = vxor.u32 %v1490, 2147483648
    %v1516 = vmul.f32 %v1515, 1.442695
    %v1517 = vpow.pop %v1516
    %v1518 = vadd.f32 %v1517, 1.0
    %v1519 = vrcp.pop %v1518
    %v1520 = vmul.f32 1.0, %v1519
    %v1521 = vtanh.pop %v1490
    %v1522 = vmul.f32 %v1520, %v1376
    %1524 = vrot.lane.b32.xlu0 %v1521, 64
    %v1525 = vpop.permute.xlu0 %1524
    %v1527 = vmul.f32 %v1520, %v1525
    %1529 = vrot.lane.b32.xlu0 %v1527, 32
    %v1530 = vpop.permute.xlu0 %1529
    %v1532 = vadd.f32 %v1522, %v1530
    %v1533 = vtanh.pop %v1532
    %1535 = vrot.lane.b32.xlu0 %v1533, 64
    %v1536 = vpop.permute.xlu0 %1535
    %v1538 = vmul.f32 %v1520, %v1536
    %1540 = vrot.lane.b32.xlu0 %v1514, 32
    %v1541 = vpop.permute.xlu0 %1540
    %1543 = vst.msk [vmem:[#allocation2 + $0xe] sm:$0x3] %vm450, %v1541
    %1545 = vrot.lane.b32.xlu0 %v1538, 32
    %v1546 = vpop.permute.xlu0 %1545
    %1548 = vst.msk [vmem:[#allocation3] sm:$0x3] %vm450, %v1546
    %v1549 = vld [vmem:[#allocation2] sm:$0xff]
    %v1550 = vld [vmem:[#allocation2 + $0x8] sm:$0xff]
    %v1551 = vpack.c.bf16 %v1550, %v1549
    %v1552 = vld [vmem:[#allocation3] sm:$0xff]
    %v1553 = vld [vmem:[#allocation3 + $0x8] sm:$0xff]
    %v1554 = vpack.c.bf16 %v1553, %v1552
    %v1555 = vld [vmem:[%s7] sm:$0xf]
    %v1556 = vld [vmem:[%s7 + $0x4] sm:$0xf]
    %v1557 = vld [vmem:[%s7 + $0x8] sm:$0xf]
    %v1558 = vld [vmem:[%s7 + $0xc] sm:$0xf]
    %v1559 = vld [vmem:[%s7 + $0x10] sm:$0xf]
    %v1560 = vld [vmem:[%s7 + $0x14] sm:$0xf]
    %v1561 = vld [vmem:[%s7 + $0x18] sm:$0xf]
    %v1562 = vld [vmem:[%s7 + $0x1c] sm:$0xf]
    %v1567 = vunpack.c.l.b16 %v1559
    %v1568 = vunpack.c.l.b16 %v1560
    %v1569 = vunpack.c.l.b16 %v1561
    %v1570 = vunpack.c.l.b16 %v1562
    %v1571 = vpack.c.b16 %v1568, %v1567
    %v1572 = vpack.c.b16 %v1570, %v1569
    %v1576 = vsel %vm299, %v1554, 0
    %1578 = vmatprep.subr.bf16.mxu0 0
    %1579 = vmatpush1.bf16.msra.mxu0 0
    %1580 = vmatprep.subr.bf16.mxu0 0
    %1581 = vmatpush1.bf16.msra.mxu0 0
    %1582 = vmatprep.subr.bf16.mxu0 0
    %1583 = vmatpush1.bf16.msra.mxu0 0
    %1584 = vmatprep.subr.bf16.mxu0 0
    %1585 = vmatpush1.bf16.msra.mxu0 0
    %1586 = vmatprep.subr.bf16.mxu0 0
    %1587 = vmatpush1.bf16.msra.mxu0 0
    %1588 = vmatprep.subr.bf16.mxu0 0
    %1589 = vmatpush1.bf16.msra.mxu0 0
    %1590 = vmatprep.subr.bf16.mxu0 0
    %1591 = vmatpush1.bf16.msra.mxu0 %v1572
    %1592 = vmatprep.subr.bf16.mxu0 0
    %1593 = vmatpush1.bf16.msra.mxu0 %v1571
    %1594 = vmatprep.subr.bf16.mxu0 0
    %1595 = vmatpush2.bf16.msra.mxu0 0
    %1596 = vmatprep.subr.bf16.mxu0 0
    %1597 = vmatpush2.bf16.msra.mxu0 0
    %1598 = vmatprep.subr.bf16.mxu0 0
    %1599 = vmatpush2.bf16.msra.mxu0 0
    %1600 = vmatprep.subr.bf16.mxu0 0
    %1601 = vmatpush2.bf16.msra.mxu0 0
    %1602 = vmatprep.subr.bf16.mxu0 0
    %1603 = vmatpush2.bf16.msra.mxu0 0
    %1604 = vmatprep.subr.bf16.mxu0 0
    %1605 = vmatpush2.bf16.msra.mxu0 0
    %1606 = vmatprep.subr.bf16.mxu0 0
    %1607 = vmatpush2.bf16.msra.mxu0 0
    %1608 = vmatprep.subr.bf16.mxu0 0
    %1609 = vmatpush2.bf16.msra.mxu0 0
    %1610 = vmatprep.mubr.bf16.mxu0 0
    %1611 = vmatmul.mubr.bf16.gmra.mxu0 %v1576
    %v1612 = vpop.f32.mrf.mxu0
    %v1613 = vadd.f32 0.0, %v1612
    %v1614 = vpop.f32.mrf.mxu0
    %v1615 = vpop.f32.mrf.mxu0
    %v1616 = vadd.f32 0.0, %v1615
    %v1617 = vpop.f32.mrf.mxu0
    %1618 = vdwg.mxu0
    %v1623 = vunpack.c.l.b16 %v1555
    %v1624 = vunpack.c.l.b16 %v1556
    %v1625 = vunpack.c.l.b16 %v1557
    %v1626 = vunpack.c.l.b16 %v1558
    %v1627 = vpack.c.b16 %v1624, %v1623
    %v1628 = vpack.c.b16 %v1626, %v1625
    %v1632 = vsel %vm299, %v1551, 0
    %1634 = vmatprep.subr.bf16.mxu0 0
    %1635 = vmatpush1.bf16.msra.mxu0 0
    %1636 = vmatprep.subr.bf16.mxu0 0
    %1637 = vmatpush1.bf16.msra.mxu0 0
    %1638 = vmatprep.subr.bf16.mxu0 0
    %1639 = vmatpush1.bf16.msra.mxu0 0
    %1640 = vmatprep.subr.bf16.mxu0 0
    %1641 = vmatpush1.bf16.msra.mxu0 0
    %1642 = vmatprep.subr.bf16.mxu0 0
    %1643 = vmatpush1.bf16.msra.mxu0 0
    %1644 = vmatprep.subr.bf16.mxu0 0
    %1645 = vmatpush1.bf16.msra.mxu0 0
    %1646 = vmatprep.subr.bf16.mxu0 0
    %1647 = vmatpush1.bf16.msra.mxu0 %v1628
    %1648 = vmatprep.subr.bf16.mxu0 0
    %1649 = vmatpush1.bf16.msra.mxu0 %v1627
    %1650 = vmatprep.subr.bf16.mxu0 0
    %1651 = vmatpush2.bf16.msra.mxu0 0
    %1652 = vmatprep.subr.bf16.mxu0 0
    %1653 = vmatpush2.bf16.msra.mxu0 0
    %1654 = vmatprep.subr.bf16.mxu0 0
    %1655 = vmatpush2.bf16.msra.mxu0 0
    %1656 = vmatprep.subr.bf16.mxu0 0
    %1657 = vmatpush2.bf16.msra.mxu0 0
    %1658 = vmatprep.subr.bf16.mxu0 0
    %1659 = vmatpush2.bf16.msra.mxu0 0
    %1660 = vmatprep.subr.bf16.mxu0 0
    %1661 = vmatpush2.bf16.msra.mxu0 0
    %1662 = vmatprep.subr.bf16.mxu0 0
    %1663 = vmatpush2.bf16.msra.mxu0 0
    %1664 = vmatprep.subr.bf16.mxu0 0
    %1665 = vmatpush2.bf16.msra.mxu0 0
    %1666 = vmatprep.mubr.bf16.mxu0 0
    %1667 = vmatmul.mubr.bf16.gmra.mxu0 %v1632
    %v1668 = vpop.f32.mrf.mxu0
    %v1669 = vadd.f32 %v1613, %v1668
    %v1670 = vpop.f32.mrf.mxu0
    %v1671 = vpop.f32.mrf.mxu0
    %v1672 = vadd.f32 %v1616, %v1671
    %v1673 = vpop.f32.mrf.mxu0
    %1674 = vdwg.mxu0
    %v1675 = vld [vmem:[%s11] sm:$0x1]
    %v1677 = vlaneseq
    %v1678 = vshrl.u32 %v1677, 7
    %v1679 = vsub.s32 0, %v1678
    %v1680 = vrot.slane %v1675, %v1679
    %v1682 = vadd.f32 %v1669, %v1680
    %v1683 = vadd.f32 %v1672, %v1680
    %1684 = vst [vmem:[#allocation4] sm:$0xff] %v1682
    %1685 = vst [vmem:[#allocation4 + $0x8] sm:$0xff] %v1683
    %v1686 = vld [vmem:[%s8] sm:$0xf]
    %v1687 = vld [vmem:[%s8 + $0x4] sm:$0xf]
    %v1688 = vld [vmem:[%s8 + $0x8] sm:$0xf]
    %v1689 = vld [vmem:[%s8 + $0xc] sm:$0xf]
    %v1690 = vld [vmem:[%s8 + $0x10] sm:$0xf]
    %v1691 = vld [vmem:[%s8 + $0x14] sm:$0xf]
    %v1692 = vld [vmem:[%s8 + $0x18] sm:$0xf]
    %v1693 = vld [vmem:[%s8 + $0x1c] sm:$0xf]
    %v1698 = vunpack.c.l.b16 %v1690
    %v1699 = vunpack.c.l.b16 %v1691
    %v1700 = vunpack.c.l.b16 %v1692
    %v1701 = vunpack.c.l.b16 %v1693
    %v1702 = vpack.c.b16 %v1699, %v1698
    %v1703 = vpack.c.b16 %v1701, %v1700
    %1706 = vmatprep.subr.bf16.mxu0 0
    %1707 = vmatpush1.bf16.msra.mxu0 0
    %1708 = vmatprep.subr.bf16.mxu0 0
    %1709 = vmatpush1.bf16.msra.mxu0 0
    %1710 = vmatprep.subr.bf16.mxu0 0
    %1711 = vmatpush1.bf16.msra.mxu0 0
    %1712 = vmatprep.subr.bf16.mxu0 0
    %1713 = vmatpush1.bf16.msra.mxu0 0
    %1714 = vmatprep.subr.bf16.mxu0 0
    %1715 = vmatpush1.bf16.msra.mxu0 0
    %1716 = vmatprep.subr.bf16.mxu0 0
    %1717 = vmatpush1.bf16.msra.mxu0 0
    %1718 = vmatprep.subr.bf16.mxu0 0
    %1719 = vmatpush1.bf16.msra.mxu0 %v1703
    %1720 = vmatprep.subr.bf16.mxu0 0
    %1721 = vmatpush1.bf16.msra.mxu0 %v1702
    %1722 = vmatprep.subr.bf16.mxu0 0
    %1723 = vmatpush2.bf16.msra.mxu0 0
    %1724 = vmatprep.subr.bf16.mxu0 0
    %1725 = vmatpush2.bf16.msra.mxu0 0
    %1726 = vmatprep.subr.bf16.mxu0 0
    %1727 = vmatpush2.bf16.msra.mxu0 0
    %1728 = vmatprep.subr.bf16.mxu0 0
    %1729 = vmatpush2.bf16.msra.mxu0 0
    %1730 = vmatprep.subr.bf16.mxu0 0
    %1731 = vmatpush2.bf16.msra.mxu0 0
    %1732 = vmatprep.subr.bf16.mxu0 0
    %1733 = vmatpush2.bf16.msra.mxu0 0
    %1734 = vmatprep.subr.bf16.mxu0 0
    %1735 = vmatpush2.bf16.msra.mxu0 0
    %1736 = vmatprep.subr.bf16.mxu0 0
    %1737 = vmatpush2.bf16.msra.mxu0 0
    %1738 = vmatprep.mubr.bf16.mxu0 0
    %1739 = vmatmul.mubr.bf16.gmra.mxu0 %v1576
    %v1740 = vpop.f32.mrf.mxu0
    %v1741 = vadd.f32 0.0, %v1740
    %v1742 = vpop.f32.mrf.mxu0
    %v1743 = vpop.f32.mrf.mxu0
    %v1744 = vadd.f32 0.0, %v1743
    %v1745 = vpop.f32.mrf.mxu0
    %1746 = vdwg.mxu0
    %v1751 = vunpack.c.l.b16 %v1686
    %v1752 = vunpack.c.l.b16 %v1687
    %v1753 = vunpack.c.l.b16 %v1688
    %v1754 = vunpack.c.l.b16 %v1689
    %v1755 = vpack.c.b16 %v1752, %v1751
    %v1756 = vpack.c.b16 %v1754, %v1753
    %1759 = vmatprep.subr.bf16.mxu0 0
    %1760 = vmatpush1.bf16.msra.mxu0 0
    %1761 = vmatprep.subr.bf16.mxu0 0
    %1762 = vmatpush1.bf16.msra.mxu0 0
    %1763 = vmatprep.subr.bf16.mxu0 0
    %1764 = vmatpush1.bf16.msra.mxu0 0
    %1765 = vmatprep.subr.bf16.mxu0 0
    %1766 = vmatpush1.bf16.msra.mxu0 0
    %1767 = vmatprep.subr.bf16.mxu0 0
    %1768 = vmatpush1.bf16.msra.mxu0 0
    %1769 = vmatprep.subr.bf16.mxu0 0
    %1770 = vmatpush1.bf16.msra.mxu0 0
    %1771 = vmatprep.subr.bf16.mxu0 0
    %1772 = vmatpush1.bf16.msra.mxu0 %v1756
    %1773 = vmatprep.subr.bf16.mxu0 0
    %1774 = vmatpush1.bf16.msra.mxu0 %v1755
    %1775 = vmatprep.subr.bf16.mxu0 0
    %1776 = vmatpush2.bf16.msra.mxu0 0
    %1777 = vmatprep.subr.bf16.mxu0 0
    %1778 = vmatpush2.bf16.msra.mxu0 0
    %1779 = vmatprep.subr.bf16.mxu0 0
    %1780 = vmatpush2.bf16.msra.mxu0 0
    %1781 = vmatprep.subr.bf16.mxu0 0
    %1782 = vmatpush2.bf16.msra.mxu0 0
    %1783 = vmatprep.subr.bf16.mxu0 0
    %1784 = vmatpush2.bf16.msra.mxu0 0
    %1785 = vmatprep.subr.bf16.mxu0 0
    %1786 = vmatpush2.bf16.msra.mxu0 0
    %1787 = vmatprep.subr.bf16.mxu0 0
    %1788 = vmatpush2.bf16.msra.mxu0 0
    %1789 = vmatprep.subr.bf16.mxu0 0
    %1790 = vmatpush2.bf16.msra.mxu0 0
    %1791 = vmatprep.mubr.bf16.mxu0 0
    %1792 = vmatmul.mubr.bf16.gmra.mxu0 %v1632
    %v1793 = vpop.f32.mrf.mxu0
    %v1794 = vadd.f32 %v1741, %v1793
    %v1795 = vpop.f32.mrf.mxu0
    %v1796 = vpop.f32.mrf.mxu0
    %v1797 = vadd.f32 %v1744, %v1796
    %v1798 = vpop.f32.mrf.mxu0
    %1799 = vdwg.mxu0
    %v1800 = vld [vmem:[%s12] sm:$0x1]
    %v1802 = vlaneseq
    %v1803 = vshrl.u32 %v1802, 7
    %v1804 = vsub.s32 0, %v1803
    %v1805 = vrot.slane %v1800, %v1804
    %v1807 = vadd.f32 %v1794, %v1805
    %v1808 = vadd.f32 %v1797, %v1805
    %1809 = vst [vmem:[#allocation5] sm:$0xff] %v1807
    %1810 = vst [vmem:[#allocation5 + $0x8] sm:$0xff] %v1808
    %v1811 = vld [vmem:[#allocation15] sm:$0xf]
    %v1812 = vld [vmem:[#allocation15 + $0x4] sm:$0xf]
    %v1813 = vld [vmem:[#allocation15 + $0x8] sm:$0xf]
    %v1814 = vld [vmem:[#allocation15 + $0xc] sm:$0xf]
    %v1815 = vld [vmem:[#allocation17] sm:$0xf]
    %v1816 = vld [vmem:[#allocation17 + $0x4] sm:$0xf]
    %v1817 = vld [vmem:[#allocation17 + $0x8] sm:$0xf]
    %v1818 = vld [vmem:[#allocation17 + $0xc] sm:$0xf]
    %v1819 = vld [vmem:[#allocation4] sm:$0x3]
    %v1824 = vunpack.c.l.b16 %v1811
    %v1825 = vunpack.c.l.b16 %v1812
    %v1826 = vunpack.c.l.b16 %v1813
    %v1827 = vunpack.c.l.b16 %v1814
    %v1828 = vpack.c.b16 %v1825, %v1824
    %v1829 = vpack.c.b16 %v1827, %v1826
    %1832 = vmatprep.subr.bf16.mxu0 0
    %1833 = vmatpush1.bf16.msra.mxu0 0
    %1834 = vmatprep.subr.bf16.mxu0 0
    %1835 = vmatpush1.bf16.msra.mxu0 0
    %1836 = vmatprep.subr.bf16.mxu0 0
    %1837 = vmatpush1.bf16.msra.mxu0 0
    %1838 = vmatprep.subr.bf16.mxu0 0
    %1839 = vmatpush1.bf16.msra.mxu0 0
    %1840 = vmatprep.subr.bf16.mxu0 0
    %1841 = vmatpush1.bf16.msra.mxu0 0
    %1842 = vmatprep.subr.bf16.mxu0 0
    %1843 = vmatpush1.bf16.msra.mxu0 0
    %1844 = vmatprep.subr.bf16.mxu0 0
    %1845 = vmatpush1.bf16.msra.mxu0 %v1829
    %1846 = vmatprep.subr.bf16.mxu0 0
    %1847 = vmatpush1.bf16.msra.mxu0 %v1828
    %1848 = vmatprep.subr.bf16.mxu0 0
    %1849 = vmatpush2.bf16.msra.mxu0 0
    %1850 = vmatprep.subr.bf16.mxu0 0
    %1851 = vmatpush2.bf16.msra.mxu0 0
    %1852 = vmatprep.subr.bf16.mxu0 0
    %1853 = vmatpush2.bf16.msra.mxu0 0
    %1854 = vmatprep.subr.bf16.mxu0 0
    %1855 = vmatpush2.bf16.msra.mxu0 0
    %1856 = vmatprep.subr.bf16.mxu0 0
    %1857 = vmatpush2.bf16.msra.mxu0 0
    %1858 = vmatprep.subr.bf16.mxu0 0
    %1859 = vmatpush2.bf16.msra.mxu0 0
    %1860 = vmatprep.subr.bf16.mxu0 0
    %1861 = vmatpush2.bf16.msra.mxu0 0
    %1862 = vmatprep.subr.bf16.mxu0 0
    %1863 = vmatpush2.bf16.msra.mxu0 0
    %1864 = vmatprep.mubr.bf16.mxu0 0
    %1865 = vmatmul.mubr.bf16.gmra.mxu0 %v301
    %v1866 = vpop.f32.mrf.mxu0
    %v1867 = vadd.f32 0.0, %v1866
    %v1868 = vpop.f32.mrf.mxu0
    %v1869 = vpop.f32.mrf.mxu0
    %v1870 = vpop.f32.mrf.mxu0
    %1871 = vdwg.mxu0
    %v1872 = vadd.f32 %v1819, %v1867
    %v1873 = vld [vmem:[#allocation5 + $0xe] sm:$0x3]
    %v1878 = vunpack.c.l.b16 %v1815
    %v1879 = vunpack.c.l.b16 %v1816
    %v1880 = vunpack.c.l.b16 %v1817
    %v1881 = vunpack.c.l.b16 %v1818
    %v1882 = vpack.c.b16 %v1879, %v1878
    %v1883 = vpack.c.b16 %v1881, %v1880
    %1886 = vmatprep.subr.bf16.mxu0 0
    %1887 = vmatpush1.bf16.msra.mxu0 0
    %1888 = vmatprep.subr.bf16.mxu0 0
    %1889 = vmatpush1.bf16.msra.mxu0 0
    %1890 = vmatprep.subr.bf16.mxu0 0
    %1891 = vmatpush1.bf16.msra.mxu0 0
    %1892 = vmatprep.subr.bf16.mxu0 0
    %1893 = vmatpush1.bf16.msra.mxu0 0
    %1894 = vmatprep.subr.bf16.mxu0 0
    %1895 = vmatpush1.bf16.msra.mxu0 0
    %1896 = vmatprep.subr.bf16.mxu0 0
    %1897 = vmatpush1.bf16.msra.mxu0 0
    %1898 = vmatprep.subr.bf16.mxu0 0
    %1899 = vmatpush1.bf16.msra.mxu0 %v1883
    %1900 = vmatprep.subr.bf16.mxu0 0
    %1901 = vmatpush1.bf16.msra.mxu0 %v1882
    %1902 = vmatprep.subr.bf16.mxu0 0
    %1903 = vmatpush2.bf16.msra.mxu0 0
    %1904 = vmatprep.subr.bf16.mxu0 0
    %1905 = vmatpush2.bf16.msra.mxu0 0
    %1906 = vmatprep.subr.bf16.mxu0 0
    %1907 = vmatpush2.bf16.msra.mxu0 0
    %1908 = vmatprep.subr.bf16.mxu0 0
    %1909 = vmatpush2.bf16.msra.mxu0 0
    %1910 = vmatprep.subr.bf16.mxu0 0
    %1911 = vmatpush2.bf16.msra.mxu0 0
    %1912 = vmatprep.subr.bf16.mxu0 0
    %1913 = vmatpush2.bf16.msra.mxu0 0
    %1914 = vmatprep.subr.bf16.mxu0 0
    %1915 = vmatpush2.bf16.msra.mxu0 0
    %1916 = vmatprep.subr.bf16.mxu0 0
    %1917 = vmatpush2.bf16.msra.mxu0 0
    %1918 = vmatprep.mubr.bf16.mxu0 0
    %1919 = vmatmul.mubr.bf16.gmra.mxu0 %v301
    %v1920 = vpop.f32.mrf.mxu0
    %v1921 = vadd.f32 0.0, %v1920
    %v1922 = vpop.f32.mrf.mxu0
    %v1923 = vpop.f32.mrf.mxu0
    %v1924 = vpop.f32.mrf.mxu0
    %1925 = vdwg.mxu0
    %v1926 = vadd.f32 %v1873, %v1921
    %v1927 = vxor.u32 %v1872, 2147483648
    %v1928 = vmul.f32 %v1927, 1.442695
    %v1929 = vpow.pop %v1928
    %v1930 = vadd.f32 %v1929, 1.0
    %v1931 = vrcp.pop %v1930
    %v1932 = vmul.f32 1.0, %v1931
    %v1933 = vtanh.pop %v1872
    %v1934 = vmul.f32 %v1932, 0.0
    %1936 = vrot.lane.b32.xlu0 %v1933, 64
    %v1937 = vpop.permute.xlu0 %1936
    %v1939 = vmul.f32 %v1932, %v1937
    %1941 = vrot.lane.b32.xlu0 %v1939, 32
    %v1942 = vpop.permute.xlu0 %1941
    %v1944 = vadd.f32 %v1934, %v1942
    %v1945 = vtanh.pop %v1944
    %1947 = vrot.lane.b32.xlu0 %v1945, 64
    %v1948 = vpop.permute.xlu0 %1947
    %v1950 = vmul.f32 %v1932, %v1948
    %v1951 = vxor.u32 %v1926, 2147483648
    %v1952 = vmul.f32 %v1951, 1.442695
    %v1953 = vpow.pop %v1952
    %v1954 = vadd.f32 %v1953, 1.0
    %v1955 = vrcp.pop %v1954
    %v1956 = vmul.f32 1.0, %v1955
    %v1957 = vtanh.pop %v1926
    %v1958 = vmul.f32 %v1956, 0.0
    %1960 = vrot.lane.b32.xlu0 %v1957, 64
    %v1961 = vpop.permute.xlu0 %1960
    %v1963 = vmul.f32 %v1956, %v1961
    %1965 = vrot.lane.b32.xlu0 %v1963, 32
    %v1966 = vpop.permute.xlu0 %1965
    %v1968 = vadd.f32 %v1958, %v1966
    %v1969 = vtanh.pop %v1968
    %1971 = vrot.lane.b32.xlu0 %v1969, 64
    %v1972 = vpop.permute.xlu0 %1971
    %v1974 = vmul.f32 %v1956, %v1972
    %v1975 = vld [vmem:[#allocation4 + $0x2] sm:$0x3]
    %v1976 = vpack.c.bf16 %v1950, %v1950
    %1978 = vrot.lane.b32.xlu0 %v1976, 32
    %v1979 = vpop.permute.xlu0 %1978
    %v1981 = vsel %vm299, %v1979, 0
    %1983 = vmatprep.subr.bf16.mxu0 0
    %1984 = vmatpush1.bf16.msra.mxu0 0
    %1985 = vmatprep.subr.bf16.mxu0 0
    %1986 = vmatpush1.bf16.msra.mxu0 0
    %1987 = vmatprep.subr.bf16.mxu0 0
    %1988 = vmatpush1.bf16.msra.mxu0 0
    %1989 = vmatprep.subr.bf16.mxu0 0
    %1990 = vmatpush1.bf16.msra.mxu0 0
    %1991 = vmatprep.subr.bf16.mxu0 0
    %1992 = vmatpush1.bf16.msra.mxu0 0
    %1993 = vmatprep.subr.bf16.mxu0 0
    %1994 = vmatpush1.bf16.msra.mxu0 0
    %1995 = vmatprep.subr.bf16.mxu0 0
    %1996 = vmatpush1.bf16.msra.mxu0 %v1829
    %1997 = vmatprep.subr.bf16.mxu0 0
    %1998 = vmatpush1.bf16.msra.mxu0 %v1828
    %1999 = vmatprep.subr.bf16.mxu0 0
    %2000 = vmatpush2.bf16.msra.mxu0 0
    %2001 = vmatprep.subr.bf16.mxu0 0
    %2002 = vmatpush2.bf16.msra.mxu0 0
    %2003 = vmatprep.subr.bf16.mxu0 0
    %2004 = vmatpush2.bf16.msra.mxu0 0
    %2005 = vmatprep.subr.bf16.mxu0 0
    %2006 = vmatpush2.bf16.msra.mxu0 0
    %2007 = vmatprep.subr.bf16.mxu0 0
    %2008 = vmatpush2.bf16.msra.mxu0 0
    %2009 = vmatprep.subr.bf16.mxu0 0
    %2010 = vmatpush2.bf16.msra.mxu0 0
    %2011 = vmatprep.subr.bf16.mxu0 0
    %2012 = vmatpush2.bf16.msra.mxu0 0
    %2013 = vmatprep.subr.bf16.mxu0 0
    %2014 = vmatpush2.bf16.msra.mxu0 0
    %2015 = vmatprep.mubr.bf16.mxu0 0
    %2016 = vmatmul.mubr.bf16.gmra.mxu0 %v1981
    %v2017 = vpop.f32.mrf.mxu0
    %v2018 = vadd.f32 0.0, %v2017
    %v2019 = vpop.f32.mrf.mxu0
    %v2020 = vpop.f32.mrf.mxu0
    %v2021 = vpop.f32.mrf.mxu0
    %2022 = vdwg.mxu0
    %v2023 = vadd.f32 %v1975, %v2018
    %v2024 = vxor.u32 %v2023, 2147483648
    %v2025 = vmul.f32 %v2024, 1.442695
    %v2026 = vpow.pop %v2025
    %v2027 = vadd.f32 %v2026, 1.0
    %v2028 = vrcp.pop %v2027
    %v2029 = vmul.f32 1.0, %v2028
    %v2030 = vtanh.pop %v2023
    %v2031 = vmul.f32 %v2029, %v1944
    %2033 = vrot.lane.b32.xlu0 %v2030, 64
    %v2034 = vpop.permute.xlu0 %2033
    %v2036 = vmul.f32 %v2029, %v2034
    %2038 = vrot.lane.b32.xlu0 %v2036, 32
    %v2039 = vpop.permute.xlu0 %2038
    %v2041 = vadd.f32 %v2031, %v2039
    %v2042 = vtanh.pop %v2041
    %2044 = vrot.lane.b32.xlu0 %v2042, 64
    %v2045 = vpop.permute.xlu0 %2044
    %v2047 = vmul.f32 %v2029, %v2045
    %v2048 = vld [vmem:[#allocation4 + $0x4] sm:$0x3]
    %v2049 = vpack.c.bf16 %v2047, %v2047
    %2051 = vrot.lane.b32.xlu0 %v2049, 32
    %v2052 = vpop.permute.xlu0 %2051
    %v2054 = vsel %vm299, %v2052, 0
    %2056 = vmatprep.subr.bf16.mxu0 0
    %2057 = vmatpush1.bf16.msra.mxu0 0
    %2058 = vmatprep.subr.bf16.mxu0 0
    %2059 = vmatpush1.bf16.msra.mxu0 0
    %2060 = vmatprep.subr.bf16.mxu0 0
    %2061 = vmatpush1.bf16.msra.mxu0 0
    %2062 = vmatprep.subr.bf16.mxu0 0
    %2063 = vmatpush1.bf16.msra.mxu0 0
    %2064 = vmatprep.subr.bf16.mxu0 0
    %2065 = vmatpush1.bf16.msra.mxu0 0
    %2066 = vmatprep.subr.bf16.mxu0 0
    %2067 = vmatpush1.bf16.msra.mxu0 0
    %2068 = vmatprep.subr.bf16.mxu0 0
    %2069 = vmatpush1.bf16.msra.mxu0 %v1829
    %2070 = vmatprep.subr.bf16.mxu0 0
    %2071 = vmatpush1.bf16.msra.mxu0 %v1828
    %2072 = vmatprep.subr.bf16.mxu0 0
    %2073 = vmatpush2.bf16.msra.mxu0 0
    %2074 = vmatprep.subr.bf16.mxu0 0
    %2075 = vmatpush2.bf16.msra.mxu0 0
    %2076 = vmatprep.subr.bf16.mxu0 0
    %2077 = vmatpush2.bf16.msra.mxu0 0
    %2078 = vmatprep.subr.bf16.mxu0 0
    %2079 = vmatpush2.bf16.msra.mxu0 0
    %2080 = vmatprep.subr.bf16.mxu0 0
    %2081 = vmatpush2.bf16.msra.mxu0 0
    %2082 = vmatprep.subr.bf16.mxu0 0
    %2083 = vmatpush2.bf16.msra.mxu0 0
    %2084 = vmatprep.subr.bf16.mxu0 0
    %2085 = vmatpush2.bf16.msra.mxu0 0
    %2086 = vmatprep.subr.bf16.mxu0 0
    %2087 = vmatpush2.bf16.msra.mxu0 0
    %2088 = vmatprep.mubr.bf16.mxu0 0
    %2089 = vmatmul.mubr.bf16.gmra.mxu0 %v2054
    %v2090 = vpop.f32.mrf.mxu0
    %v2091 = vadd.f32 0.0, %v2090
    %v2092 = vpop.f32.mrf.mxu0
    %v2093 = vpop.f32.mrf.mxu0
    %v2094 = vpop.f32.mrf.mxu0
    %2095 = vdwg.mxu0
    %v2096 = vadd.f32 %v2048, %v2091
    %v2097 = vxor.u32 %v2096, 2147483648
    %v2098 = vmul.f32 %v2097, 1.442695
    %v2099 = vpow.pop %v2098
    %v2100 = vadd.f32 %v2099, 1.0
    %v2101 = vrcp.pop %v2100
    %v2102 = vmul.f32 1.0, %v2101
    %v2103 = vtanh.pop %v2096
    %v2104 = vmul.f32 %v2102, %v2041
    %2106 = vrot.lane.b32.xlu0 %v2103, 64
    %v2107 = vpop.permute.xlu0 %2106
    %v2109 = vmul.f32 %v2102, %v2107
    %2111 = vrot.lane.b32.xlu0 %v2109, 32
    %v2112 = vpop.permute.xlu0 %2111
    %v2114 = vadd.f32 %v2104, %v2112
    %v2115 = vtanh.pop %v2114
    %2117 = vrot.lane.b32.xlu0 %v2115, 64
    %v2118 = vpop.permute.xlu0 %2117
    %v2120 = vmul.f32 %v2102, %v2118
    %v2121 = vld [vmem:[#allocation4 + $0x6] sm:$0x3]
    %v2122 = vpack.c.bf16 %v2120, %v2120
    %2124 = vrot.lane.b32.xlu0 %v2122, 32
    %v2125 = vpop.permute.xlu0 %2124
    %v2127 = vsel %vm299, %v2125, 0
    %2129 = vmatprep.subr.bf16.mxu0 0
    %2130 = vmatpush1.bf16.msra.mxu0 0
    %2131 = vmatprep.subr.bf16.mxu0 0
    %2132 = vmatpush1.bf16.msra.mxu0 0
    %2133 = vmatprep.subr.bf16.mxu0 0
    %2134 = vmatpush1.bf16.msra.mxu0 0
    %2135 = vmatprep.subr.bf16.mxu0 0
    %2136 = vmatpush1.bf16.msra.mxu0 0
    %2137 = vmatprep.subr.bf16.mxu0 0
    %2138 = vmatpush1.bf16.msra.mxu0 0
    %2139 = vmatprep.subr.bf16.mxu0 0
    %2140 = vmatpush1.bf16.msra.mxu0 0
    %2141 = vmatprep.subr.bf16.mxu0 0
    %2142 = vmatpush1.bf16.msra.mxu0 %v1829
    %2143 = vmatprep.subr.bf16.mxu0 0
    %2144 = vmatpush1.bf16.msra.mxu0 %v1828
    %2145 = vmatprep.subr.bf16.mxu0 0
    %2146 = vmatpush2.bf16.msra.mxu0 0
    %2147 = vmatprep.subr.bf16.mxu0 0
    %2148 = vmatpush2.bf16.msra.mxu0 0
    %2149 = vmatprep.subr.bf16.mxu0 0
    %2150 = vmatpush2.bf16.msra.mxu0 0
    %2151 = vmatprep.subr.bf16.mxu0 0
    %2152 = vmatpush2.bf16.msra.mxu0 0
    %2153 = vmatprep.subr.bf16.mxu0 0
    %2154 = vmatpush2.bf16.msra.mxu0 0
    %2155 = vmatprep.subr.bf16.mxu0 0
    %2156 = vmatpush2.bf16.msra.mxu0 0
    %2157 = vmatprep.subr.bf16.mxu0 0
    %2158 = vmatpush2.bf16.msra.mxu0 0
    %2159 = vmatprep.subr.bf16.mxu0 0
    %2160 = vmatpush2.bf16.msra.mxu0 0
    %2161 = vmatprep.mubr.bf16.mxu0 0
    %2162 = vmatmul.mubr.bf16.gmra.mxu0 %v2127
    %v2163 = vpop.f32.mrf.mxu0
    %v2164 = vadd.f32 0.0, %v2163
    %v2165 = vpop.f32.mrf.mxu0
    %v2166 = vpop.f32.mrf.mxu0
    %v2167 = vpop.f32.mrf.mxu0
    %2168 = vdwg.mxu0
    %v2169 = vadd.f32 %v2121, %v2164
    %v2170 = vxor.u32 %v2169, 2147483648
    %v2171 = vmul.f32 %v2170, 1.442695
    %v2172 = vpow.pop %v2171
    %v2173 = vadd.f32 %v2172, 1.0
    %v2174 = vrcp.pop %v2173
    %v2175 = vmul.f32 1.0, %v2174
    %v2176 = vtanh.pop %v2169
    %v2177 = vmul.f32 %v2175, %v2114
    %2179 = vrot.lane.b32.xlu0 %v2176, 64
    %v2180 = vpop.permute.xlu0 %2179
    %v2182 = vmul.f32 %v2175, %v2180
    %2184 = vrot.lane.b32.xlu0 %v2182, 32
    %v2185 = vpop.permute.xlu0 %2184
    %v2187 = vadd.f32 %v2177, %v2185
    %v2188 = vtanh.pop %v2187
    %2190 = vrot.lane.b32.xlu0 %v2188, 64
    %v2191 = vpop.permute.xlu0 %2190
    %v2193 = vmul.f32 %v2175, %v2191
    %v2194 = vld [vmem:[#allocation4 + $0x8] sm:$0x3]
    %v2195 = vpack.c.bf16 %v2193, %v2193
    %2197 = vrot.lane.b32.xlu0 %v2195, 32
    %v2198 = vpop.permute.xlu0 %2197
    %v2200 = vsel %vm299, %v2198, 0
    %2202 = vmatprep.subr.bf16.mxu0 0
    %2203 = vmatpush1.bf16.msra.mxu0 0
    %2204 = vmatprep.subr.bf16.mxu0 0
    %2205 = vmatpush1.bf16.msra.mxu0 0
    %2206 = vmatprep.subr.bf16.mxu0 0
    %2207 = vmatpush1.bf16.msra.mxu0 0
    %2208 = vmatprep.subr.bf16.mxu0 0
    %2209 = vmatpush1.bf16.msra.mxu0 0
    %2210 = vmatprep.subr.bf16.mxu0 0
    %2211 = vmatpush1.bf16.msra.mxu0 0
    %2212 = vmatprep.subr.bf16.mxu0 0
    %2213 = vmatpush1.bf16.msra.mxu0 0
    %2214 = vmatprep.subr.bf16.mxu0 0
    %2215 = vmatpush1.bf16.msra.mxu0 %v1829
    %2216 = vmatprep.subr.bf16.mxu0 0
    %2217 = vmatpush1.bf16.msra.mxu0 %v1828
    %2218 = vmatprep.subr.bf16.mxu0 0
    %2219 = vmatpush2.bf16.msra.mxu0 0
    %2220 = vmatprep.subr.bf16.mxu0 0
    %2221 = vmatpush2.bf16.msra.mxu0 0
    %2222 = vmatprep.subr.bf16.mxu0 0
    %2223 = vmatpush2.bf16.msra.mxu0 0
    %2224 = vmatprep.subr.bf16.mxu0 0
    %2225 = vmatpush2.bf16.msra.mxu0 0
    %2226 = vmatprep.subr.bf16.mxu0 0
    %2227 = vmatpush2.bf16.msra.mxu0 0
    %2228 = vmatprep.subr.bf16.mxu0 0
    %2229 = vmatpush2.bf16.msra.mxu0 0
    %2230 = vmatprep.subr.bf16.mxu0 0
    %2231 = vmatpush2.bf16.msra.mxu0 0
    %2232 = vmatprep.subr.bf16.mxu0 0
    %2233 = vmatpush2.bf16.msra.mxu0 0
    %2234 = vmatprep.mubr.bf16.mxu0 0
    %2235 = vmatmul.mubr.bf16.gmra.mxu0 %v2200
    %v2236 = vpop.f32.mrf.mxu0
    %v2237 = vadd.f32 0.0, %v2236
    %v2238 = vpop.f32.mrf.mxu0
    %v2239 = vpop.f32.mrf.mxu0
    %v2240 = vpop.f32.mrf.mxu0
    %2241 = vdwg.mxu0
    %v2242 = vadd.f32 %v2194, %v2237
    %v2243 = vxor.u32 %v2242, 2147483648
    %v2244 = vmul.f32 %v2243, 1.442695
    %v2245 = vpow.pop %v2244
    %v2246 = vadd.f32 %v2245, 1.0
    %v2247 = vrcp.pop %v2246
    %v2248 = vmul.f32 1.0, %v2247
    %v2249 = vtanh.pop %v2242
    %v2250 = vmul.f32 %v2248, %v2187
    %2252 = vrot.lane.b32.xlu0 %v2249, 64
    %v2253 = vpop.permute.xlu0 %2252
    %v2255 = vmul.f32 %v2248, %v2253
    %2257 = vrot.lane.b32.xlu0 %v2255, 32
    %v2258 = vpop.permute.xlu0 %2257
    %v2260 = vadd.f32 %v2250, %v2258
    %v2261 = vtanh.pop %v2260
    %2263 = vrot.lane.b32.xlu0 %v2261, 64
    %v2264 = vpop.permute.xlu0 %2263
    %v2266 = vmul.f32 %v2248, %v2264
    %v2267 = vld [vmem:[#allocation4 + $0xa] sm:$0x3]
    %v2268 = vpack.c.bf16 %v2266, %v2266
    %2270 = vrot.lane.b32.xlu0 %v2268, 32
    %v2271 = vpop.permute.xlu0 %2270
    %v2273 = vsel %vm299, %v2271, 0
    %2275 = vmatprep.subr.bf16.mxu0 0
    %2276 = vmatpush1.bf16.msra.mxu0 0
    %2277 = vmatprep.subr.bf16.mxu0 0
    %2278 = vmatpush1.bf16.msra.mxu0 0
    %2279 = vmatprep.subr.bf16.mxu0 0
    %2280 = vmatpush1.bf16.msra.mxu0 0
    %2281 = vmatprep.subr.bf16.mxu0 0
    %2282 = vmatpush1.bf16.msra.mxu0 0
    %2283 = vmatprep.subr.bf16.mxu0 0
    %2284 = vmatpush1.bf16.msra.mxu0 0
    %2285 = vmatprep.subr.bf16.mxu0 0
    %2286 = vmatpush1.bf16.msra.mxu0 0
    %2287 = vmatprep.subr.bf16.mxu0 0
    %2288 = vmatpush1.bf16.msra.mxu0 %v1829
    %2289 = vmatprep.subr.bf16.mxu0 0
    %2290 = vmatpush1.bf16.msra.mxu0 %v1828
    %2291 = vmatprep.subr.bf16.mxu0 0
    %2292 = vmatpush2.bf16.msra.mxu0 0
    %2293 = vmatprep.subr.bf16.mxu0 0
    %2294 = vmatpush2.bf16.msra.mxu0 0
    %2295 = vmatprep.subr.bf16.mxu0 0
    %2296 = vmatpush2.bf16.msra.mxu0 0
    %2297 = vmatprep.subr.bf16.mxu0 0
    %2298 = vmatpush2.bf16.msra.mxu0 0
    %2299 = vmatprep.subr.bf16.mxu0 0
    %2300 = vmatpush2.bf16.msra.mxu0 0
    %2301 = vmatprep.subr.bf16.mxu0 0
    %2302 = vmatpush2.bf16.msra.mxu0 0
    %2303 = vmatprep.subr.bf16.mxu0 0
    %2304 = vmatpush2.bf16.msra.mxu0 0
    %2305 = vmatprep.subr.bf16.mxu0 0
    %2306 = vmatpush2.bf16.msra.mxu0 0
    %2307 = vmatprep.mubr.bf16.mxu0 0
    %2308 = vmatmul.mubr.bf16.gmra.mxu0 %v2273
    %v2309 = vpop.f32.mrf.mxu0
    %v2310 = vadd.f32 0.0, %v2309
    %v2311 = vpop.f32.mrf.mxu0
    %v2312 = vpop.f32.mrf.mxu0
    %v2313 = vpop.f32.mrf.mxu0
    %2314 = vdwg.mxu0
    %v2315 = vadd.f32 %v2267, %v2310
    %v2316 = vxor.u32 %v2315, 2147483648
    %v2317 = vmul.f32 %v2316, 1.442695
    %v2318 = vpow.pop %v2317
    %v2319 = vadd.f32 %v2318, 1.0
    %v2320 = vrcp.pop %v2319
    %v2321 = vmul.f32 1.0, %v2320
    %v2322 = vtanh.pop %v2315
    %v2323 = vmul.f32 %v2321, %v2260
    %2325 = vrot.lane.b32.xlu0 %v2322, 64
    %v2326 = vpop.permute.xlu0 %2325
    %v2328 = vmul.f32 %v2321, %v2326
    %2330 = vrot.lane.b32.xlu0 %v2328, 32
    %v2331 = vpop.permute.xlu0 %2330
    %v2333 = vadd.f32 %v2323, %v2331
    %v2334 = vtanh.pop %v2333
    %2336 = vrot.lane.b32.xlu0 %v2334, 64
    %v2337 = vpop.permute.xlu0 %2336
    %v2339 = vmul.f32 %v2321, %v2337
    %v2340 = vld [vmem:[#allocation4 + $0xc] sm:$0x3]
    %v2341 = vpack.c.bf16 %v2339, %v2339
    %2343 = vrot.lane.b32.xlu0 %v2341, 32
    %v2344 = vpop.permute.xlu0 %2343
    %v2346 = vsel %vm299, %v2344, 0
    %2348 = vmatprep.subr.bf16.mxu0 0
    %2349 = vmatpush1.bf16.msra.mxu0 0
    %2350 = vmatprep.subr.bf16.mxu0 0
    %2351 = vmatpush1.bf16.msra.mxu0 0
    %2352 = vmatprep.subr.bf16.mxu0 0
    %2353 = vmatpush1.bf16.msra.mxu0 0
    %2354 = vmatprep.subr.bf16.mxu0 0
    %2355 = vmatpush1.bf16.msra.mxu0 0
    %2356 = vmatprep.subr.bf16.mxu0 0
    %2357 = vmatpush1.bf16.msra.mxu0 0
    %2358 = vmatprep.subr.bf16.mxu0 0
    %2359 = vmatpush1.bf16.msra.mxu0 0
    %2360 = vmatprep.subr.bf16.mxu0 0
    %2361 = vmatpush1.bf16.msra.mxu0 %v1829
    %2362 = vmatprep.subr.bf16.mxu0 0
    %2363 = vmatpush1.bf16.msra.mxu0 %v1828
    %2364 = vmatprep.subr.bf16.mxu0 0
    %2365 = vmatpush2.bf16.msra.mxu0 0
    %2366 = vmatprep.subr.bf16.mxu0 0
    %2367 = vmatpush2.bf16.msra.mxu0 0
    %2368 = vmatprep.subr.bf16.mxu0 0
    %2369 = vmatpush2.bf16.msra.mxu0 0
    %2370 = vmatprep.subr.bf16.mxu0 0
    %2371 = vmatpush2.bf16.msra.mxu0 0
    %2372 = vmatprep.subr.bf16.mxu0 0
    %2373 = vmatpush2.bf16.msra.mxu0 0
    %2374 = vmatprep.subr.bf16.mxu0 0
    %2375 = vmatpush2.bf16.msra.mxu0 0
    %2376 = vmatprep.subr.bf16.mxu0 0
    %2377 = vmatpush2.bf16.msra.mxu0 0
    %2378 = vmatprep.subr.bf16.mxu0 0
    %2379 = vmatpush2.bf16.msra.mxu0 0
    %2380 = vmatprep.mubr.bf16.mxu0 0
    %2381 = vmatmul.mubr.bf16.gmra.mxu0 %v2346
    %v2382 = vpop.f32.mrf.mxu0
    %v2383 = vadd.f32 0.0, %v2382
    %v2384 = vpop.f32.mrf.mxu0
    %v2385 = vpop.f32.mrf.mxu0
    %v2386 = vpop.f32.mrf.mxu0
    %2387 = vdwg.mxu0
    %v2388 = vadd.f32 %v2340, %v2383
    %v2389 = vxor.u32 %v2388, 2147483648
    %v2390 = vmul.f32 %v2389, 1.442695
    %v2391 = vpow.pop %v2390
    %v2392 = vadd.f32 %v2391, 1.0
    %v2393 = vrcp.pop %v2392
    %v2394 = vmul.f32 1.0, %v2393
    %v2395 = vtanh.pop %v2388
    %v2396 = vmul.f32 %v2394, %v2333
    %2398 = vrot.lane.b32.xlu0 %v2395, 64
    %v2399 = vpop.permute.xlu0 %2398
    %v2401 = vmul.f32 %v2394, %v2399
    %2403 = vrot.lane.b32.xlu0 %v2401, 32
    %v2404 = vpop.permute.xlu0 %2403
    %v2406 = vadd.f32 %v2396, %v2404
    %v2407 = vtanh.pop %v2406
    %2409 = vrot.lane.b32.xlu0 %v2407, 64
    %v2410 = vpop.permute.xlu0 %2409
    %v2412 = vmul.f32 %v2394, %v2410
    %v2413 = vld [vmem:[#allocation4 + $0xe] sm:$0x3]
    %v2414 = vpack.c.bf16 %v2412, %v2412
    %2416 = vrot.lane.b32.xlu0 %v2414, 32
    %v2417 = vpop.permute.xlu0 %2416
    %v2419 = vsel %vm299, %v2417, 0
    %2421 = vmatprep.subr.bf16.mxu0 0
    %2422 = vmatpush1.bf16.msra.mxu0 0
    %2423 = vmatprep.subr.bf16.mxu0 0
    %2424 = vmatpush1.bf16.msra.mxu0 0
    %2425 = vmatprep.subr.bf16.mxu0 0
    %2426 = vmatpush1.bf16.msra.mxu0 0
    %2427 = vmatprep.subr.bf16.mxu0 0
    %2428 = vmatpush1.bf16.msra.mxu0 0
    %2429 = vmatprep.subr.bf16.mxu0 0
    %2430 = vmatpush1.bf16.msra.mxu0 0
    %2431 = vmatprep.subr.bf16.mxu0 0
    %2432 = vmatpush1.bf16.msra.mxu0 0
    %2433 = vmatprep.subr.bf16.mxu0 0
    %2434 = vmatpush1.bf16.msra.mxu0 %v1829
    %2435 = vmatprep.subr.bf16.mxu0 0
    %2436 = vmatpush1.bf16.msra.mxu0 %v1828
    %2437 = vmatprep.subr.bf16.mxu0 0
    %2438 = vmatpush2.bf16.msra.mxu0 0
    %2439 = vmatprep.subr.bf16.mxu0 0
    %2440 = vmatpush2.bf16.msra.mxu0 0
    %2441 = vmatprep.subr.bf16.mxu0 0
    %2442 = vmatpush2.bf16.msra.mxu0 0
    %2443 = vmatprep.subr.bf16.mxu0 0
    %2444 = vmatpush2.bf16.msra.mxu0 0
    %2445 = vmatprep.subr.bf16.mxu0 0
    %2446 = vmatpush2.bf16.msra.mxu0 0
    %2447 = vmatprep.subr.bf16.mxu0 0
    %2448 = vmatpush2.bf16.msra.mxu0 0
    %2449 = vmatprep.subr.bf16.mxu0 0
    %2450 = vmatpush2.bf16.msra.mxu0 0
    %2451 = vmatprep.subr.bf16.mxu0 0
    %2452 = vmatpush2.bf16.msra.mxu0 0
    %2453 = vmatprep.mubr.bf16.mxu0 0
    %2454 = vmatmul.mubr.bf16.gmra.mxu0 %v2419
    %v2455 = vpop.f32.mrf.mxu0
    %v2456 = vadd.f32 0.0, %v2455
    %v2457 = vpop.f32.mrf.mxu0
    %v2458 = vpop.f32.mrf.mxu0
    %v2459 = vpop.f32.mrf.mxu0
    %2460 = vdwg.mxu0
    %v2461 = vadd.f32 %v2413, %v2456
    %v2462 = vxor.u32 %v2461, 2147483648
    %v2463 = vmul.f32 %v2462, 1.442695
    %v2464 = vpow.pop %v2463
    %v2465 = vadd.f32 %v2464, 1.0
    %v2466 = vrcp.pop %v2465
    %v2467 = vmul.f32 1.0, %v2466
    %v2468 = vtanh.pop %v2461
    %v2469 = vmul.f32 %v2467, %v2406
    %2471 = vrot.lane.b32.xlu0 %v2468, 64
    %v2472 = vpop.permute.xlu0 %2471
    %v2474 = vmul.f32 %v2467, %v2472
    %2476 = vrot.lane.b32.xlu0 %v2474, 32
    %v2477 = vpop.permute.xlu0 %2476
    %v2479 = vadd.f32 %v2469, %v2477
    %v2480 = vtanh.pop %v2479
    %2482 = vrot.lane.b32.xlu0 %v2480, 64
    %v2483 = vpop.permute.xlu0 %2482
    %v2485 = vmul.f32 %v2467, %v2483
    %v2486 = vpack.c.bf16 %v2485, %v2485
    %v2487 = vld [vmem:[%s13] sm:$0xf]
    %v2488 = vld [vmem:[%s13 + $0x4] sm:$0xf]
    %v2489 = vld [vmem:[%s13 + $0x8] sm:$0xf]
    %v2490 = vld [vmem:[%s13 + $0xc] sm:$0xf]
    %v2491 = vpack.c.bf16 %v1974, %v1974
    %v2492 = vld [vmem:[%s13 + $0x10] sm:$0xf]
    %v2493 = vld [vmem:[%s13 + $0x14] sm:$0xf]
    %v2494 = vld [vmem:[%s13 + $0x18] sm:$0xf]
    %v2495 = vld [vmem:[%s13 + $0x1c] sm:$0xf]
    %2497 = vrot.lane.b32.xlu0 %v2491, 32
    %v2498 = vpop.permute.xlu0 %2497
    %v2503 = vunpack.c.l.b16 %v2492
    %v2504 = vunpack.c.l.b16 %v2493
    %v2505 = vunpack.c.l.b16 %v2494
    %v2506 = vunpack.c.l.b16 %v2495
    %v2507 = vpack.c.b16 %v2504, %v2503
    %v2508 = vpack.c.b16 %v2506, %v2505
    %v2512 = vsel %vm299, %v2498, 0
    %2514 = vmatprep.subr.bf16.mxu0 0
    %2515 = vmatpush1.bf16.msra.mxu0 0
    %2516 = vmatprep.subr.bf16.mxu0 0
    %2517 = vmatpush1.bf16.msra.mxu0 0
    %2518 = vmatprep.subr.bf16.mxu0 0
    %2519 = vmatpush1.bf16.msra.mxu0 0
    %2520 = vmatprep.subr.bf16.mxu0 0
    %2521 = vmatpush1.bf16.msra.mxu0 0
    %2522 = vmatprep.subr.bf16.mxu0 0
    %2523 = vmatpush1.bf16.msra.mxu0 0
    %2524 = vmatprep.subr.bf16.mxu0 0
    %2525 = vmatpush1.bf16.msra.mxu0 0
    %2526 = vmatprep.subr.bf16.mxu0 0
    %2527 = vmatpush1.bf16.msra.mxu0 %v2508
    %2528 = vmatprep.subr.bf16.mxu0 0
    %2529 = vmatpush1.bf16.msra.mxu0 %v2507
    %2530 = vmatprep.subr.bf16.mxu0 0
    %2531 = vmatpush2.bf16.msra.mxu0 0
    %2532 = vmatprep.subr.bf16.mxu0 0
    %2533 = vmatpush2.bf16.msra.mxu0 0
    %2534 = vmatprep.subr.bf16.mxu0 0
    %2535 = vmatpush2.bf16.msra.mxu0 0
    %2536 = vmatprep.subr.bf16.mxu0 0
    %2537 = vmatpush2.bf16.msra.mxu0 0
    %2538 = vmatprep.subr.bf16.mxu0 0
    %2539 = vmatpush2.bf16.msra.mxu0 0
    %2540 = vmatprep.subr.bf16.mxu0 0
    %2541 = vmatpush2.bf16.msra.mxu0 0
    %2542 = vmatprep.subr.bf16.mxu0 0
    %2543 = vmatpush2.bf16.msra.mxu0 0
    %2544 = vmatprep.subr.bf16.mxu0 0
    %2545 = vmatpush2.bf16.msra.mxu0 0
    %2546 = vmatprep.mubr.bf16.mxu0 0
    %2547 = vmatmul.mubr.bf16.gmra.mxu0 %v2512
    %v2548 = vpop.f32.mrf.mxu0
    %v2549 = vadd.f32 0.0, %v2548
    %v2550 = vpop.f32.mrf.mxu0
    %v2551 = vpop.f32.mrf.mxu0
    %v2552 = vpop.f32.mrf.mxu0
    %2553 = vdwg.mxu0
    %2555 = vrot.lane.b32.xlu0 %v2486, 32
    %v2556 = vpop.permute.xlu0 %2555
    %v2561 = vunpack.c.l.b16 %v2487
    %v2562 = vunpack.c.l.b16 %v2488
    %v2563 = vunpack.c.l.b16 %v2489
    %v2564 = vunpack.c.l.b16 %v2490
    %v2565 = vpack.c.b16 %v2562, %v2561
    %v2566 = vpack.c.b16 %v2564, %v2563
    %v2570 = vsel %vm299, %v2556, 0
    %2572 = vmatprep.subr.bf16.mxu0 0
    %2573 = vmatpush1.bf16.msra.mxu0 0
    %2574 = vmatprep.subr.bf16.mxu0 0
    %2575 = vmatpush1.bf16.msra.mxu0 0
    %2576 = vmatprep.subr.bf16.mxu0 0
    %2577 = vmatpush1.bf16.msra.mxu0 0
    %2578 = vmatprep.subr.bf16.mxu0 0
    %2579 = vmatpush1.bf16.msra.mxu0 0
    %2580 = vmatprep.subr.bf16.mxu0 0
    %2581 = vmatpush1.bf16.msra.mxu0 0
    %2582 = vmatprep.subr.bf16.mxu0 0
    %2583 = vmatpush1.bf16.msra.mxu0 0
    %2584 = vmatprep.subr.bf16.mxu0 0
    %2585 = vmatpush1.bf16.msra.mxu0 %v2566
    %2586 = vmatprep.subr.bf16.mxu0 0
    %2587 = vmatpush1.bf16.msra.mxu0 %v2565
    %2588 = vmatprep.subr.bf16.mxu0 0
    %2589 = vmatpush2.bf16.msra.mxu0 0
    %2590 = vmatprep.subr.bf16.mxu0 0
    %2591 = vmatpush2.bf16.msra.mxu0 0
    %2592 = vmatprep.subr.bf16.mxu0 0
    %2593 = vmatpush2.bf16.msra.mxu0 0
    %2594 = vmatprep.subr.bf16.mxu0 0
    %2595 = vmatpush2.bf16.msra.mxu0 0
    %2596 = vmatprep.subr.bf16.mxu0 0
    %2597 = vmatpush2.bf16.msra.mxu0 0
    %2598 = vmatprep.subr.bf16.mxu0 0
    %2599 = vmatpush2.bf16.msra.mxu0 0
    %2600 = vmatprep.subr.bf16.mxu0 0
    %2601 = vmatpush2.bf16.msra.mxu0 0
    %2602 = vmatprep.subr.bf16.mxu0 0
    %2603 = vmatpush2.bf16.msra.mxu0 0
    %2604 = vmatprep.mubr.bf16.mxu0 0
    %2605 = vmatmul.mubr.bf16.gmra.mxu0 %v2570
    %v2606 = vpop.f32.mrf.mxu0
    %v2607 = vadd.f32 %v2549, %v2606
    %v2608 = vpop.f32.mrf.mxu0
    %v2609 = vpop.f32.mrf.mxu0
    %v2610 = vpop.f32.mrf.mxu0
    %2611 = vdwg.mxu0
    %v2612 = vld [vmem:[#allocation18] sm:$0x1]
    %v2614 = vlaneseq
    %v2615 = vshrl.u32 %v2614, 7
    %v2616 = vsub.s32 0, %v2615
    %v2617 = vrot.slane %v2612, %v2616
    %v2619 = vadd.f32 %v2607, %v2617
    %vm2620 = vcmask 17408
    %2621 = vst.msk [vmem:[#allocation20] sm:$0x3] %vm2620, %v2619
    // Predicated region
    $region94: #{birnn_forward.1} parent=1 // pred_check
      _
    $region95: #{birnn_forward.1} parent=1 // pred_check_branch
      %2623 = sbr.rel (0) target = $region97
    $region96: #{birnn_forward.1} parent=1 // pred_region
      %s2625 = ssub.s32 32, 32
      %2626 = vsyncadd [#allocation8], %s2625
      %s2628 = sshll.u32 [#allocation20], 4
      %s2629 = int_to_ptr.vmem [resolvable:$true] %s2628
      %2631 = dma.vmem_to_hbm [thread:$0]  %s2629, 32, %s15, [#allocation8]
    $region97: #{birnn_forward.1} parent=1 // pred_fallthru
      _
    // Predicated region
    $region98: #{birnn_forward.1} parent=1 // pred_check
      _
    $region99: #{birnn_forward.1} parent=1 // pred_check_branch
      %2633 = sbr.rel (0) target = $region101
    $region100: #{birnn_forward.1} parent=1 // pred_region
      %2634 = dma.done [#allocation8], 32
    $region101: #{birnn_forward.1} parent=1 // pred_fallthru
      _
    %2635 = vsyncpa [#allocation7], 1
    %2636 = vsyncpa [#allocation10], 1
    %2637 = vsyncpa [#allocation13], 1
    %2638 = vsyncpa [#allocation16], 1
    %2639 = vsyncpa [#allocation19], 1
    %2640 = vsyncpa [#allocation8], 1

</llo_original>
